<compile_context>
chip_gen: v7x
topology: tpu7x:2x2x1
jax: 0.10.0
libtpu: 0.0.40
codegen_flags: <defaults>
</compile_context>

<pallas_src>
import functools

import jax
import jax.numpy as jnp
from jax import lax
from jax.experimental import pallas as pl
from jax.experimental.pallas import tpu as pltpu


def _round_up(x, m):
    return (x + m - 1) // m * m


def _conv_bn_relu_kernel(x_ref, w_ref, b_ref, o_ref, acc_ref, *,
                         KH, KW, stride, TH, Wo_pad):
    """One grid step = one batch image x one tile of TH output rows (all output channels).

    x_ref:   (Hp, Wp, Cin)      bf16  spatially padded NHWC activation (resident per image)
    w_ref:   (KH, KW, Cin, Np)  bf16  BN-scale-folded conv weights (resident, DMA'd once)
    b_ref:   (1, Np)            f32   folded BN bias
    o_ref:   (TH*Wo_pad, Np)          lane-dense conv+BN+ReLU output tile
    acc_ref: (TH*Wo_pad, Np)    f32   accumulator scratch
    """
    Cin = x_ref.shape[-1]
    acc_ref[...] = jnp.zeros_like(acc_ref)
    h0 = pl.program_id(1) * (TH * stride)   # first padded input row of this output tile
    for kh in range(KH):                    # static unrolled (kh, kw) reduction, in VMEM
        for kw in range(KW):
            if stride == 1:
                rows = x_ref[pl.ds(h0 + kh, TH), pl.ds(kw, Wo_pad), :]
            else:
                rows = x_ref[pl.ds(h0 + kh, TH, stride),
                             pl.ds(kw, Wo_pad, stride), :]
            patch = rows.reshape(TH * Wo_pad, Cin)          # sublane-aligned merge (Wo_pad % 16 == 0)
            acc_ref[...] += jnp.dot(patch, w_ref[kh, kw],
                                    preferred_element_type=jnp.float32)
    o_ref[...] = jnp.maximum(acc_ref[...] + b_ref[...], 0.0).astype(o_ref.dtype)


def basic_conv2d_nhwc(x_nhwc, weight_oihw, gamma, beta, running_mean, running_var, *,
                      stride=1, padding=1, eps=1e-3,
                      out_dtype=None, compute_dtype=jnp.bfloat16, target_rows=1024):
    """Core NHWC BasicConv2d forward. Chained layers should stay NHWC (and bf16)."""
    N, H, W, Cin = x_nhwc.shape
    Cout, Cin_w, KH, KW = weight_oihw.shape
    assert Cin_w == Cin, "grouped conv not supported"
    out_dtype = x_nhwc.dtype if out_dtype is None else out_dtype

    Ho = (H + 2 * padding - KH) // stride + 1
    Wo = (W + 2 * padding - KW) // stride + 1

    # ---- BN folding (eval mode) in f32; cast to bf16 last ----
    scale = gamma.astype(jnp.float32) / jnp.sqrt(running_var.astype(jnp.float32) + eps)
    bias = beta.astype(jnp.float32) - running_mean.astype(jnp.float32) * scale
    w_hwio = (jnp.transpose(weight_oihw, (2, 3, 1, 0)).astype(jnp.float32)
              * scale[None, None, None, :])                          # (KH, KW, Cin, Cout)

    Np = _round_up(Cout, 128)                                        # lane-dense output channels
    w4 = jnp.pad(w_hwio, ((0, 0), (0, 0), (0, 0), (0, Np - Cout))).astype(compute_dtype)
    b2 = jnp.pad(bias, (0, Np - Cout)).reshape(1, Np)

    # ---- output tiling: Wo aligned to 16 (bf16 sublane packing), TH output rows per tile ----
    Wo_pad = _round_up(Wo, 16)
    TH = min(Ho, max(1, target_rows // Wo_pad))
    Ho_pad = _round_up(Ho, TH)
    n_h_tiles = Ho_pad // TH
    M_tile = TH * Wo_pad

    # ---- spatial zero-padding (conv padding + alignment padding), activations read once ----
    Hp = max((Ho_pad - 1) * stride + KH, H + padding)
    Wp = max((Wo_pad - 1) * stride + KW, W + padding)
    x_pad = jnp.pad(x_nhwc.astype(compute_dtype),
                    ((0, 0), (padding, Hp - padding - H), (padding, Wp - padding - W), (0, 0)))

    grid = (N, n_h_tiles)
    kernel = functools.partial(_conv_bn_relu_kernel, KH=KH, KW=KW, stride=stride,
                               TH=TH, Wo_pad=Wo_pad)

    itemsize = jnp.dtype(out_dtype).itemsize
    flops = 2 * N * Ho_pad * Wo_pad * KH * KW * Cin * Np
    bytes_accessed = int(x_pad.size * x_pad.dtype.itemsize + w4.size * w4.dtype.itemsize
                         + b2.size * 4 + N * Ho_pad * Wo_pad * Np * itemsize)
    vmem_est = (2 * Hp * Wp * Cin * 2 + 2 * KH * KW * Cin * Np * 2 + 2 * 1 * Np * 4
                + 2 * M_tile * Np * itemsize + M_tile * Np * 4)
    vmem_limit = int(min(64 * 1024 * 1024, max(32 * 1024 * 1024, 2 * vmem_est)))

    out3 = pl.pallas_call(
        kernel,
        out_shape=jax.ShapeDtypeStruct((N, Ho_pad * Wo_pad, Np), out_dtype),
        grid_spec=pltpu.PrefetchScalarGridSpec(
            num_scalar_prefetch=0,
            grid=grid,
            in_specs=[
                # padded image for batch b: constant across the h-tile sweep -> DMA'd once/image
                pl.BlockSpec((None, Hp, Wp, Cin), lambda b, i: (b, 0, 0, 0)),
                # folded weights: constant across the whole grid -> DMA'd exactly once
                pl.BlockSpec((KH, KW, Cin, Np), lambda b, i: (0, 0, 0, 0)),
                # folded BN bias: constant
                pl.BlockSpec((1, Np), lambda b, i: (0, 0)),
            ],
            out_specs=pl.BlockSpec((None, M_tile, Np), lambda b, i: (b, i, 0)),
            scratch_shapes=[pltpu.VMEM((M_tile, Np), jnp.float32)],
        ),
        compiler_params=pltpu.CompilerParams(
            dimension_semantics=("parallel", "parallel"),
            vmem_limit_bytes=vmem_limit),
        cost_estimate=pl.CostEstimate(flops=flops, transcendentals=0,
                                      bytes_accessed=bytes_accessed),
    )(x_pad, w4, b2)

    out = out3.reshape(N, Ho_pad, Wo_pad, Np)[:, :Ho, :Wo, :Cout]
    return out


def basic_conv2d(x_nchw, weight_oihw, gamma, beta, running_mean, running_var, *,
                 stride=1, padding=1, eps=1e-3, out_dtype=None):
    """PyTorch-layout (NCHW) entry point; NCHW<->NHWC only at the module boundary."""
    x_nhwc = jnp.transpose(x_nchw, (0, 2, 3, 1))
    y = basic_conv2d_nhwc(x_nhwc, weight_oihw, gamma, beta, running_mean, running_var,
                          stride=stride, padding=padding, eps=eps, out_dtype=out_dtype)
    return jnp.transpose(y, (0, 3, 1, 2))


def _reference(x_nchw, weight_oihw, gamma, beta, running_mean, running_var,
               *, stride=1, padding=1, eps=1e-3):
    y = lax.conv_general_dilated(
        x_nchw, weight_oihw, window_strides=(stride, stride),
        padding=[(padding, padding), (padding, padding)],
        dimension_numbers=("NCHW", "OIHW", "NCHW"))
    scale = gamma / jnp.sqrt(running_var + eps)
    bias = beta - running_mean * scale
    y = y * scale[None, :, None, None] + bias[None, :, None, None]
    return jnp.maximum(y, 0.0)


if __name__ == "__main__":
    # Small, PyTorch-consistent shapes: Conv2d(in_channels=4, out_channels=8, kernel_size=3, padding=1)
    N, Cin, H, W = 2, 4, 16, 16
    Cout, KH, KW = 8, 3, 3

    key = jax.random.PRNGKey(0)
    kx, kw, kg, kb, km, kv = jax.random.split(key, 6)

    x = jax.random.normal(kx, (N, Cin, H, W), dtype=jnp.float32)
    weight = 0.1 * jax.random.normal(kw, (Cout, Cin, KH, KW), dtype=jnp.float32)
    gamma = 1.0 + 0.1 * jax.random.normal(kg, (Cout,), dtype=jnp.float32)
    beta = 0.1 * jax.random.normal(kb, (Cout,), dtype=jnp.float32)
    running_mean = 0.1 * jax.random.normal(km, (Cout,), dtype=jnp.float32)
    running_var = jnp.abs(jax.random.normal(kv, (Cout,), dtype=jnp.float32)) + 0.5

    out = basic_conv2d(x, weight, gamma, beta, running_mean, running_var,
                       stride=1, padding=1, eps=1e-3)
    out = jax.block_until_ready(out)

    ref = _reference(x, weight, gamma, beta, running_mean, running_var,
                     stride=1, padding=1, eps=1e-3)
    assert out.shape == (N, Cout, H, W)
    # bf16 MXU inputs with f32 accumulation -> compare against the f32 reference at
    # bf16-appropriate tolerance.
    assert jnp.allclose(out, ref, atol=3e-2, rtol=3e-2), "mismatch vs reference"
    print("KERNEL_OK")
</pallas_src>

<mosaic_0001>
module attributes {stable_mosaic.version = 11 : i64} {
  func.func @_conv_bn_relu_kernel(%arg0: i32, %arg1: i32, %arg2: memref<1x18x18x4xbf16, #tpu.memory_space<vmem>>, %arg3: memref<3x3x4x128xbf16, #tpu.memory_space<vmem>>, %arg4: memref<1x128xf32, #tpu.memory_space<vmem>>, %arg5: memref<1x256x128xf32, #tpu.memory_space<vmem>>, %arg6: memref<256x128xf32, #tpu.memory_space<vmem>>) attributes {dimension_semantics = [#tpu.dimension_semantics<parallel>, #tpu.dimension_semantics<parallel>], iteration_bounds = array<i64: 2, 1>, scalar_prefetch = 0 : i64, scratch_operands = 1 : i64, tpu.core_type = #tpu.core_type<tc>, window_params = [{transform_indices = @transform_0, window_bounds = array<i64: 1, 18, 18, 4>}, {pipeline_mode = #tpu.pipeline_mode<synchronous>, transform_indices = @transform_1, window_bounds = array<i64: 3, 3, 4, 128>}, {pipeline_mode = #tpu.pipeline_mode<synchronous>, transform_indices = @transform_2, window_bounds = array<i64: 1, 128>}, {transform_indices = @transform_3, window_bounds = array<i64: 1, 256, 128>}]} {
    %cst = arith.constant 0.000000e+00 : f32
    %0 = vector.broadcast %cst : f32 to vector<256x128xf32>
    %c0 = arith.constant 0 : index
    %c0_0 = arith.constant 0 : index
    %1 = vector.load %arg6[%c0, %c0_0] : memref<256x128xf32, #tpu.memory_space<vmem>>, vector<256x128xf32>
    tpu.vector_store %arg6[%c0, %c0_0], %0 {strides = array<i32>} : memref<256x128xf32, #tpu.memory_space<vmem>>, vector<256x128xf32>,
    %c16_i32 = arith.constant 16 : i32
    %2 = arith.muli %arg1, %c16_i32 : i32
    %c0_i32 = arith.constant 0 : i32
    %3 = arith.addi %2, %c0_i32 : i32
    %c0_1 = arith.constant 0 : index
    %4 = arith.index_cast %3 : i32 to index
    %c0_2 = arith.constant 0 : index
    %c0_3 = arith.constant 0 : index
    %5 = vector.load %arg2[%c0_1, %4, %c0_2, %c0_3] : memref<1x18x18x4xbf16, #tpu.memory_space<vmem>>, vector<1x16x16x4xbf16>
    %6 = vector.shape_cast %5 : vector<1x16x16x4xbf16> to vector<16x16x4xbf16>
    %7 = vector.shape_cast %6 : vector<16x16x4xbf16> to vector<256x4xbf16>
    %c0_4 = arith.constant 0 : index
    %c0_5 = arith.constant 0 : index
    %8 = vector.load %arg6[%c0_4, %c0_5] : memref<256x128xf32, #tpu.memory_space<vmem>>, vector<256x128xf32>
    %c0_6 = arith.constant 0 : index
    %c0_7 = arith.constant 0 : index
    %c0_8 = arith.constant 0 : index
    %c0_9 = arith.constant 0 : index
    %9 = vector.load %arg3[%c0_6, %c0_7, %c0_8, %c0_9] : memref<3x3x4x128xbf16, #tpu.memory_space<vmem>>, vector<1x1x4x128xbf16>
    %10 = vector.shape_cast %9 : vector<1x1x4x128xbf16> to vector<4x128xbf16>
    %cst_10 = arith.constant dense<0.000000e+00> : vector<256x128xf32>
    %11 = tpu.matmul %7, %10, %cst_10 {dimension_numbers = #tpu.dot_dimension_numbers<[1], [0], [0], [1], [0, 0, 1, 1], [], []>} : vector<256x4xbf16>, vector<4x128xbf16>, vector<256x128xf32> -> vector<256x128xf32>
    %12 = arith.addf %8, %11 : vector<256x128xf32>
    %c0_11 = arith.constant 0 : index
    %c0_12 = arith.constant 0 : index
    %13 = vector.load %arg6[%c0_11, %c0_12] : memref<256x128xf32, #tpu.memory_space<vmem>>, vector<256x128xf32>
    tpu.vector_store %arg6[%c0_11, %c0_12], %12 {strides = array<i32>} : memref<256x128xf32, #tpu.memory_space<vmem>>, vector<256x128xf32>,
    %c0_i32_13 = arith.constant 0 : i32
    %14 = arith.addi %2, %c0_i32_13 : i32
    %c0_14 = arith.constant 0 : index
    %15 = arith.index_cast %14 : i32 to index
    %c1 = arith.constant 1 : index
    %c0_15 = arith.constant 0 : index
    %16 = vector.load %arg2[%c0_14, %15, %c1, %c0_15] : memref<1x18x18x4xbf16, #tpu.memory_space<vmem>>, vector<1x16x16x4xbf16>
    %17 = vector.shape_cast %16 : vector<1x16x16x4xbf16> to vector<16x16x4xbf16>
    %18 = vector.shape_cast %17 : vector<16x16x4xbf16> to vector<256x4xbf16>
    %c0_16 = arith.constant 0 : index
    %c0_17 = arith.constant 0 : index
    %19 = vector.load %arg6[%c0_16, %c0_17] : memref<256x128xf32, #tpu.memory_space<vmem>>, vector<256x128xf32>
    %c0_18 = arith.constant 0 : index
    %c1_19 = arith.constant 1 : index
    %c0_20 = arith.constant 0 : index
    %c0_21 = arith.constant 0 : index
    %20 = vector.load %arg3[%c0_18, %c1_19, %c0_20, %c0_21] : memref<3x3x4x128xbf16, #tpu.memory_space<vmem>>, vector<1x1x4x128xbf16>
    %21 = vector.shape_cast %20 : vector<1x1x4x128xbf16> to vector<4x128xbf16>
    %cst_22 = arith.constant dense<0.000000e+00> : vector<256x128xf32>
    %22 = tpu.matmul %18, %21, %cst_22 {dimension_numbers = #tpu.dot_dimension_numbers<[1], [0], [0], [1], [0, 0, 1, 1], [], []>} : vector<256x4xbf16>, vector<4x128xbf16>, vector<256x128xf32> -> vector<256x128xf32>
    %23 = arith.addf %19, %22 : vector<256x128xf32>
    %c0_23 = arith.constant 0 : index
    %c0_24 = arith.constant 0 : index
    %24 = vector.load %arg6[%c0_23, %c0_24] : memref<256x128xf32, #tpu.memory_space<vmem>>, vector<256x128xf32>
    tpu.vector_store %arg6[%c0_23, %c0_24], %23 {strides = array<i32>} : memref<256x128xf32, #tpu.memory_space<vmem>>, vector<256x128xf32>,
    %c0_i32_25 = arith.constant 0 : i32
    %25 = arith.addi %2, %c0_i32_25 : i32
    %c0_26 = arith.constant 0 : index
    %26 = arith.index_cast %25 : i32 to index
    %c2 = arith.constant 2 : index
    %c0_27 = arith.constant 0 : index
    %27 = vector.load %arg2[%c0_26, %26, %c2, %c0_27] : memref<1x18x18x4xbf16, #tpu.memory_space<vmem>>, vector<1x16x16x4xbf16>
    %28 = vector.shape_cast %27 : vector<1x16x16x4xbf16> to vector<16x16x4xbf16>
    %29 = vector.shape_cast %28 : vector<16x16x4xbf16> to vector<256x4xbf16>
    %c0_28 = arith.constant 0 : index
    %c0_29 = arith.constant 0 : index
    %30 = vector.load %arg6[%c0_28, %c0_29] : memref<256x128xf32, #tpu.memory_space<vmem>>, vector<256x128xf32>
    %c0_30 = arith.constant 0 : index
    %c2_31 = arith.constant 2 : index
    %c0_32 = arith.constant 0 : index
    %c0_33 = arith.constant 0 : index
    %31 = vector.load %arg3[%c0_30, %c2_31, %c0_32, %c0_33] : memref<3x3x4x128xbf16, #tpu.memory_space<vmem>>, vector<1x1x4x128xbf16>
    %32 = vector.shape_cast %31 : vector<1x1x4x128xbf16> to vector<4x128xbf16>
    %cst_34 = arith.constant dense<0.000000e+00> : vector<256x128xf32>
    %33 = tpu.matmul %29, %32, %cst_34 {dimension_numbers = #tpu.dot_dimension_numbers<[1], [0], [0], [1], [0, 0, 1, 1], [], []>} : vector<256x4xbf16>, vector<4x128xbf16>, vector<256x128xf32> -> vector<256x128xf32>
    %34 = arith.addf %30, %33 : vector<256x128xf32>
    %c0_35 = arith.constant 0 : index
    %c0_36 = arith.constant 0 : index
    %35 = vector.load %arg6[%c0_35, %c0_36] : memref<256x128xf32, #tpu.memory_space<vmem>>, vector<256x128xf32>
    tpu.vector_store %arg6[%c0_35, %c0_36], %34 {strides = array<i32>} : memref<256x128xf32, #tpu.memory_space<vmem>>, vector<256x128xf32>,
    %c1_i32 = arith.constant 1 : i32
    %36 = arith.addi %2, %c1_i32 : i32
    %c0_37 = arith.constant 0 : index
    %37 = arith.index_cast %36 : i32 to index
    %c0_38 = arith.constant 0 : index
    %c0_39 = arith.constant 0 : index
    %38 = vector.load %arg2[%c0_37, %37, %c0_38, %c0_39] : memref<1x18x18x4xbf16, #tpu.memory_space<vmem>>, vector<1x16x16x4xbf16>
    %39 = vector.shape_cast %38 : vector<1x16x16x4xbf16> to vector<16x16x4xbf16>
    %40 = vector.shape_cast %39 : vector<16x16x4xbf16> to vector<256x4xbf16>
    %c0_40 = arith.constant 0 : index
    %c0_41 = arith.constant 0 : index
    %41 = vector.load %arg6[%c0_40, %c0_41] : memref<256x128xf32, #tpu.memory_space<vmem>>, vector<256x128xf32>
    %c1_42 = arith.constant 1 : index
    %c0_43 = arith.constant 0 : index
    %c0_44 = arith.constant 0 : index
    %c0_45 = arith.constant 0 : index
    %42 = vector.load %arg3[%c1_42, %c0_43, %c0_44, %c0_45] : memref<3x3x4x128xbf16, #tpu.memory_space<vmem>>, vector<1x1x4x128xbf16>
    %43 = vector.shape_cast %42 : vector<1x1x4x128xbf16> to vector<4x128xbf16>
    %cst_46 = arith.constant dense<0.000000e+00> : vector<256x128xf32>
    %44 = tpu.matmul %40, %43, %cst_46 {dimension_numbers = #tpu.dot_dimension_numbers<[1], [0], [0], [1], [0, 0, 1, 1], [], []>} : vector<256x4xbf16>, vector<4x128xbf16>, vector<256x128xf32> -> vector<256x128xf32>
    %45 = arith.addf %41, %44 : vector<256x128xf32>
    %c0_47 = arith.constant 0 : index
    %c0_48 = arith.constant 0 : index
    %46 = vector.load %arg6[%c0_47, %c0_48] : memref<256x128xf32, #tpu.memory_space<vmem>>, vector<256x128xf32>
    tpu.vector_store %arg6[%c0_47, %c0_48], %45 {strides = array<i32>} : memref<256x128xf32, #tpu.memory_space<vmem>>, vector<256x128xf32>,
    %c1_i32_49 = arith.constant 1 : i32
    %47 = arith.addi %2, %c1_i32_49 : i32
    %c0_50 = arith.constant 0 : index
    %48 = arith.index_cast %47 : i32 to index
    %c1_51 = arith.constant 1 : index
    %c0_52 = arith.constant 0 : index
    %49 = vector.load %arg2[%c0_50, %48, %c1_51, %c0_52] : memref<1x18x18x4xbf16, #tpu.memory_space<vmem>>, vector<1x16x16x4xbf16>
    %50 = vector.shape_cast %49 : vector<1x16x16x4xbf16> to vector<16x16x4xbf16>
    %51 = vector.shape_cast %50 : vector<16x16x4xbf16> to vector<256x4xbf16>
    %c0_53 = arith.constant 0 : index
    %c0_54 = arith.constant 0 : index
    %52 = vector.load %arg6[%c0_53, %c0_54] : memref<256x128xf32, #tpu.memory_space<vmem>>, vector<256x128xf32>
    %c1_55 = arith.constant 1 : index
    %c1_56 = arith.constant 1 : index
    %c0_57 = arith.constant 0 : index
    %c0_58 = arith.constant 0 : index
    %53 = vector.load %arg3[%c1_55, %c1_56, %c0_57, %c0_58] : memref<3x3x4x128xbf16, #tpu.memory_space<vmem>>, vector<1x1x4x128xbf16>
    %54 = vector.shape_cast %53 : vector<1x1x4x128xbf16> to vector<4x128xbf16>
    %cst_59 = arith.constant dense<0.000000e+00> : vector<256x128xf32>
    %55 = tpu.matmul %51, %54, %cst_59 {dimension_numbers = #tpu.dot_dimension_numbers<[1], [0], [0], [1], [0, 0, 1, 1], [], []>} : vector<256x4xbf16>, vector<4x128xbf16>, vector<256x128xf32> -> vector<256x128xf32>
    %56 = arith.addf %52, %55 : vector<256x128xf32>
    %c0_60 = arith.constant 0 : index
    %c0_61 = arith.constant 0 : index
    %57 = vector.load %arg6[%c0_60, %c0_61] : memref<256x128xf32, #tpu.memory_space<vmem>>, vector<256x128xf32>
    tpu.vector_store %arg6[%c0_60, %c0_61], %56 {strides = array<i32>} : memref<256x128xf32, #tpu.memory_space<vmem>>, vector<256x128xf32>,
    %c1_i32_62 = arith.constant 1 : i32
    %58 = arith.addi %2, %c1_i32_62 : i32
    %c0_63 = arith.constant 0 : index
    %59 = arith.index_cast %58 : i32 to index
    %c2_64 = arith.constant 2 : index
    %c0_65 = arith.constant 0 : index
    %60 = vector.load %arg2[%c0_63, %59, %c2_64, %c0_65] : memref<1x18x18x4xbf16, #tpu.memory_space<vmem>>, vector<1x16x16x4xbf16>
    %61 = vector.shape_cast %60 : vector<1x16x16x4xbf16> to vector<16x16x4xbf16>
    %62 = vector.shape_cast %61 : vector<16x16x4xbf16> to vector<256x4xbf16>
    %c0_66 = arith.constant 0 : index
    %c0_67 = arith.constant 0 : index
    %63 = vector.load %arg6[%c0_66, %c0_67] : memref<256x128xf32, #tpu.memory_space<vmem>>, vector<256x128xf32>
    %c1_68 = arith.constant 1 : index
    %c2_69 = arith.constant 2 : index
    %c0_70 = arith.constant 0 : index
    %c0_71 = arith.constant 0 : index
    %64 = vector.load %arg3[%c1_68, %c2_69, %c0_70, %c0_71] : memref<3x3x4x128xbf16, #tpu.memory_space<vmem>>, vector<1x1x4x128xbf16>
    %65 = vector.shape_cast %64 : vector<1x1x4x128xbf16> to vector<4x128xbf16>
    %cst_72 = arith.constant dense<0.000000e+00> : vector<256x128xf32>
    %66 = tpu.matmul %62, %65, %cst_72 {dimension_numbers = #tpu.dot_dimension_numbers<[1], [0], [0], [1], [0, 0, 1, 1], [], []>} : vector<256x4xbf16>, vector<4x128xbf16>, vector<256x128xf32> -> vector<256x128xf32>
    %67 = arith.addf %63, %66 : vector<256x128xf32>
    %c0_73 = arith.constant 0 : index
    %c0_74 = arith.constant 0 : index
    %68 = vector.load %arg6[%c0_73, %c0_74] : memref<256x128xf32, #tpu.memory_space<vmem>>, vector<256x128xf32>
    tpu.vector_store %arg6[%c0_73, %c0_74], %67 {strides = array<i32>} : memref<256x128xf32, #tpu.memory_space<vmem>>, vector<256x128xf32>,
    %c2_i32 = arith.constant 2 : i32
    %69 = arith.addi %2, %c2_i32 : i32
    %c0_75 = arith.constant 0 : index
    %70 = arith.index_cast %69 : i32 to index
    %c0_76 = arith.constant 0 : index
    %c0_77 = arith.constant 0 : index
    %71 = vector.load %arg2[%c0_75, %70, %c0_76, %c0_77] : memref<1x18x18x4xbf16, #tpu.memory_space<vmem>>, vector<1x16x16x4xbf16>
    %72 = vector.shape_cast %71 : vector<1x16x16x4xbf16> to vector<16x16x4xbf16>
    %73 = vector.shape_cast %72 : vector<16x16x4xbf16> to vector<256x4xbf16>
    %c0_78 = arith.constant 0 : index
    %c0_79 = arith.constant 0 : index
    %74 = vector.load %arg6[%c0_78, %c0_79] : memref<256x128xf32, #tpu.memory_space<vmem>>, vector<256x128xf32>
    %c2_80 = arith.constant 2 : index
    %c0_81 = arith.constant 0 : index
    %c0_82 = arith.constant 0 : index
    %c0_83 = arith.constant 0 : index
    %75 = vector.load %arg3[%c2_80, %c0_81, %c0_82, %c0_83] : memref<3x3x4x128xbf16, #tpu.memory_space<vmem>>, vector<1x1x4x128xbf16>
    %76 = vector.shape_cast %75 : vector<1x1x4x128xbf16> to vector<4x128xbf16>
    %cst_84 = arith.constant dense<0.000000e+00> : vector<256x128xf32>
    %77 = tpu.matmul %73, %76, %cst_84 {dimension_numbers = #tpu.dot_dimension_numbers<[1], [0], [0], [1], [0, 0, 1, 1], [], []>} : vector<256x4xbf16>, vector<4x128xbf16>, vector<256x128xf32> -> vector<256x128xf32>
    %78 = arith.addf %74, %77 : vector<256x128xf32>
    %c0_85 = arith.constant 0 : index
    %c0_86 = arith.constant 0 : index
    %79 = vector.load %arg6[%c0_85, %c0_86] : memref<256x128xf32, #tpu.memory_space<vmem>>, vector<256x128xf32>
    tpu.vector_store %arg6[%c0_85, %c0_86], %78 {strides = array<i32>} : memref<256x128xf32, #tpu.memory_space<vmem>>, vector<256x128xf32>,
    %c2_i32_87 = arith.constant 2 : i32
    %80 = arith.addi %2, %c2_i32_87 : i32
    %c0_88 = arith.constant 0 : index
    %81 = arith.index_cast %80 : i32 to index
    %c1_89 = arith.constant 1 : index
    %c0_90 = arith.constant 0 : index
    %82 = vector.load %arg2[%c0_88, %81, %c1_89, %c0_90] : memref<1x18x18x4xbf16, #tpu.memory_space<vmem>>, vector<1x16x16x4xbf16>
    %83 = vector.shape_cast %82 : vector<1x16x16x4xbf16> to vector<16x16x4xbf16>
    %84 = vector.shape_cast %83 : vector<16x16x4xbf16> to vector<256x4xbf16>
    %c0_91 = arith.constant 0 : index
    %c0_92 = arith.constant 0 : index
    %85 = vector.load %arg6[%c0_91, %c0_92] : memref<256x128xf32, #tpu.memory_space<vmem>>, vector<256x128xf32>
    %c2_93 = arith.constant 2 : index
    %c1_94 = arith.constant 1 : index
    %c0_95 = arith.constant 0 : index
    %c0_96 = arith.constant 0 : index
    %86 = vector.load %arg3[%c2_93, %c1_94, %c0_95, %c0_96] : memref<3x3x4x128xbf16, #tpu.memory_space<vmem>>, vector<1x1x4x128xbf16>
    %87 = vector.shape_cast %86 : vector<1x1x4x128xbf16> to vector<4x128xbf16>
    %cst_97 = arith.constant dense<0.000000e+00> : vector<256x128xf32>
    %88 = tpu.matmul %84, %87, %cst_97 {dimension_numbers = #tpu.dot_dimension_numbers<[1], [0], [0], [1], [0, 0, 1, 1], [], []>} : vector<256x4xbf16>, vector<4x128xbf16>, vector<256x128xf32> -> vector<256x128xf32>
    %89 = arith.addf %85, %88 : vector<256x128xf32>
    %c0_98 = arith.constant 0 : index
    %c0_99 = arith.constant 0 : index
    %90 = vector.load %arg6[%c0_98, %c0_99] : memref<256x128xf32, #tpu.memory_space<vmem>>, vector<256x128xf32>
    tpu.vector_store %arg6[%c0_98, %c0_99], %89 {strides = array<i32>} : memref<256x128xf32, #tpu.memory_space<vmem>>, vector<256x128xf32>,
    %c2_i32_100 = arith.constant 2 : i32
    %91 = arith.addi %2, %c2_i32_100 : i32
    %c0_101 = arith.constant 0 : index
    %92 = arith.index_cast %91 : i32 to index
    %c2_102 = arith.constant 2 : index
    %c0_103 = arith.constant 0 : index
    %93 = vector.load %arg2[%c0_101, %92, %c2_102, %c0_103] : memref<1x18x18x4xbf16, #tpu.memory_space<vmem>>, vector<1x16x16x4xbf16>
    %94 = vector.shape_cast %93 : vector<1x16x16x4xbf16> to vector<16x16x4xbf16>
    %95 = vector.shape_cast %94 : vector<16x16x4xbf16> to vector<256x4xbf16>
    %c0_104 = arith.constant 0 : index
    %c0_105 = arith.constant 0 : index
    %96 = vector.load %arg6[%c0_104, %c0_105] : memref<256x128xf32, #tpu.memory_space<vmem>>, vector<256x128xf32>
    %c2_106 = arith.constant 2 : index
    %c2_107 = arith.constant 2 : index
    %c0_108 = arith.constant 0 : index
    %c0_109 = arith.constant 0 : index
    %97 = vector.load %arg3[%c2_106, %c2_107, %c0_108, %c0_109] : memref<3x3x4x128xbf16, #tpu.memory_space<vmem>>, vector<1x1x4x128xbf16>
    %98 = vector.shape_cast %97 : vector<1x1x4x128xbf16> to vector<4x128xbf16>
    %cst_110 = arith.constant dense<0.000000e+00> : vector<256x128xf32>
    %99 = tpu.matmul %95, %98, %cst_110 {dimension_numbers = #tpu.dot_dimension_numbers<[1], [0], [0], [1], [0, 0, 1, 1], [], []>} : vector<256x4xbf16>, vector<4x128xbf16>, vector<256x128xf32> -> vector<256x128xf32>
    %100 = arith.addf %96, %99 : vector<256x128xf32>
    %c0_111 = arith.constant 0 : index
    %c0_112 = arith.constant 0 : index
    %101 = vector.load %arg6[%c0_111, %c0_112] : memref<256x128xf32, #tpu.memory_space<vmem>>, vector<256x128xf32>
    tpu.vector_store %arg6[%c0_111, %c0_112], %100 {strides = array<i32>} : memref<256x128xf32, #tpu.memory_space<vmem>>, vector<256x128xf32>,
    %c0_113 = arith.constant 0 : index
    %c0_114 = arith.constant 0 : index
    %102 = vector.load %arg6[%c0_113, %c0_114] : memref<256x128xf32, #tpu.memory_space<vmem>>, vector<256x128xf32>
    %c0_115 = arith.constant 0 : index
    %c0_116 = arith.constant 0 : index
    %103 = vector.load %arg4[%c0_115, %c0_116] : memref<1x128xf32, #tpu.memory_space<vmem>>, vector<1x128xf32>
    %104 = vector.broadcast %103 : vector<1x128xf32> to vector<256x128xf32>
    %105 = arith.addf %102, %104 : vector<256x128xf32>
    %cst_117 = arith.constant 0.000000e+00 : f32
    %106 = vector.broadcast %cst_117 : f32 to vector<256x128xf32>
    %107 = arith.maximumf %105, %106 : vector<256x128xf32>
    %c0_118 = arith.constant 0 : index
    %c0_119 = arith.constant 0 : index
    %c0_120 = arith.constant 0 : index
    %108 = vector.load %arg5[%c0_118, %c0_119, %c0_120] : memref<1x256x128xf32, #tpu.memory_space<vmem>>, vector<1x256x128xf32>
    %109 = vector.shape_cast %108 : vector<1x256x128xf32> to vector<256x128xf32>
    %110 = vector.shape_cast %107 : vector<256x128xf32> to vector<1x256x128xf32>
    tpu.vector_store %arg5[%c0_118, %c0_119, %c0_120], %110 {strides = array<i32>} : memref<1x256x128xf32, #tpu.memory_space<vmem>>, vector<1x256x128xf32>,
    return
  }
  func.func @transform_0(%arg0: i32, %arg1: i32) -> (i32, i32, i32, i32) {
    %c0_i32 = arith.constant 0 : i32
    %c0_i32_0 = arith.constant 0 : i32
    %c0_i32_1 = arith.constant 0 : i32
    %c0_i32_2 = arith.constant 0 : i32
    return %arg0, %c0_i32, %c0_i32_0, %c0_i32_1 : i32, i32, i32, i32
  }
  func.func @transform_1(%arg0: i32, %arg1: i32) -> (i32, i32, i32, i32) {
    %c0_i32 = arith.constant 0 : i32
    %c0_i32_0 = arith.constant 0 : i32
    %c0_i32_1 = arith.constant 0 : i32
    %c0_i32_2 = arith.constant 0 : i32
    %c0_i32_3 = arith.constant 0 : i32
    return %c0_i32, %c0_i32_0, %c0_i32_1, %c0_i32_2 : i32, i32, i32, i32
  }
  func.func @transform_2(%arg0: i32, %arg1: i32) -> (i32, i32) {
    %c0_i32 = arith.constant 0 : i32
    %c0_i32_0 = arith.constant 0 : i32
    %c0_i32_1 = arith.constant 0 : i32
    return %c0_i32, %c0_i32_0 : i32, i32
  }
  func.func @transform_3(%arg0: i32, %arg1: i32) -> (i32, i32, i32) {
    %c0_i32 = arith.constant 0 : i32
    %c0_i32_0 = arith.constant 0 : i32
    return %arg0, %arg1, %c0_i32 : i32, i32, i32
  }
}

</mosaic_0001>

<llo_original>
// kernel: tpu_custom_call.1
$region0: #{tpu_custom_call.1}
  #allocation0 [shape = 'u32[]', space=smem, size = 0x4, offset = 0x4, fixed_abs, tag = 'smem constant byte address 0x4 - core index']
  #allocation1 [shape = 'u32[144,128]{1,0:T(1,128)}', space=vmem, size = 0x12000, scoped, tag = 'internal scratch']
  #allocation2 [shape = 'f32[256,128]{1,0:T(8,128)}', space=vmem, size = 0x20000, scoped, tag = 'scratch operand']
  %s0 = inlined_call_operand.vmem [shape: bf16[2,18,18,4], index: 0, kind: input, shape index: {}]
  %s1 = inlined_call_operand.vmem [shape: bf16[3,3,4,128], index: 1, kind: input, shape index: {}]
  %s2 = inlined_call_operand.vmem [shape: f32[1,128], index: 2, kind: input, shape index: {}]
  %s3 = inlined_call_operand.hbm [shape: f32[2,256,128], index: 3, kind: output, shape index: {}]
  %s4 = sld [smem:[#allocation0]]
  $region45: #{tpu_custom_call.1} parent=0
    _
  %s6 = ssub.s32 1, %s4
  %s7 = scalar_select 0, %s6, %s4
  $region1: #{tpu_custom_call.1} parent=0
    #allocation3 [shape = 'u8[262144]{0}', space=vmem, size = 0x40000, scoped, tag = 'output window, operand 0']
    #allocation4 [shape = 's32[2]{0}', space=sflag, size = 0x8, scoped, tag = 'scoped memory for tpu_custom_call.1']
    %8 = vsyncpa [#allocation4], 0
    %s9 = scalar_lea.sflag [#allocation4], 1
    %10 = vsyncpa %s9, 0
    loop: start=0, step=1, limit=4
    $region2: #{tpu_custom_call.1} parent=1 // loop_pre_header
      _
    $region3: #{tpu_custom_call.1} parent=1 // loop_header
      %s12 = sphi 0, %s16
      %p13 = scmp.ge.s32.totalorder %s12, 4
      %s19 = sphi 0, %s31
      %s20 = sphi 0, %s27
      %s21 = sphi 0, %s19
      %s22 = sphi 0, %s20
      %s23 = sphi 0, %s21
      %s24 = sphi 0, %s22
      %s34 = sphi 0, %s36
      %s37 = sphi 0, %s34
      %s38 = sphi 0, %s37
      %s54 = sphi 0, %s38
      %s58 = sphi 0, %s58
      %s60 = sphi 0, %s58
      %s61 = sphi 0, %s60
      %s75 = sphi 0, %s61
      %s79 = sphi 0, %s79
      %s81 = sphi 0, %s79
      %s82 = sphi 0, %s81
      %s96 = sphi 0, %s82
      %s104 = sphi 0, %s106
      %s107 = sphi 0, %s104
      %s108 = sphi 0, %s107
      %s124 = sphi 0, %s108
    $region4: #{tpu_custom_call.1} parent=1 // loop_header_branch
      %15 = sbr.rel (%p13) target = $region8
    $region5: #{tpu_custom_call.1} parent=1 // loop_body
      %s17 = ssub.s32 %s12, 1
      %s18 = ssub.s32 %s12, 2
      %s25 = sadd.s32 1, %s20
      %p26 = scmp.ge.s32.totalorder %s25, 1
      %s27 = scalar_select %p26, 0, %s25
      %s28 = sadd.s32 1, %s19
      %s29 = scalar_select %p26, %s28, %s19
      %p30 = scmp.ge.s32.totalorder %s29, 2
      %s31 = scalar_select %p30, 0, %s29
      %s32 = ssub.s32 %s19, %s31
      %p33 = scmp.eq.s32.totalorder %s32, 0
      %s35 = sadd.s32 %s34, 1
      %s36 = scalar_select %p33, %s34, %s35
      %p39 = pneg %p33
      %p40 = scmp.eq.s32.totalorder %s12, 1
      %p41 = por %p39, %p40
      %p42 = scmp.ne.s32.totalorder %s34, %s37
      %p43 = scmp.eq.s32.totalorder %s12, 0
      %p44 = por %p42, %p43
      %p45 = scmp.ne.s32.totalorder %s34, %s37
      %p46 = scmp.eq.s32.totalorder %s17, 1
      %p47 = por %p45, %p46
      %p48 = scmp.ne.s32.totalorder %s37, %s38
      %p49 = scmp.eq.s32.totalorder %s17, 0
      %p50 = por %p48, %p49
      %p51 = scmp.ne.s32.totalorder %s37, %s38
      %p52 = scmp.eq.s32.totalorder %s18, 1
      %p53 = por %p51, %p52
      %p55 = scmp.ne.s32.totalorder %s38, %s54
      %p56 = scmp.eq.s32.totalorder %s18, 0
      %p57 = por %p55, %p56
      %s59 = sadd.s32 %s58, 1
      %p62 = scmp.eq.s32.totalorder %s12, 1
      %p63 = scmp.ne.s32.totalorder %s58, %s60
      %p64 = scmp.eq.s32.totalorder %s12, 0
      %p65 = por %p63, %p64
      %p66 = scmp.ne.s32.totalorder %s58, %s60
      %p67 = scmp.eq.s32.totalorder %s17, 1
      %p68 = por %p66, %p67
      %p69 = scmp.ne.s32.totalorder %s60, %s61
      %p70 = scmp.eq.s32.totalorder %s17, 0
      %p71 = por %p69, %p70
      %p72 = scmp.ne.s32.totalorder %s60, %s61
      %p73 = scmp.eq.s32.totalorder %s18, 1
      %p74 = por %p72, %p73
      %p76 = scmp.ne.s32.totalorder %s61, %s75
      %p77 = scmp.eq.s32.totalorder %s18, 0
      %p78 = por %p76, %p77
      %s80 = sadd.s32 %s79, 1
      %p83 = scmp.eq.s32.totalorder %s12, 1
      %p84 = scmp.ne.s32.totalorder %s79, %s81
      %p85 = scmp.eq.s32.totalorder %s12, 0
      %p86 = por %p84, %p85
      %p87 = scmp.ne.s32.totalorder %s79, %s81
      %p88 = scmp.eq.s32.totalorder %s17, 1
      %p89 = por %p87, %p88
      %p90 = scmp.ne.s32.totalorder %s81, %s82
      %p91 = scmp.eq.s32.totalorder %s17, 0
      %p92 = por %p90, %p91
      %p93 = scmp.ne.s32.totalorder %s81, %s82
      %p94 = scmp.eq.s32.totalorder %s18, 1
      %p95 = por %p93, %p94
      %p97 = scmp.ne.s32.totalorder %s82, %s96
      %p98 = scmp.eq.s32.totalorder %s18, 0
      %p99 = por %p97, %p98
      %s100 = ssub.s32 %s19, %s31
      %s101 = ssub.s32 %s20, %s27
      %s102 = sor.u32 %s100, %s101
      %p103 = scmp.eq.s32.totalorder %s102, 0
      %s105 = sadd.s32 %s104, 1
      %s106 = scalar_select %p103, %s104, %s105
      %p109 = pneg %p103
      %p110 = scmp.eq.s32.totalorder %s12, 1
      %p111 = por %p109, %p110
      %p112 = scmp.ne.s32.totalorder %s104, %s107
      %p113 = scmp.eq.s32.totalorder %s12, 0
      %p114 = por %p112, %p113
      %p115 = scmp.ne.s32.totalorder %s104, %s107
      %p116 = scmp.eq.s32.totalorder %s17, 1
      %p117 = por %p115, %p116
      %p118 = scmp.ne.s32.totalorder %s107, %s108
      %p119 = scmp.eq.s32.totalorder %s17, 0
      %p120 = por %p118, %p119
      %p121 = scmp.ne.s32.totalorder %s107, %s108
      %p122 = scmp.eq.s32.totalorder %s18, 1
      %p123 = por %p121, %p122
      %p125 = scmp.ne.s32.totalorder %s108, %s124
      %p126 = scmp.eq.s32.totalorder %s18, 0
      %p127 = por %p125, %p126
      %p128 = scmp.le.s32.totalorder 1, %s12
      %p129 = scmp.lt.s32.totalorder %s12, 3
      %p130 = pnand %p128, %p129
      %p131 = pneg %p130
      // Predicated region
      $region9: #{tpu_custom_call.1} parent=5 // pred_check
        _
      $region10: #{tpu_custom_call.1} parent=5 // pred_check_branch
        %133 = sbr.rel (%p130) target = $region12
      $region11: #{tpu_custom_call.1} parent=5 // pred_region
        %s134 = ssub.s32 %s12, 1
        // Predicated region
        $region13: #{tpu_custom_call.1} parent=11 // pred_check
          %p135 = pneg %p71
        $region14: #{tpu_custom_call.1} parent=11 // pred_check_branch
          %137 = sbr.rel (%p135) target = $region16
        $region15: #{tpu_custom_call.1} parent=11 // pred_region
          _
        $region16: #{tpu_custom_call.1} parent=11 // pred_fallthru
          _
        // Predicated region
        $region17: #{tpu_custom_call.1} parent=11 // pred_check
          %p138 = pneg %p92
        $region18: #{tpu_custom_call.1} parent=11 // pred_check_branch
          %140 = sbr.rel (%p138) target = $region20
        $region19: #{tpu_custom_call.1} parent=11 // pred_region
          _
        $region20: #{tpu_custom_call.1} parent=11 // pred_fallthru
          _
      $region12: #{tpu_custom_call.1} parent=5 // pred_fallthru
        _
      %p141 = scmp.lt.s32.totalorder %s12, 2
      // Predicated region
      $region21: #{tpu_custom_call.1} parent=5 // pred_check
        %p142 = pneg %p141
      $region22: #{tpu_custom_call.1} parent=5 // pred_check_branch
        %144 = sbr.rel (%p142) target = $region24
      $region23: #{tpu_custom_call.1} parent=5 // pred_region
        // Predicated region
        $region25: #{tpu_custom_call.1} parent=23 // pred_check
          %p145 = pneg %p44
        $region26: #{tpu_custom_call.1} parent=23 // pred_check_branch
          %147 = sbr.rel (%p145) target = $region28
        $region27: #{tpu_custom_call.1} parent=23 // pred_region
          %p148 = scmp.lt.s32.totalorder %s19, 1
          %s149 = scalar_select %p148, %s19, 1
          %s150 = smul.addr %s149, 54
          %s151 = smul.addr %s150, 4
          %s152 = scalar_lea.vmem %s0, %s151
        $region28: #{tpu_custom_call.1} parent=23 // pred_fallthru
          _
      $region24: #{tpu_custom_call.1} parent=5 // pred_fallthru
        _
      %p153 = scmp.le.s32.totalorder 1, %s12
      %p154 = scmp.lt.s32.totalorder %s12, 3
      %p155 = pnand %p153, %p154
      %p156 = pneg %p155
      // Predicated region
      $region29: #{tpu_custom_call.1} parent=5 // pred_check
        _
      $region30: #{tpu_custom_call.1} parent=5 // pred_check_branch
        %158 = sbr.rel (%p155) target = $region32
      $region31: #{tpu_custom_call.1} parent=5 // pred_region
        %s159 = ssub.s32 %s12, 1
        %p160 = scmp.lt.s32.totalorder %s21, 1
        %s161 = scalar_select %p160, %s21, 1
        %s162 = smul.addr %s161, 54
        %s163 = smul.addr %s162, 4
        %s164 = scalar_lea.vmem %s0, %s163
        %p165 = pneg %p50
        %p166 = pneg %p47
        %p167 = pneg %p71
        %p168 = pneg %p68
        %p169 = pneg %p92
        %p170 = pneg %p89
        %p171 = pneg %p120
        %p172 = pneg %p117
        %s173 = sand.u32 %s107, 1
        %s174 = scalar_lea.sflag [#allocation4], %s173
        %s175 = sand.u32 %s107, 1
        %s176 = smul.addr %s175, 256
        %s177 = scalar_lea.vmem [#allocation3], %s176
        %p178 = scmp.lt.s32.totalorder %s21, 1
        %s179 = scalar_select %p178, %s21, 1
        %s180 = smul.addr %s179, 54
        %s181 = smul.addr %s180, 4
        %s182 = scalar_lea.vmem %s0, %s181
        %s183 = smul.u32 32, %s22
        %185 = vst [vmem:[#allocation2] sm:$0xff] 0.0
        %186 = vst [vmem:[#allocation2 + $0x8] sm:$0xff] 0.0
        %187 = vst [vmem:[#allocation2 + $0x10] sm:$0xff] 0.0
        %188 = vst [vmem:[#allocation2 + $0x18] sm:$0xff] 0.0
        %189 = vst [vmem:[#allocation2 + $0x20] sm:$0xff] 0.0
        %190 = vst [vmem:[#allocation2 + $0x28] sm:$0xff] 0.0
        %191 = vst [vmem:[#allocation2 + $0x30] sm:$0xff] 0.0
        %192 = vst [vmem:[#allocation2 + $0x38] sm:$0xff] 0.0
        %193 = vst [vmem:[#allocation2 + $0x40] sm:$0xff] 0.0
        %194 = vst [vmem:[#allocation2 + $0x48] sm:$0xff] 0.0
        %195 = vst [vmem:[#allocation2 + $0x50] sm:$0xff] 0.0
        %196 = vst [vmem:[#allocation2 + $0x58] sm:$0xff] 0.0
        %197 = vst [vmem:[#allocation2 + $0x60] sm:$0xff] 0.0
        %198 = vst [vmem:[#allocation2 + $0x68] sm:$0xff] 0.0
        %199 = vst [vmem:[#allocation2 + $0x70] sm:$0xff] 0.0
        %200 = vst [vmem:[#allocation2 + $0x78] sm:$0xff] 0.0
        %201 = vst [vmem:[#allocation2 + $0x80] sm:$0xff] 0.0
        %202 = vst [vmem:[#allocation2 + $0x88] sm:$0xff] 0.0
        %203 = vst [vmem:[#allocation2 + $0x90] sm:$0xff] 0.0
        %204 = vst [vmem:[#allocation2 + $0x98] sm:$0xff] 0.0
        %205 = vst [vmem:[#allocation2 + $0xa0] sm:$0xff] 0.0
        %206 = vst [vmem:[#allocation2 + $0xa8] sm:$0xff] 0.0
        %207 = vst [vmem:[#allocation2 + $0xb0] sm:$0xff] 0.0
        %208 = vst [vmem:[#allocation2 + $0xb8] sm:$0xff] 0.0
        %209 = vst [vmem:[#allocation2 + $0xc0] sm:$0xff] 0.0
        %210 = vst [vmem:[#allocation2 + $0xc8] sm:$0xff] 0.0
        %211 = vst [vmem:[#allocation2 + $0xd0] sm:$0xff] 0.0
        %212 = vst [vmem:[#allocation2 + $0xd8] sm:$0xff] 0.0
        %213 = vst [vmem:[#allocation2 + $0xe0] sm:$0xff] 0.0
        %214 = vst [vmem:[#allocation2 + $0xe8] sm:$0xff] 0.0
        %215 = vst [vmem:[#allocation2 + $0xf0] sm:$0xff] 0.0
        %216 = vst [vmem:[#allocation2 + $0xf8] sm:$0xff] 0.0
        %s217 = smul.u32 %s22, 16
        %s218 = smul.u32 %s217, 3
        %s219 = smul.addr %s218, 4
        %s220 = scalar_lea.vmem %s182, %s219
        %v221 = vld [vmem:[%s220] sm:$0xf]
        %v222 = vld [vmem:[%s220 + $0x4] sm:$0xf]
        %v223 = vld [vmem:[%s220 + $0xc] sm:$0xf]
        %v224 = vld [vmem:[%s220 + $0x10] sm:$0xf]
        %v225 = vld [vmem:[%s220 + $0x18] sm:$0xf]
        %v226 = vld [vmem:[%s220 + $0x1c] sm:$0xf]
        %v227 = vld [vmem:[%s220 + $0x24] sm:$0xf]
        %v228 = vld [vmem:[%s220 + $0x28] sm:$0xf]
        %v229 = vld [vmem:[%s220 + $0x30] sm:$0xf]
        %v230 = vld [vmem:[%s220 + $0x34] sm:$0xf]
        %v231 = vld [vmem:[%s220 + $0x3c] sm:$0xf]
        %v232 = vld [vmem:[%s220 + $0x40] sm:$0xf]
        %v233 = vld [vmem:[%s220 + $0x48] sm:$0xf]
        %v234 = vld [vmem:[%s220 + $0x4c] sm:$0xf]
        %v235 = vld [vmem:[%s220 + $0x54] sm:$0xf]
        %v236 = vld [vmem:[%s220 + $0x58] sm:$0xf]
        %v237 = vld [vmem:[%s220 + $0x60] sm:$0xf]
        %v238 = vld [vmem:[%s220 + $0x64] sm:$0xf]
        %v239 = vld [vmem:[%s220 + $0x6c] sm:$0xf]
        %v240 = vld [vmem:[%s220 + $0x70] sm:$0xf]
        %v241 = vld [vmem:[%s220 + $0x78] sm:$0xf]
        %v242 = vld [vmem:[%s220 + $0x7c] sm:$0xf]
        %v243 = vld [vmem:[%s220 + $0x84] sm:$0xf]
        %v244 = vld [vmem:[%s220 + $0x88] sm:$0xf]
        %v245 = vld [vmem:[%s220 + $0x90] sm:$0xf]
        %v246 = vld [vmem:[%s220 + $0x94] sm:$0xf]
        %v247 = vld [vmem:[%s220 + $0x9c] sm:$0xf]
        %v248 = vld [vmem:[%s220 + $0xa0] sm:$0xf]
        %v249 = vld [vmem:[%s220 + $0xa8] sm:$0xf]
        %v250 = vld [vmem:[%s220 + $0xac] sm:$0xf]
        %v251 = vld [vmem:[%s220 + $0xb4] sm:$0xf]
        %v252 = vld [vmem:[%s220 + $0xb8] sm:$0xf]
        %v253 = vld [vmem:[#allocation2] sm:$0xff]
        %v254 = vld [vmem:[#allocation2 + $0x8] sm:$0xff]
        %v255 = vld [vmem:[#allocation2 + $0x10] sm:$0xff]
        %v256 = vld [vmem:[#allocation2 + $0x18] sm:$0xff]
        %v257 = vld [vmem:[#allocation2 + $0x20] sm:$0xff]
        %v258 = vld [vmem:[#allocation2 + $0x28] sm:$0xff]
        %v259 = vld [vmem:[#allocation2 + $0x30] sm:$0xff]
        %v260 = vld [vmem:[#allocation2 + $0x38] sm:$0xff]
        %v261 = vld [vmem:[#allocation2 + $0x40] sm:$0xff]
        %v262 = vld [vmem:[#allocation2 + $0x48] sm:$0xff]
        %v263 = vld [vmem:[#allocation2 + $0x50] sm:$0xff]
        %v264 = vld [vmem:[#allocation2 + $0x58] sm:$0xff]
        %v265 = vld [vmem:[#allocation2 + $0x60] sm:$0xff]
        %v266 = vld [vmem:[#allocation2 + $0x68] sm:$0xff]
        %v267 = vld [vmem:[#allocation2 + $0x70] sm:$0xff]
        %v268 = vld [vmem:[#allocation2 + $0x78] sm:$0xff]
        %v269 = vld [vmem:[#allocation2 + $0x80] sm:$0xff]
        %v270 = vld [vmem:[#allocation2 + $0x88] sm:$0xff]
        %v271 = vld [vmem:[#allocation2 + $0x90] sm:$0xff]
        %v272 = vld [vmem:[#allocation2 + $0x98] sm:$0xff]
        %v273 = vld [vmem:[#allocation2 + $0xa0] sm:$0xff]
        %v274 = vld [vmem:[#allocation2 + $0xa8] sm:$0xff]
        %v275 = vld [vmem:[#allocation2 + $0xb0] sm:$0xff]
        %v276 = vld [vmem:[#allocation2 + $0xb8] sm:$0xff]
        %v277 = vld [vmem:[#allocation2 + $0xc0] sm:$0xff]
        %v278 = vld [vmem:[#allocation2 + $0xc8] sm:$0xff]
        %v279 = vld [vmem:[#allocation2 + $0xd0] sm:$0xff]
        %v280 = vld [vmem:[#allocation2 + $0xd8] sm:$0xff]
        %v281 = vld [vmem:[#allocation2 + $0xe0] sm:$0xff]
        %v282 = vld [vmem:[#allocation2 + $0xe8] sm:$0xff]
        %v283 = vld [vmem:[#allocation2 + $0xf0] sm:$0xff]
        %v284 = vld [vmem:[#allocation2 + $0xf8] sm:$0xff]
        %v285 = vld [vmem:[%s1] sm:$0x3]
        %v318 = vunpack.c.l.b16 %v221
        %v319 = vunpack.c.l.b16 %v222
        %v320 = vunpack.c.l.b16 %v223
        %v321 = vunpack.c.l.b16 %v224
        %v322 = vunpack.c.l.b16 %v225
        %v323 = vunpack.c.l.b16 %v226
        %v324 = vunpack.c.l.b16 %v227
        %v325 = vunpack.c.l.b16 %v228
        %v326 = vunpack.c.l.b16 %v229
        %v327 = vunpack.c.l.b16 %v230
        %v328 = vunpack.c.l.b16 %v231
        %v329 = vunpack.c.l.b16 %v232
        %v330 = vunpack.c.l.b16 %v233
        %v331 = vunpack.c.l.b16 %v234
        %v332 = vunpack.c.l.b16 %v235
        %v333 = vunpack.c.l.b16 %v236
        %v334 = vunpack.c.l.b16 %v237
        %v335 = vunpack.c.l.b16 %v238
        %v336 = vunpack.c.l.b16 %v239
        %v337 = vunpack.c.l.b16 %v240
        %v338 = vunpack.c.l.b16 %v241
        %v339 = vunpack.c.l.b16 %v242
        %v340 = vunpack.c.l.b16 %v243
        %v341 = vunpack.c.l.b16 %v244
        %v342 = vunpack.c.l.b16 %v245
        %v343 = vunpack.c.l.b16 %v246
        %v344 = vunpack.c.l.b16 %v247
        %v345 = vunpack.c.l.b16 %v248
        %v346 = vunpack.c.l.b16 %v249
        %v347 = vunpack.c.l.b16 %v250
        %v348 = vunpack.c.l.b16 %v251
        %v349 = vunpack.c.l.b16 %v252
        %v350 = vpack.c.b16 %v319, %v318
        %v351 = vpack.c.b16 %v321, %v320
        %v352 = vpack.c.b16 %v323, %v322
        %v353 = vpack.c.b16 %v325, %v324
        %v354 = vpack.c.b16 %v327, %v326
        %v355 = vpack.c.b16 %v329, %v328
        %v356 = vpack.c.b16 %v331, %v330
        %v357 = vpack.c.b16 %v333, %v332
        %v358 = vpack.c.b16 %v335, %v334
        %v359 = vpack.c.b16 %v337, %v336
        %v360 = vpack.c.b16 %v339, %v338
        %v361 = vpack.c.b16 %v341, %v340
        %v362 = vpack.c.b16 %v343, %v342
        %v363 = vpack.c.b16 %v345, %v344
        %v364 = vpack.c.b16 %v347, %v346
        %v365 = vpack.c.b16 %v349, %v348
        %vm366 = vcmask 31744
        %v368 = vsel %vm366, %v350, 0
        %v371 = vsel %vm366, %v351, 0
        %v374 = vsel %vm366, %v352, 0
        %v377 = vsel %vm366, %v353, 0
        %v380 = vsel %vm366, %v354, 0
        %v383 = vsel %vm366, %v355, 0
        %v386 = vsel %vm366, %v356, 0
        %v389 = vsel %vm366, %v357, 0
        %v392 = vsel %vm366, %v358, 0
        %v395 = vsel %vm366, %v359, 0
        %v398 = vsel %vm366, %v360, 0
        %v401 = vsel %vm366, %v361, 0
        %v404 = vsel %vm366, %v362, 0
        %v407 = vsel %vm366, %v363, 0
        %v410 = vsel %vm366, %v364, 0
        %v413 = vsel %vm366, %v365, 0
        %vm415 = vcmask 1041408
        %v417 = vsel %vm415, %v285, 0
        %419 = vmatprep.subr.bf16.mxu0 0
        %420 = vmatpush1.bf16.msra.mxu0 %v417
        %421 = vmatprep.subr.bf16.mxu0 0
        %422 = vmatpush1.bf16.msra.mxu0 0
        %423 = vmatprep.subr.bf16.mxu0 0
        %424 = vmatpush1.bf16.msra.mxu0 0
        %425 = vmatprep.subr.bf16.mxu0 0
        %426 = vmatpush1.bf16.msra.mxu0 0
        %427 = vmatprep.subr.bf16.mxu0 0
        %428 = vmatpush1.bf16.msra.mxu0 0
        %429 = vmatprep.subr.bf16.mxu0 0
        %430 = vmatpush1.bf16.msra.mxu0 0
        %431 = vmatprep.subr.bf16.mxu0 0
        %432 = vmatpush1.bf16.msra.mxu0 0
        %433 = vmatprep.subr.bf16.mxu0 0
        %434 = vmatpush1.bf16.msra.mxu0 0
        %435 = vmatprep.subr.bf16.mxu0 0
        %436 = vmatpush1.bf16.msra.mxu0 0
        %437 = vmatprep.subr.bf16.mxu0 0
        %438 = vmatpush1.bf16.msra.mxu0 0
        %439 = vmatprep.subr.bf16.mxu0 0
        %440 = vmatpush1.bf16.msra.mxu0 0
        %441 = vmatprep.subr.bf16.mxu0 0
        %442 = vmatpush1.bf16.msra.mxu0 0
        %443 = vmatprep.subr.bf16.mxu0 0
        %444 = vmatpush1.bf16.msra.mxu0 0
        %445 = vmatprep.subr.bf16.mxu0 0
        %446 = vmatpush1.bf16.msra.mxu0 0
        %447 = vmatprep.subr.bf16.mxu0 0
        %448 = vmatpush1.bf16.msra.mxu0 0
        %449 = vmatprep.subr.bf16.mxu0 0
        %450 = vmatpush1.bf16.msra.mxu0 0
        %451 = vmatprep.mubr.bf16.mxu0 0
        %452 = vmatmul.mubr.bf16.gmra.mrb[0].mxu0 %v368
        %v453 = vpop.f32.mrb[0].mxu0
        %v454 = vadd.f32 0.0, %v453
        %v455 = vpop.f32.mrb[0].mxu0
        %v456 = vpop.f32.mrb[0].mxu0
        %v457 = vadd.f32 0.0, %v456
        %v458 = vpop.f32.mrb[0].mxu0
        %459 = vmatprep.mubr.bf16.mxu0 0
        %460 = vmatmul.mubr.bf16.gmra.mrb[0].mxu0 %v371
        %v461 = vpop.f32.mrb[0].mxu0
        %v462 = vadd.f32 0.0, %v461
        %v463 = vpop.f32.mrb[0].mxu0
        %v464 = vpop.f32.mrb[0].mxu0
        %v465 = vadd.f32 0.0, %v464
        %v466 = vpop.f32.mrb[0].mxu0
        %467 = vmatprep.mubr.bf16.mxu0 0
        %468 = vmatmul.mubr.bf16.gmra.mrb[0].mxu0 %v374
        %v469 = vpop.f32.mrb[0].mxu0
        %v470 = vadd.f32 0.0, %v469
        %v471 = vpop.f32.mrb[0].mxu0
        %v472 = vpop.f32.mrb[0].mxu0
        %v473 = vadd.f32 0.0, %v472
        %v474 = vpop.f32.mrb[0].mxu0
        %475 = vmatprep.mubr.bf16.mxu0 0
        %476 = vmatmul.mubr.bf16.gmra.mrb[0].mxu0 %v377
        %v477 = vpop.f32.mrb[0].mxu0
        %v478 = vadd.f32 0.0, %v477
        %v479 = vpop.f32.mrb[0].mxu0
        %v480 = vpop.f32.mrb[0].mxu0
        %v481 = vadd.f32 0.0, %v480
        %v482 = vpop.f32.mrb[0].mxu0
        %483 = vmatprep.mubr.bf16.mxu0 0
        %484 = vmatmul.mubr.bf16.gmra.mrb[0].mxu0 %v380
        %v485 = vpop.f32.mrb[0].mxu0
        %v486 = vadd.f32 0.0, %v485
        %v487 = vpop.f32.mrb[0].mxu0
        %v488 = vpop.f32.mrb[0].mxu0
        %v489 = vadd.f32 0.0, %v488
        %v490 = vpop.f32.mrb[0].mxu0
        %491 = vmatprep.mubr.bf16.mxu0 0
        %492 = vmatmul.mubr.bf16.gmra.mrb[0].mxu0 %v383
        %v493 = vpop.f32.mrb[0].mxu0
        %v494 = vadd.f32 0.0, %v493
        %v495 = vpop.f32.mrb[0].mxu0
        %v496 = vpop.f32.mrb[0].mxu0
        %v497 = vadd.f32 0.0, %v496
        %v498 = vpop.f32.mrb[0].mxu0
        %499 = vmatprep.mubr.bf16.mxu0 0
        %500 = vmatmul.mubr.bf16.gmra.mrb[0].mxu0 %v386
        %v501 = vpop.f32.mrb[0].mxu0
        %v502 = vadd.f32 0.0, %v501
        %v503 = vpop.f32.mrb[0].mxu0
        %v504 = vpop.f32.mrb[0].mxu0
        %v505 = vadd.f32 0.0, %v504
        %v506 = vpop.f32.mrb[0].mxu0
        %507 = vmatprep.mubr.bf16.mxu0 0
        %508 = vmatmul.mubr.bf16.gmra.mrb[0].mxu0 %v389
        %v509 = vpop.f32.mrb[0].mxu0
        %v510 = vadd.f32 0.0, %v509
        %v511 = vpop.f32.mrb[0].mxu0
        %v512 = vpop.f32.mrb[0].mxu0
        %v513 = vadd.f32 0.0, %v512
        %v514 = vpop.f32.mrb[0].mxu0
        %515 = vmatprep.mubr.bf16.mxu0 0
        %516 = vmatmul.mubr.bf16.gmra.mrb[0].mxu0 %v392
        %v517 = vpop.f32.mrb[0].mxu0
        %v518 = vadd.f32 0.0, %v517
        %v519 = vpop.f32.mrb[0].mxu0
        %v520 = vpop.f32.mrb[0].mxu0
        %v521 = vadd.f32 0.0, %v520
        %v522 = vpop.f32.mrb[0].mxu0
        %523 = vmatprep.mubr.bf16.mxu0 0
        %524 = vmatmul.mubr.bf16.gmra.mrb[0].mxu0 %v395
        %v525 = vpop.f32.mrb[0].mxu0
        %v526 = vadd.f32 0.0, %v525
        %v527 = vpop.f32.mrb[0].mxu0
        %v528 = vpop.f32.mrb[0].mxu0
        %v529 = vadd.f32 0.0, %v528
        %v530 = vpop.f32.mrb[0].mxu0
        %531 = vmatprep.mubr.bf16.mxu0 0
        %532 = vmatmul.mubr.bf16.gmra.mrb[0].mxu0 %v398
        %v533 = vpop.f32.mrb[0].mxu0
        %v534 = vadd.f32 0.0, %v533
        %v535 = vpop.f32.mrb[0].mxu0
        %v536 = vpop.f32.mrb[0].mxu0
        %v537 = vadd.f32 0.0, %v536
        %v538 = vpop.f32.mrb[0].mxu0
        %539 = vmatprep.mubr.bf16.mxu0 0
        %540 = vmatmul.mubr.bf16.gmra.mrb[0].mxu0 %v401
        %v541 = vpop.f32.mrb[0].mxu0
        %v542 = vadd.f32 0.0, %v541
        %v543 = vpop.f32.mrb[0].mxu0
        %v544 = vpop.f32.mrb[0].mxu0
        %v545 = vadd.f32 0.0, %v544
        %v546 = vpop.f32.mrb[0].mxu0
        %547 = vmatprep.mubr.bf16.mxu0 0
        %548 = vmatmul.mubr.bf16.gmra.mrb[0].mxu0 %v404
        %v549 = vpop.f32.mrb[0].mxu0
        %v550 = vadd.f32 0.0, %v549
        %v551 = vpop.f32.mrb[0].mxu0
        %v552 = vpop.f32.mrb[0].mxu0
        %v553 = vadd.f32 0.0, %v552
        %v554 = vpop.f32.mrb[0].mxu0
        %555 = vmatprep.mubr.bf16.mxu0 0
        %556 = vmatmul.mubr.bf16.gmra.mrb[0].mxu0 %v407
        %v557 = vpop.f32.mrb[0].mxu0
        %v558 = vadd.f32 0.0, %v557
        %v559 = vpop.f32.mrb[0].mxu0
        %v560 = vpop.f32.mrb[0].mxu0
        %v561 = vadd.f32 0.0, %v560
        %v562 = vpop.f32.mrb[0].mxu0
        %563 = vmatprep.mubr.bf16.mxu0 0
        %564 = vmatmul.mubr.bf16.gmra.mrb[0].mxu0 %v410
        %v565 = vpop.f32.mrb[0].mxu0
        %v566 = vadd.f32 0.0, %v565
        %v567 = vpop.f32.mrb[0].mxu0
        %v568 = vpop.f32.mrb[0].mxu0
        %v569 = vadd.f32 0.0, %v568
        %v570 = vpop.f32.mrb[0].mxu0
        %571 = vmatprep.mubr.bf16.mxu0 0
        %572 = vmatmul.mubr.bf16.gmra.mrb[0].mxu0 %v413
        %v573 = vpop.f32.mrb[0].mxu0
        %v574 = vadd.f32 0.0, %v573
        %v575 = vpop.f32.mrb[0].mxu0
        %v576 = vpop.f32.mrb[0].mxu0
        %v577 = vadd.f32 0.0, %v576
        %v578 = vpop.f32.mrb[0].mxu0
        %579 = vdwg.mxu0
        %v580 = vadd.f32 %v253, %v454
        %v581 = vadd.f32 %v254, %v457
        %v582 = vadd.f32 %v255, %v462
        %v583 = vadd.f32 %v256, %v465
        %v584 = vadd.f32 %v257, %v470
        %v585 = vadd.f32 %v258, %v473
        %v586 = vadd.f32 %v259, %v478
        %v587 = vadd.f32 %v260, %v481
        %v588 = vadd.f32 %v261, %v486
        %v589 = vadd.f32 %v262, %v489
        %v590 = vadd.f32 %v263, %v494
        %v591 = vadd.f32 %v264, %v497
        %v592 = vadd.f32 %v265, %v502
        %v593 = vadd.f32 %v266, %v505
        %v594 = vadd.f32 %v267, %v510
        %v595 = vadd.f32 %v268, %v513
        %v596 = vadd.f32 %v269, %v518
        %v597 = vadd.f32 %v270, %v521
        %v598 = vadd.f32 %v271, %v526
        %v599 = vadd.f32 %v272, %v529
        %v600 = vadd.f32 %v273, %v534
        %v601 = vadd.f32 %v274, %v537
        %v602 = vadd.f32 %v275, %v542
        %v603 = vadd.f32 %v276, %v545
        %v604 = vadd.f32 %v277, %v550
        %v605 = vadd.f32 %v278, %v553
        %v606 = vadd.f32 %v279, %v558
        %v607 = vadd.f32 %v280, %v561
        %v608 = vadd.f32 %v281, %v566
        %v609 = vadd.f32 %v282, %v569
        %v610 = vadd.f32 %v283, %v574
        %v611 = vadd.f32 %v284, %v577
        %612 = vst [vmem:[#allocation2] sm:$0xff] %v580
        %613 = vst [vmem:[#allocation2 + $0x8] sm:$0xff] %v581
        %614 = vst [vmem:[#allocation2 + $0x10] sm:$0xff] %v582
        %615 = vst [vmem:[#allocation2 + $0x18] sm:$0xff] %v583
        %616 = vst [vmem:[#allocation2 + $0x20] sm:$0xff] %v584
        %617 = vst [vmem:[#allocation2 + $0x28] sm:$0xff] %v585
        %618 = vst [vmem:[#allocation2 + $0x30] sm:$0xff] %v586
        %619 = vst [vmem:[#allocation2 + $0x38] sm:$0xff] %v587
        %620 = vst [vmem:[#allocation2 + $0x40] sm:$0xff] %v588
        %621 = vst [vmem:[#allocation2 + $0x48] sm:$0xff] %v589
        %622 = vst [vmem:[#allocation2 + $0x50] sm:$0xff] %v590
        %623 = vst [vmem:[#allocation2 + $0x58] sm:$0xff] %v591
        %624 = vst [vmem:[#allocation2 + $0x60] sm:$0xff] %v592
        %625 = vst [vmem:[#allocation2 + $0x68] sm:$0xff] %v593
        %626 = vst [vmem:[#allocation2 + $0x70] sm:$0xff] %v594
        %627 = vst [vmem:[#allocation2 + $0x78] sm:$0xff] %v595
        %628 = vst [vmem:[#allocation2 + $0x80] sm:$0xff] %v596
        %629 = vst [vmem:[#allocation2 + $0x88] sm:$0xff] %v597
        %630 = vst [vmem:[#allocation2 + $0x90] sm:$0xff] %v598
        %631 = vst [vmem:[#allocation2 + $0x98] sm:$0xff] %v599
        %632 = vst [vmem:[#allocation2 + $0xa0] sm:$0xff] %v600
        %633 = vst [vmem:[#allocation2 + $0xa8] sm:$0xff] %v601
        %634 = vst [vmem:[#allocation2 + $0xb0] sm:$0xff] %v602
        %635 = vst [vmem:[#allocation2 + $0xb8] sm:$0xff] %v603
        %636 = vst [vmem:[#allocation2 + $0xc0] sm:$0xff] %v604
        %637 = vst [vmem:[#allocation2 + $0xc8] sm:$0xff] %v605
        %638 = vst [vmem:[#allocation2 + $0xd0] sm:$0xff] %v606
        %639 = vst [vmem:[#allocation2 + $0xd8] sm:$0xff] %v607
        %640 = vst [vmem:[#allocation2 + $0xe0] sm:$0xff] %v608
        %641 = vst [vmem:[#allocation2 + $0xe8] sm:$0xff] %v609
        %642 = vst [vmem:[#allocation2 + $0xf0] sm:$0xff] %v610
        %643 = vst [vmem:[#allocation2 + $0xf8] sm:$0xff] %v611
        %v644 = vld [vmem:[%s220] sm:$0xf]
        %v645 = vld [vmem:[%s220 + $0x4] sm:$0xf]
        %v646 = vld [vmem:[%s220 + $0x8] sm:$0x1]
        %v647 = vld [vmem:[%s220 + $0xc] sm:$0xf]
        %v648 = vld [vmem:[%s220 + $0x10] sm:$0xf]
        %v649 = vld [vmem:[%s220 + $0x14] sm:$0x1]
        %v650 = vld [vmem:[%s220 + $0x18] sm:$0xf]
        %v651 = vld [vmem:[%s220 + $0x1c] sm:$0xf]
        %v652 = vld [vmem:[%s220 + $0x20] sm:$0x1]
        %v653 = vld [vmem:[%s220 + $0x24] sm:$0xf]
        %v654 = vld [vmem:[%s220 + $0x28] sm:$0xf]
        %v655 = vld [vmem:[%s220 + $0x2c] sm:$0x1]
        %v656 = vld [vmem:[%s220 + $0x30] sm:$0xf]
        %v657 = vld [vmem:[%s220 + $0x34] sm:$0xf]
        %v658 = vld [vmem:[%s220 + $0x38] sm:$0x1]
        %v659 = vld [vmem:[%s220 + $0x3c] sm:$0xf]
        %v660 = vld [vmem:[%s220 + $0x40] sm:$0xf]
        %v661 = vld [vmem:[%s220 + $0x44] sm:$0x1]
        %v662 = vld [vmem:[%s220 + $0x48] sm:$0xf]
        %v663 = vld [vmem:[%s220 + $0x4c] sm:$0xf]
        %v664 = vld [vmem:[%s220 + $0x50] sm:$0x1]
        %v665 = vld [vmem:[%s220 + $0x54] sm:$0xf]
        %v666 = vld [vmem:[%s220 + $0x58] sm:$0xf]
        %v667 = vld [vmem:[%s220 + $0x5c] sm:$0x1]
        %v668 = vld [vmem:[%s220 + $0x60] sm:$0xf]
        %v669 = vld [vmem:[%s220 + $0x64] sm:$0xf]
        %v670 = vld [vmem:[%s220 + $0x68] sm:$0x1]
        %v671 = vld [vmem:[%s220 + $0x6c] sm:$0xf]
        %v672 = vld [vmem:[%s220 + $0x70] sm:$0xf]
        %v673 = vld [vmem:[%s220 + $0x74] sm:$0x1]
        %v674 = vld [vmem:[%s220 + $0x78] sm:$0xf]
        %v675 = vld [vmem:[%s220 + $0x7c] sm:$0xf]
        %v676 = vld [vmem:[%s220 + $0x80] sm:$0x1]
        %v677 = vld [vmem:[%s220 + $0x84] sm:$0xf]
        %v678 = vld [vmem:[%s220 + $0x88] sm:$0xf]
        %v679 = vld [vmem:[%s220 + $0x8c] sm:$0x1]
        %v680 = vld [vmem:[%s220 + $0x90] sm:$0xf]
        %v681 = vld [vmem:[%s220 + $0x94] sm:$0xf]
        %v682 = vld [vmem:[%s220 + $0x98] sm:$0x1]
        %v683 = vld [vmem:[%s220 + $0x9c] sm:$0xf]
        %v684 = vld [vmem:[%s220 + $0xa0] sm:$0xf]
        %v685 = vld [vmem:[%s220 + $0xa4] sm:$0x1]
        %v686 = vld [vmem:[%s220 + $0xa8] sm:$0xf]
        %v687 = vld [vmem:[%s220 + $0xac] sm:$0xf]
        %v688 = vld [vmem:[%s220 + $0xb0] sm:$0x1]
        %v689 = vld [vmem:[%s220 + $0xb4] sm:$0xf]
        %v690 = vld [vmem:[%s220 + $0xb8] sm:$0xf]
        %v691 = vld [vmem:[%s220 + $0xbc] sm:$0x1]
        %vm692 = vsmask.f32 3328
        %vm693 = vsmask.f32 7440
        %vm694 = vmor %vm692, %vm693
        %v696 = vshrl.u32 %v644, 16
        %v698 = vrot.slane %v696, 4
        %v699 = vshll.u32 %v644, 16
        %v701 = vrot.slane %v699, 5
        %v702 = vor.u32 %v698, %v701
        %v703 = vrot.slane %v702, 4
        %v705 = vshll.u32 %v645, 16
        %v707 = vrot.slane %v705, 5
        %v708 = vsel %vm694, %v703, %v707
        %v709 = vshrl.u32 %v645, 16
        %v711 = vrot.slane %v709, 4
        %v712 = vor.u32 %v711, %v707
        %v713 = vrot.slane %v712, 4
        %v715 = vshll.u32 %v646, 16
        %v717 = vrot.slane %v715, 5
        %v718 = vsel %vm694, %v713, %v717
        %v720 = vshrl.u32 %v647, 16
        %v722 = vrot.slane %v720, 4
        %v723 = vshll.u32 %v647, 16
        %v725 = vrot.slane %v723, 5
        %v726 = vor.u32 %v722, %v725
        %v727 = vrot.slane %v726, 4
        %v729 = vshll.u32 %v648, 16
        %v731 = vrot.slane %v729, 5
        %v732 = vsel %vm694, %v727, %v731
        %v733 = vshrl.u32 %v648, 16
        %v735 = vrot.slane %v733, 4
        %v736 = vor.u32 %v735, %v731
        %v737 = vrot.slane %v736, 4
        %v739 = vshll.u32 %v649, 16
        %v741 = vrot.slane %v739, 5
        %v742 = vsel %vm694, %v737, %v741
        %v744 = vshrl.u32 %v650, 16
        %v746 = vrot.slane %v744, 4
        %v747 = vshll.u32 %v650, 16
        %v749 = vrot.slane %v747, 5
        %v750 = vor.u32 %v746, %v749
        %v751 = vrot.slane %v750, 4
        %v753 = vshll.u32 %v651, 16
        %v755 = vrot.slane %v753, 5
        %v756 = vsel %vm694, %v751, %v755
        %v757 = vshrl.u32 %v651, 16
        %v759 = vrot.slane %v757, 4
        %v760 = vor.u32 %v759, %v755
        %v761 = vrot.slane %v760, 4
        %v763 = vshll.u32 %v652, 16
        %v765 = vrot.slane %v763, 5
        %v766 = vsel %vm694, %v761, %v765
        %v768 = vshrl.u32 %v653, 16
        %v770 = vrot.slane %v768, 4
        %v771 = vshll.u32 %v653, 16
        %v773 = vrot.slane %v771, 5
        %v774 = vor.u32 %v770, %v773
        %v775 = vrot.slane %v774, 4
        %v777 = vshll.u32 %v654, 16
        %v779 = vrot.slane %v777, 5
        %v780 = vsel %vm694, %v775, %v779
        %v781 = vshrl.u32 %v654, 16
        %v783 = vrot.slane %v781, 4
        %v784 = vor.u32 %v783, %v779
        %v785 = vrot.slane %v784, 4
        %v787 = vshll.u32 %v655, 16
        %v789 = vrot.slane %v787, 5
        %v790 = vsel %vm694, %v785, %v789
        %v792 = vshrl.u32 %v656, 16
        %v794 = vrot.slane %v792, 4
        %v795 = vshll.u32 %v656, 16
        %v797 = vrot.slane %v795, 5
        %v798 = vor.u32 %v794, %v797
        %v799 = vrot.slane %v798, 4
        %v801 = vshll.u32 %v657, 16
        %v803 = vrot.slane %v801, 5
        %v804 = vsel %vm694, %v799, %v803
        %v805 = vshrl.u32 %v657, 16
        %v807 = vrot.slane %v805, 4
        %v808 = vor.u32 %v807, %v803
        %v809 = vrot.slane %v808, 4
        %v811 = vshll.u32 %v658, 16
        %v813 = vrot.slane %v811, 5
        %v814 = vsel %vm694, %v809, %v813
        %v816 = vshrl.u32 %v659, 16
        %v818 = vrot.slane %v816, 4
        %v819 = vshll.u32 %v659, 16
        %v821 = vrot.slane %v819, 5
        %v822 = vor.u32 %v818, %v821
        %v823 = vrot.slane %v822, 4
        %v825 = vshll.u32 %v660, 16
        %v827 = vrot.slane %v825, 5
        %v828 = vsel %vm694, %v823, %v827
        %v829 = vshrl.u32 %v660, 16
        %v831 = vrot.slane %v829, 4
        %v832 = vor.u32 %v831, %v827
        %v833 = vrot.slane %v832, 4
        %v835 = vshll.u32 %v661, 16
        %v837 = vrot.slane %v835, 5
        %v838 = vsel %vm694, %v833, %v837
        %v840 = vshrl.u32 %v662, 16
        %v842 = vrot.slane %v840, 4
        %v843 = vshll.u32 %v662, 16
        %v845 = vrot.slane %v843, 5
        %v846 = vor.u32 %v842, %v845
        %v847 = vrot.slane %v846, 4
        %v849 = vshll.u32 %v663, 16
        %v851 = vrot.slane %v849, 5
        %v852 = vsel %vm694, %v847, %v851
        %v853 = vshrl.u32 %v663, 16
        %v855 = vrot.slane %v853, 4
        %v856 = vor.u32 %v855, %v851
        %v857 = vrot.slane %v856, 4
        %v859 = vshll.u32 %v664, 16
        %v861 = vrot.slane %v859, 5
        %v862 = vsel %vm694, %v857, %v861
        %v864 = vshrl.u32 %v665, 16
        %v866 = vrot.slane %v864, 4
        %v867 = vshll.u32 %v665, 16
        %v869 = vrot.slane %v867, 5
        %v870 = vor.u32 %v866, %v869
        %v871 = vrot.slane %v870, 4
        %v873 = vshll.u32 %v666, 16
        %v875 = vrot.slane %v873, 5
        %v876 = vsel %vm694, %v871, %v875
        %v877 = vshrl.u32 %v666, 16
        %v879 = vrot.slane %v877, 4
        %v880 = vor.u32 %v879, %v875
        %v881 = vrot.slane %v880, 4
        %v883 = vshll.u32 %v667, 16
        %v885 = vrot.slane %v883, 5
        %v886 = vsel %vm694, %v881, %v885
        %v888 = vshrl.u32 %v668, 16
        %v890 = vrot.slane %v888, 4
        %v891 = vshll.u32 %v668, 16
        %v893 = vrot.slane %v891, 5
        %v894 = vor.u32 %v890, %v893
        %v895 = vrot.slane %v894, 4
        %v897 = vshll.u32 %v669, 16
        %v899 = vrot.slane %v897, 5
        %v900 = vsel %vm694, %v895, %v899
        %v901 = vshrl.u32 %v669, 16
        %v903 = vrot.slane %v901, 4
        %v904 = vor.u32 %v903, %v899
        %v905 = vrot.slane %v904, 4
        %v907 = vshll.u32 %v670, 16
        %v909 = vrot.slane %v907, 5
        %v910 = vsel %vm694, %v905, %v909
        %v912 = vshrl.u32 %v671, 16
        %v914 = vrot.slane %v912, 4
        %v915 = vshll.u32 %v671, 16
        %v917 = vrot.slane %v915, 5
        %v918 = vor.u32 %v914, %v917
        %v919 = vrot.slane %v918, 4
        %v921 = vshll.u32 %v672, 16
        %v923 = vrot.slane %v921, 5
        %v924 = vsel %vm694, %v919, %v923
        %v925 = vshrl.u32 %v672, 16
        %v927 = vrot.slane %v925, 4
        %v928 = vor.u32 %v927, %v923
        %v929 = vrot.slane %v928, 4
        %v931 = vshll.u32 %v673, 16
        %v933 = vrot.slane %v931, 5
        %v934 = vsel %vm694, %v929, %v933
        %v936 = vshrl.u32 %v674, 16
        %v938 = vrot.slane %v936, 4
        %v939 = vshll.u32 %v674, 16
        %v941 = vrot.slane %v939, 5
        %v942 = vor.u32 %v938, %v941
        %v943 = vrot.slane %v942, 4
        %v945 = vshll.u32 %v675, 16
        %v947 = vrot.slane %v945, 5
        %v948 = vsel %vm694, %v943, %v947
        %v949 = vshrl.u32 %v675, 16
        %v951 = vrot.slane %v949, 4
        %v952 = vor.u32 %v951, %v947
        %v953 = vrot.slane %v952, 4
        %v955 = vshll.u32 %v676, 16
        %v957 = vrot.slane %v955, 5
        %v958 = vsel %vm694, %v953, %v957
        %v960 = vshrl.u32 %v677, 16
        %v962 = vrot.slane %v960, 4
        %v963 = vshll.u32 %v677, 16
        %v965 = vrot.slane %v963, 5
        %v966 = vor.u32 %v962, %v965
        %v967 = vrot.slane %v966, 4
        %v969 = vshll.u32 %v678, 16
        %v971 = vrot.slane %v969, 5
        %v972 = vsel %vm694, %v967, %v971
        %v973 = vshrl.u32 %v678, 16
        %v975 = vrot.slane %v973, 4
        %v976 = vor.u32 %v975, %v971
        %v977 = vrot.slane %v976, 4
        %v979 = vshll.u32 %v679, 16
        %v981 = vrot.slane %v979, 5
        %v982 = vsel %vm694, %v977, %v981
        %v984 = vshrl.u32 %v680, 16
        %v986 = vrot.slane %v984, 4
        %v987 = vshll.u32 %v680, 16
        %v989 = vrot.slane %v987, 5
        %v990 = vor.u32 %v986, %v989
        %v991 = vrot.slane %v990, 4
        %v993 = vshll.u32 %v681, 16
        %v995 = vrot.slane %v993, 5
        %v996 = vsel %vm694, %v991, %v995
        %v997 = vshrl.u32 %v681, 16
        %v999 = vrot.slane %v997, 4
        %v1000 = vor.u32 %v999, %v995
        %v1001 = vrot.slane %v1000, 4
        %v1003 = vshll.u32 %v682, 16
        %v1005 = vrot.slane %v1003, 5
        %v1006 = vsel %vm694, %v1001, %v1005
        %v1008 = vshrl.u32 %v683, 16
        %v1010 = vrot.slane %v1008, 4
        %v1011 = vshll.u32 %v683, 16
        %v1013 = vrot.slane %v1011, 5
        %v1014 = vor.u32 %v1010, %v1013
        %v1015 = vrot.slane %v1014, 4
        %v1017 = vshll.u32 %v684, 16
        %v1019 = vrot.slane %v1017, 5
        %v1020 = vsel %vm694, %v1015, %v1019
        %v1021 = vshrl.u32 %v684, 16
        %v1023 = vrot.slane %v1021, 4
        %v1024 = vor.u32 %v1023, %v1019
        %v1025 = vrot.slane %v1024, 4
        %v1027 = vshll.u32 %v685, 16
        %v1029 = vrot.slane %v1027, 5
        %v1030 = vsel %vm694, %v1025, %v1029
        %v1032 = vshrl.u32 %v686, 16
        %v1034 = vrot.slane %v1032, 4
        %v1035 = vshll.u32 %v686, 16
        %v1037 = vrot.slane %v1035, 5
        %v1038 = vor.u32 %v1034, %v1037
        %v1039 = vrot.slane %v1038, 4
        %v1041 = vshll.u32 %v687, 16
        %v1043 = vrot.slane %v1041, 5
        %v1044 = vsel %vm694, %v1039, %v1043
        %v1045 = vshrl.u32 %v687, 16
        %v1047 = vrot.slane %v1045, 4
        %v1048 = vor.u32 %v1047, %v1043
        %v1049 = vrot.slane %v1048, 4
        %v1051 = vshll.u32 %v688, 16
        %v1053 = vrot.slane %v1051, 5
        %v1054 = vsel %vm694, %v1049, %v1053
        %v1056 = vshrl.u32 %v689, 16
        %v1058 = vrot.slane %v1056, 4
        %v1059 = vshll.u32 %v689, 16
        %v1061 = vrot.slane %v1059, 5
        %v1062 = vor.u32 %v1058, %v1061
        %v1063 = vrot.slane %v1062, 4
        %v1065 = vshll.u32 %v690, 16
        %v1067 = vrot.slane %v1065, 5
        %v1068 = vsel %vm694, %v1063, %v1067
        %v1069 = vshrl.u32 %v690, 16
        %v1071 = vrot.slane %v1069, 4
        %v1072 = vor.u32 %v1071, %v1067
        %v1073 = vrot.slane %v1072, 4
        %v1075 = vshll.u32 %v691, 16
        %v1077 = vrot.slane %v1075, 5
        %v1078 = vsel %vm694, %v1073, %v1077
        %v1079 = vld [vmem:[#allocation2] sm:$0xff]
        %v1080 = vld [vmem:[#allocation2 + $0x8] sm:$0xff]
        %v1081 = vld [vmem:[#allocation2 + $0x10] sm:$0xff]
        %v1082 = vld [vmem:[#allocation2 + $0x18] sm:$0xff]
        %v1083 = vld [vmem:[#allocation2 + $0x20] sm:$0xff]
        %v1084 = vld [vmem:[#allocation2 + $0x28] sm:$0xff]
        %v1085 = vld [vmem:[#allocation2 + $0x30] sm:$0xff]
        %v1086 = vld [vmem:[#allocation2 + $0x38] sm:$0xff]
        %v1087 = vld [vmem:[#allocation2 + $0x40] sm:$0xff]
        %v1088 = vld [vmem:[#allocation2 + $0x48] sm:$0xff]
        %v1089 = vld [vmem:[#allocation2 + $0x50] sm:$0xff]
        %v1090 = vld [vmem:[#allocation2 + $0x58] sm:$0xff]
        %v1091 = vld [vmem:[#allocation2 + $0x60] sm:$0xff]
        %v1092 = vld [vmem:[#allocation2 + $0x68] sm:$0xff]
        %v1093 = vld [vmem:[#allocation2 + $0x70] sm:$0xff]
        %v1094 = vld [vmem:[#allocation2 + $0x78] sm:$0xff]
        %v1095 = vld [vmem:[#allocation2 + $0x80] sm:$0xff]
        %v1096 = vld [vmem:[#allocation2 + $0x88] sm:$0xff]
        %v1097 = vld [vmem:[#allocation2 + $0x90] sm:$0xff]
        %v1098 = vld [vmem:[#allocation2 + $0x98] sm:$0xff]
        %v1099 = vld [vmem:[#allocation2 + $0xa0] sm:$0xff]
        %v1100 = vld [vmem:[#allocation2 + $0xa8] sm:$0xff]
        %v1101 = vld [vmem:[#allocation2 + $0xb0] sm:$0xff]
        %v1102 = vld [vmem:[#allocation2 + $0xb8] sm:$0xff]
        %v1103 = vld [vmem:[#allocation2 + $0xc0] sm:$0xff]
        %v1104 = vld [vmem:[#allocation2 + $0xc8] sm:$0xff]
        %v1105 = vld [vmem:[#allocation2 + $0xd0] sm:$0xff]
        %v1106 = vld [vmem:[#allocation2 + $0xd8] sm:$0xff]
        %v1107 = vld [vmem:[#allocation2 + $0xe0] sm:$0xff]
        %v1108 = vld [vmem:[#allocation2 + $0xe8] sm:$0xff]
        %v1109 = vld [vmem:[#allocation2 + $0xf0] sm:$0xff]
        %v1110 = vld [vmem:[#allocation2 + $0xf8] sm:$0xff]
        %s1111 = scalar_lea.vmem %s1, 2
        %v1112 = vld [vmem:[%s1111] sm:$0x3]
        %v1113 = vunpack.c.l.b16 %v708
        %v1114 = vunpack.c.l.b16 %v718
        %v1115 = vunpack.c.l.b16 %v732
        %v1116 = vunpack.c.l.b16 %v742
        %v1117 = vunpack.c.l.b16 %v756
        %v1118 = vunpack.c.l.b16 %v766
        %v1119 = vunpack.c.l.b16 %v780
        %v1120 = vunpack.c.l.b16 %v790
        %v1121 = vunpack.c.l.b16 %v804
        %v1122 = vunpack.c.l.b16 %v814
        %v1123 = vunpack.c.l.b16 %v828
        %v1124 = vunpack.c.l.b16 %v838
        %v1125 = vunpack.c.l.b16 %v852
        %v1126 = vunpack.c.l.b16 %v862
        %v1127 = vunpack.c.l.b16 %v876
        %v1128 = vunpack.c.l.b16 %v886
        %v1129 = vunpack.c.l.b16 %v900
        %v1130 = vunpack.c.l.b16 %v910
        %v1131 = vunpack.c.l.b16 %v924
        %v1132 = vunpack.c.l.b16 %v934
        %v1133 = vunpack.c.l.b16 %v948
        %v1134 = vunpack.c.l.b16 %v958
        %v1135 = vunpack.c.l.b16 %v972
        %v1136 = vunpack.c.l.b16 %v982
        %v1137 = vunpack.c.l.b16 %v996
        %v1138 = vunpack.c.l.b16 %v1006
        %v1139 = vunpack.c.l.b16 %v1020
        %v1140 = vunpack.c.l.b16 %v1030
        %v1141 = vunpack.c.l.b16 %v1044
        %v1142 = vunpack.c.l.b16 %v1054
        %v1143 = vunpack.c.l.b16 %v1068
        %v1144 = vunpack.c.l.b16 %v1078
        %v1145 = vpack.c.b16 %v1114, %v1113
        %v1146 = vpack.c.b16 %v1116, %v1115
        %v1147 = vpack.c.b16 %v1118, %v1117
        %v1148 = vpack.c.b16 %v1120, %v1119
        %v1149 = vpack.c.b16 %v1122, %v1121
        %v1150 = vpack.c.b16 %v1124, %v1123
        %v1151 = vpack.c.b16 %v1126, %v1125
        %v1152 = vpack.c.b16 %v1128, %v1127
        %v1153 = vpack.c.b16 %v1130, %v1129
        %v1154 = vpack.c.b16 %v1132, %v1131
        %v1155 = vpack.c.b16 %v1134, %v1133
        %v1156 = vpack.c.b16 %v1136, %v1135
        %v1157 = vpack.c.b16 %v1138, %v1137
        %v1158 = vpack.c.b16 %v1140, %v1139
        %v1159 = vpack.c.b16 %v1142, %v1141
        %v1160 = vpack.c.b16 %v1144, %v1143
        %v1162 = vsel %vm366, %v1145, 0
        %v1165 = vsel %vm366, %v1146, 0
        %v1168 = vsel %vm366, %v1147, 0
        %v1171 = vsel %vm366, %v1148, 0
        %v1174 = vsel %vm366, %v1149, 0
        %v1177 = vsel %vm366, %v1150, 0
        %v1180 = vsel %vm366, %v1151, 0
        %v1183 = vsel %vm366, %v1152, 0
        %v1186 = vsel %vm366, %v1153, 0
        %v1189 = vsel %vm366, %v1154, 0
        %v1192 = vsel %vm366, %v1155, 0
        %v1195 = vsel %vm366, %v1156, 0
        %v1198 = vsel %vm366, %v1157, 0
        %v1201 = vsel %vm366, %v1158, 0
        %v1204 = vsel %vm366, %v1159, 0
        %v1207 = vsel %vm366, %v1160, 0
        %v1210 = vsel %vm415, %v1112, 0
        %1212 = vmatprep.subr.bf16.mxu0 0
        %1213 = vmatpush1.bf16.msra.mxu0 %v1210
        %1214 = vmatprep.subr.bf16.mxu0 0
        %1215 = vmatpush1.bf16.msra.mxu0 0
        %1216 = vmatprep.subr.bf16.mxu0 0
        %1217 = vmatpush1.bf16.msra.mxu0 0
        %1218 = vmatprep.subr.bf16.mxu0 0
        %1219 = vmatpush1.bf16.msra.mxu0 0
        %1220 = vmatprep.subr.bf16.mxu0 0
        %1221 = vmatpush1.bf16.msra.mxu0 0
        %1222 = vmatprep.subr.bf16.mxu0 0
        %1223 = vmatpush1.bf16.msra.mxu0 0
        %1224 = vmatprep.subr.bf16.mxu0 0
        %1225 = vmatpush1.bf16.msra.mxu0 0
        %1226 = vmatprep.subr.bf16.mxu0 0
        %1227 = vmatpush1.bf16.msra.mxu0 0
        %1228 = vmatprep.subr.bf16.mxu0 0
        %1229 = vmatpush1.bf16.msra.mxu0 0
        %1230 = vmatprep.subr.bf16.mxu0 0
        %1231 = vmatpush1.bf16.msra.mxu0 0
        %1232 = vmatprep.subr.bf16.mxu0 0
        %1233 = vmatpush1.bf16.msra.mxu0 0
        %1234 = vmatprep.subr.bf16.mxu0 0
        %1235 = vmatpush1.bf16.msra.mxu0 0
        %1236 = vmatprep.subr.bf16.mxu0 0
        %1237 = vmatpush1.bf16.msra.mxu0 0
        %1238 = vmatprep.subr.bf16.mxu0 0
        %1239 = vmatpush1.bf16.msra.mxu0 0
        %1240 = vmatprep.subr.bf16.mxu0 0
        %1241 = vmatpush1.bf16.msra.mxu0 0
        %1242 = vmatprep.subr.bf16.mxu0 0
        %1243 = vmatpush1.bf16.msra.mxu0 0
        %1244 = vmatprep.mubr.bf16.mxu0 0
        %1245 = vmatmul.mubr.bf16.gmra.mrb[0].mxu0 %v1162
        %v1246 = vpop.f32.mrb[0].mxu0
        %v1247 = vadd.f32 0.0, %v1246
        %v1248 = vpop.f32.mrb[0].mxu0
        %v1249 = vpop.f32.mrb[0].mxu0
        %v1250 = vadd.f32 0.0, %v1249
        %v1251 = vpop.f32.mrb[0].mxu0
        %1252 = vmatprep.mubr.bf16.mxu0 0
        %1253 = vmatmul.mubr.bf16.gmra.mrb[0].mxu0 %v1165
        %v1254 = vpop.f32.mrb[0].mxu0
        %v1255 = vadd.f32 0.0, %v1254
        %v1256 = vpop.f32.mrb[0].mxu0
        %v1257 = vpop.f32.mrb[0].mxu0
        %v1258 = vadd.f32 0.0, %v1257
        %v1259 = vpop.f32.mrb[0].mxu0
        %1260 = vmatprep.mubr.bf16.mxu0 0
        %1261 = vmatmul.mubr.bf16.gmra.mrb[0].mxu0 %v1168
        %v1262 = vpop.f32.mrb[0].mxu0
        %v1263 = vadd.f32 0.0, %v1262
        %v1264 = vpop.f32.mrb[0].mxu0
        %v1265 = vpop.f32.mrb[0].mxu0
        %v1266 = vadd.f32 0.0, %v1265
        %v1267 = vpop.f32.mrb[0].mxu0
        %1268 = vmatprep.mubr.bf16.mxu0 0
        %1269 = vmatmul.mubr.bf16.gmra.mrb[0].mxu0 %v1171
        %v1270 = vpop.f32.mrb[0].mxu0
        %v1271 = vadd.f32 0.0, %v1270
        %v1272 = vpop.f32.mrb[0].mxu0
        %v1273 = vpop.f32.mrb[0].mxu0
        %v1274 = vadd.f32 0.0, %v1273
        %v1275 = vpop.f32.mrb[0].mxu0
        %1276 = vmatprep.mubr.bf16.mxu0 0
        %1277 = vmatmul.mubr.bf16.gmra.mrb[0].mxu0 %v1174
        %v1278 = vpop.f32.mrb[0].mxu0
        %v1279 = vadd.f32 0.0, %v1278
        %v1280 = vpop.f32.mrb[0].mxu0
        %v1281 = vpop.f32.mrb[0].mxu0
        %v1282 = vadd.f32 0.0, %v1281
        %v1283 = vpop.f32.mrb[0].mxu0
        %1284 = vmatprep.mubr.bf16.mxu0 0
        %1285 = vmatmul.mubr.bf16.gmra.mrb[0].mxu0 %v1177
        %v1286 = vpop.f32.mrb[0].mxu0
        %v1287 = vadd.f32 0.0, %v1286
        %v1288 = vpop.f32.mrb[0].mxu0
        %v1289 = vpop.f32.mrb[0].mxu0
        %v1290 = vadd.f32 0.0, %v1289
        %v1291 = vpop.f32.mrb[0].mxu0
        %1292 = vmatprep.mubr.bf16.mxu0 0
        %1293 = vmatmul.mubr.bf16.gmra.mrb[0].mxu0 %v1180
        %v1294 = vpop.f32.mrb[0].mxu0
        %v1295 = vadd.f32 0.0, %v1294
        %v1296 = vpop.f32.mrb[0].mxu0
        %v1297 = vpop.f32.mrb[0].mxu0
        %v1298 = vadd.f32 0.0, %v1297
        %v1299 = vpop.f32.mrb[0].mxu0
        %1300 = vmatprep.mubr.bf16.mxu0 0
        %1301 = vmatmul.mubr.bf16.gmra.mrb[0].mxu0 %v1183
        %v1302 = vpop.f32.mrb[0].mxu0
        %v1303 = vadd.f32 0.0, %v1302
        %v1304 = vpop.f32.mrb[0].mxu0
        %v1305 = vpop.f32.mrb[0].mxu0
        %v1306 = vadd.f32 0.0, %v1305
        %v1307 = vpop.f32.mrb[0].mxu0
        %1308 = vmatprep.mubr.bf16.mxu0 0
        %1309 = vmatmul.mubr.bf16.gmra.mrb[0].mxu0 %v1186
        %v1310 = vpop.f32.mrb[0].mxu0
        %v1311 = vadd.f32 0.0, %v1310
        %v1312 = vpop.f32.mrb[0].mxu0
        %v1313 = vpop.f32.mrb[0].mxu0
        %v1314 = vadd.f32 0.0, %v1313
        %v1315 = vpop.f32.mrb[0].mxu0
        %1316 = vmatprep.mubr.bf16.mxu0 0
        %1317 = vmatmul.mubr.bf16.gmra.mrb[0].mxu0 %v1189
        %v1318 = vpop.f32.mrb[0].mxu0
        %v1319 = vadd.f32 0.0, %v1318
        %v1320 = vpop.f32.mrb[0].mxu0
        %v1321 = vpop.f32.mrb[0].mxu0
        %v1322 = vadd.f32 0.0, %v1321
        %v1323 = vpop.f32.mrb[0].mxu0
        %1324 = vmatprep.mubr.bf16.mxu0 0
        %1325 = vmatmul.mubr.bf16.gmra.mrb[0].mxu0 %v1192
        %v1326 = vpop.f32.mrb[0].mxu0
        %v1327 = vadd.f32 0.0, %v1326
        %v1328 = vpop.f32.mrb[0].mxu0
        %v1329 = vpop.f32.mrb[0].mxu0
        %v1330 = vadd.f32 0.0, %v1329
        %v1331 = vpop.f32.mrb[0].mxu0
        %1332 = vmatprep.mubr.bf16.mxu0 0
        %1333 = vmatmul.mubr.bf16.gmra.mrb[0].mxu0 %v1195
        %v1334 = vpop.f32.mrb[0].mxu0
        %v1335 = vadd.f32 0.0, %v1334
        %v1336 = vpop.f32.mrb[0].mxu0
        %v1337 = vpop.f32.mrb[0].mxu0
        %v1338 = vadd.f32 0.0, %v1337
        %v1339 = vpop.f32.mrb[0].mxu0
        %1340 = vmatprep.mubr.bf16.mxu0 0
        %1341 = vmatmul.mubr.bf16.gmra.mrb[0].mxu0 %v1198
        %v1342 = vpop.f32.mrb[0].mxu0
        %v1343 = vadd.f32 0.0, %v1342
        %v1344 = vpop.f32.mrb[0].mxu0
        %v1345 = vpop.f32.mrb[0].mxu0
        %v1346 = vadd.f32 0.0, %v1345
        %v1347 = vpop.f32.mrb[0].mxu0
        %1348 = vmatprep.mubr.bf16.mxu0 0
        %1349 = vmatmul.mubr.bf16.gmra.mrb[0].mxu0 %v1201
        %v1350 = vpop.f32.mrb[0].mxu0
        %v1351 = vadd.f32 0.0, %v1350
        %v1352 = vpop.f32.mrb[0].mxu0
        %v1353 = vpop.f32.mrb[0].mxu0
        %v1354 = vadd.f32 0.0, %v1353
        %v1355 = vpop.f32.mrb[0].mxu0
        %1356 = vmatprep.mubr.bf16.mxu0 0
        %1357 = vmatmul.mubr.bf16.gmra.mrb[0].mxu0 %v1204
        %v1358 = vpop.f32.mrb[0].mxu0
        %v1359 = vadd.f32 0.0, %v1358
        %v1360 = vpop.f32.mrb[0].mxu0
        %v1361 = vpop.f32.mrb[0].mxu0
        %v1362 = vadd.f32 0.0, %v1361
        %v1363 = vpop.f32.mrb[0].mxu0
        %1364 = vmatprep.mubr.bf16.mxu0 0
        %1365 = vmatmul.mubr.bf16.gmra.mrb[0].mxu0 %v1207
        %v1366 = vpop.f32.mrb[0].mxu0
        %v1367 = vadd.f32 0.0, %v1366
        %v1368 = vpop.f32.mrb[0].mxu0
        %v1369 = vpop.f32.mrb[0].mxu0
        %v1370 = vadd.f32 0.0, %v1369
        %v1371 = vpop.f32.mrb[0].mxu0
        %1372 = vdwg.mxu0
        %v1373 = vadd.f32 %v1079, %v1247
        %v1374 = vadd.f32 %v1080, %v1250
        %v1375 = vadd.f32 %v1081, %v1255
        %v1376 = vadd.f32 %v1082, %v1258
        %v1377 = vadd.f32 %v1083, %v1263
        %v1378 = vadd.f32 %v1084, %v1266
        %v1379 = vadd.f32 %v1085, %v1271
        %v1380 = vadd.f32 %v1086, %v1274
        %v1381 = vadd.f32 %v1087, %v1279
        %v1382 = vadd.f32 %v1088, %v1282
        %v1383 = vadd.f32 %v1089, %v1287
        %v1384 = vadd.f32 %v1090, %v1290
        %v1385 = vadd.f32 %v1091, %v1295
        %v1386 = vadd.f32 %v1092, %v1298
        %v1387 = vadd.f32 %v1093, %v1303
        %v1388 = vadd.f32 %v1094, %v1306
        %v1389 = vadd.f32 %v1095, %v1311
        %v1390 = vadd.f32 %v1096, %v1314
        %v1391 = vadd.f32 %v1097, %v1319
        %v1392 = vadd.f32 %v1098, %v1322
        %v1393 = vadd.f32 %v1099, %v1327
        %v1394 = vadd.f32 %v1100, %v1330
        %v1395 = vadd.f32 %v1101, %v1335
        %v1396 = vadd.f32 %v1102, %v1338
        %v1397 = vadd.f32 %v1103, %v1343
        %v1398 = vadd.f32 %v1104, %v1346
        %v1399 = vadd.f32 %v1105, %v1351
        %v1400 = vadd.f32 %v1106, %v1354
        %v1401 = vadd.f32 %v1107, %v1359
        %v1402 = vadd.f32 %v1108, %v1362
        %v1403 = vadd.f32 %v1109, %v1367
        %v1404 = vadd.f32 %v1110, %v1370
        %1405 = vst [vmem:[#allocation2] sm:$0xff] %v1373
        %1406 = vst [vmem:[#allocation2 + $0x8] sm:$0xff] %v1374
        %1407 = vst [vmem:[#allocation2 + $0x10] sm:$0xff] %v1375
        %1408 = vst [vmem:[#allocation2 + $0x18] sm:$0xff] %v1376
        %1409 = vst [vmem:[#allocation2 + $0x20] sm:$0xff] %v1377
        %1410 = vst [vmem:[#allocation2 + $0x28] sm:$0xff] %v1378
        %1411 = vst [vmem:[#allocation2 + $0x30] sm:$0xff] %v1379
        %1412 = vst [vmem:[#allocation2 + $0x38] sm:$0xff] %v1380
        %1413 = vst [vmem:[#allocation2 + $0x40] sm:$0xff] %v1381
        %1414 = vst [vmem:[#allocation2 + $0x48] sm:$0xff] %v1382
        %1415 = vst [vmem:[#allocation2 + $0x50] sm:$0xff] %v1383
        %1416 = vst [vmem:[#allocation2 + $0x58] sm:$0xff] %v1384
        %1417 = vst [vmem:[#allocation2 + $0x60] sm:$0xff] %v1385
        %1418 = vst [vmem:[#allocation2 + $0x68] sm:$0xff] %v1386
        %1419 = vst [vmem:[#allocation2 + $0x70] sm:$0xff] %v1387
        %1420 = vst [vmem:[#allocation2 + $0x78] sm:$0xff] %v1388
        %1421 = vst [vmem:[#allocation2 + $0x80] sm:$0xff] %v1389
        %1422 = vst [vmem:[#allocation2 + $0x88] sm:$0xff] %v1390
        %1423 = vst [vmem:[#allocation2 + $0x90] sm:$0xff] %v1391
        %1424 = vst [vmem:[#allocation2 + $0x98] sm:$0xff] %v1392
        %1425 = vst [vmem:[#allocation2 + $0xa0] sm:$0xff] %v1393
        %1426 = vst [vmem:[#allocation2 + $0xa8] sm:$0xff] %v1394
        %1427 = vst [vmem:[#allocation2 + $0xb0] sm:$0xff] %v1395
        %1428 = vst [vmem:[#allocation2 + $0xb8] sm:$0xff] %v1396
        %1429 = vst [vmem:[#allocation2 + $0xc0] sm:$0xff] %v1397
        %1430 = vst [vmem:[#allocation2 + $0xc8] sm:$0xff] %v1398
        %1431 = vst [vmem:[#allocation2 + $0xd0] sm:$0xff] %v1399
        %1432 = vst [vmem:[#allocation2 + $0xd8] sm:$0xff] %v1400
        %1433 = vst [vmem:[#allocation2 + $0xe0] sm:$0xff] %v1401
        %1434 = vst [vmem:[#allocation2 + $0xe8] sm:$0xff] %v1402
        %1435 = vst [vmem:[#allocation2 + $0xf0] sm:$0xff] %v1403
        %1436 = vst [vmem:[#allocation2 + $0xf8] sm:$0xff] %v1404
        %v1437 = vld [vmem:[%s220] sm:$0xe]
        %v1438 = vld [vmem:[%s220 + $0x4] sm:$0xf]
        %v1439 = vld [vmem:[%s220 + $0x8] sm:$0x1]
        %v1440 = vld [vmem:[%s220 + $0xc] sm:$0xe]
        %v1441 = vld [vmem:[%s220 + $0x10] sm:$0xf]
        %v1442 = vld [vmem:[%s220 + $0x14] sm:$0x1]
        %v1443 = vld [vmem:[%s220 + $0x18] sm:$0xe]
        %v1444 = vld [vmem:[%s220 + $0x1c] sm:$0xf]
        %v1445 = vld [vmem:[%s220 + $0x20] sm:$0x1]
        %v1446 = vld [vmem:[%s220 + $0x24] sm:$0xe]
        %v1447 = vld [vmem:[%s220 + $0x28] sm:$0xf]
        %v1448 = vld [vmem:[%s220 + $0x2c] sm:$0x1]
        %v1449 = vld [vmem:[%s220 + $0x30] sm:$0xe]
        %v1450 = vld [vmem:[%s220 + $0x34] sm:$0xf]
        %v1451 = vld [vmem:[%s220 + $0x38] sm:$0x1]
        %v1452 = vld [vmem:[%s220 + $0x3c] sm:$0xe]
        %v1453 = vld [vmem:[%s220 + $0x40] sm:$0xf]
        %v1454 = vld [vmem:[%s220 + $0x44] sm:$0x1]
        %v1455 = vld [vmem:[%s220 + $0x48] sm:$0xe]
        %v1456 = vld [vmem:[%s220 + $0x4c] sm:$0xf]
        %v1457 = vld [vmem:[%s220 + $0x50] sm:$0x1]
        %v1458 = vld [vmem:[%s220 + $0x54] sm:$0xe]
        %v1459 = vld [vmem:[%s220 + $0x58] sm:$0xf]
        %v1460 = vld [vmem:[%s220 + $0x5c] sm:$0x1]
        %v1461 = vld [vmem:[%s220 + $0x60] sm:$0xe]
        %v1462 = vld [vmem:[%s220 + $0x64] sm:$0xf]
        %v1463 = vld [vmem:[%s220 + $0x68] sm:$0x1]
        %v1464 = vld [vmem:[%s220 + $0x6c] sm:$0xe]
        %v1465 = vld [vmem:[%s220 + $0x70] sm:$0xf]
        %v1466 = vld [vmem:[%s220 + $0x74] sm:$0x1]
        %v1467 = vld [vmem:[%s220 + $0x78] sm:$0xe]
        %v1468 = vld [vmem:[%s220 + $0x7c] sm:$0xf]
        %v1469 = vld [vmem:[%s220 + $0x80] sm:$0x1]
        %v1470 = vld [vmem:[%s220 + $0x84] sm:$0xe]
        %v1471 = vld [vmem:[%s220 + $0x88] sm:$0xf]
        %v1472 = vld [vmem:[%s220 + $0x8c] sm:$0x1]
        %v1473 = vld [vmem:[%s220 + $0x90] sm:$0xe]
        %v1474 = vld [vmem:[%s220 + $0x94] sm:$0xf]
        %v1475 = vld [vmem:[%s220 + $0x98] sm:$0x1]
        %v1476 = vld [vmem:[%s220 + $0x9c] sm:$0xe]
        %v1477 = vld [vmem:[%s220 + $0xa0] sm:$0xf]
        %v1478 = vld [vmem:[%s220 + $0xa4] sm:$0x1]
        %v1479 = vld [vmem:[%s220 + $0xa8] sm:$0xe]
        %v1480 = vld [vmem:[%s220 + $0xac] sm:$0xf]
        %v1481 = vld [vmem:[%s220 + $0xb0] sm:$0x1]
        %v1482 = vld [vmem:[%s220 + $0xb4] sm:$0xe]
        %v1483 = vld [vmem:[%s220 + $0xb8] sm:$0xf]
        %v1484 = vld [vmem:[%s220 + $0xbc] sm:$0x1]
        %vm1533 = vcmask 1042432
        %vm1534 = vcmask 1046532
        %vm1535 = vmor %vm1533, %vm1534
        %v1536 = vrot.slane %v1437, 5
        %v1537 = vrot.slane %v1536, 4
        %v1538 = vrot.slane %v1438, 5
        %v1539 = vsel %vm1535, %v1537, %v1538
        %v1540 = vrot.slane %v1538, 4
        %v1541 = vrot.slane %v1439, 5
        %v1542 = vsel %vm1535, %v1540, %v1541
        %v1543 = vrot.slane %v1440, 5
        %v1544 = vrot.slane %v1543, 4
        %v1545 = vrot.slane %v1441, 5
        %v1546 = vsel %vm1535, %v1544, %v1545
        %v1547 = vrot.slane %v1545, 4
        %v1548 = vrot.slane %v1442, 5
        %v1549 = vsel %vm1535, %v1547, %v1548
        %v1550 = vrot.slane %v1443, 5
        %v1551 = vrot.slane %v1550, 4
        %v1552 = vrot.slane %v1444, 5
        %v1553 = vsel %vm1535, %v1551, %v1552
        %v1554 = vrot.slane %v1552, 4
        %v1555 = vrot.slane %v1445, 5
        %v1556 = vsel %vm1535, %v1554, %v1555
        %v1557 = vrot.slane %v1446, 5
        %v1558 = vrot.slane %v1557, 4
        %v1559 = vrot.slane %v1447, 5
        %v1560 = vsel %vm1535, %v1558, %v1559
        %v1561 = vrot.slane %v1559, 4
        %v1562 = vrot.slane %v1448, 5
        %v1563 = vsel %vm1535, %v1561, %v1562
        %v1564 = vrot.slane %v1449, 5
        %v1565 = vrot.slane %v1564, 4
        %v1566 = vrot.slane %v1450, 5
        %v1567 = vsel %vm1535, %v1565, %v1566
        %v1568 = vrot.slane %v1566, 4
        %v1569 = vrot.slane %v1451, 5
        %v1570 = vsel %vm1535, %v1568, %v1569
        %v1571 = vrot.slane %v1452, 5
        %v1572 = vrot.slane %v1571, 4
        %v1573 = vrot.slane %v1453, 5
        %v1574 = vsel %vm1535, %v1572, %v1573
        %v1575 = vrot.slane %v1573, 4
        %v1576 = vrot.slane %v1454, 5
        %v1577 = vsel %vm1535, %v1575, %v1576
        %v1578 = vrot.slane %v1455, 5
        %v1579 = vrot.slane %v1578, 4
        %v1580 = vrot.slane %v1456, 5
        %v1581 = vsel %vm1535, %v1579, %v1580
        %v1582 = vrot.slane %v1580, 4
        %v1583 = vrot.slane %v1457, 5
        %v1584 = vsel %vm1535, %v1582, %v1583
        %v1585 = vrot.slane %v1458, 5
        %v1586 = vrot.slane %v1585, 4
        %v1587 = vrot.slane %v1459, 5
        %v1588 = vsel %vm1535, %v1586, %v1587
        %v1589 = vrot.slane %v1587, 4
        %v1590 = vrot.slane %v1460, 5
        %v1591 = vsel %vm1535, %v1589, %v1590
        %v1592 = vrot.slane %v1461, 5
        %v1593 = vrot.slane %v1592, 4
        %v1594 = vrot.slane %v1462, 5
        %v1595 = vsel %vm1535, %v1593, %v1594
        %v1596 = vrot.slane %v1594, 4
        %v1597 = vrot.slane %v1463, 5
        %v1598 = vsel %vm1535, %v1596, %v1597
        %v1599 = vrot.slane %v1464, 5
        %v1600 = vrot.slane %v1599, 4
        %v1601 = vrot.slane %v1465, 5
        %v1602 = vsel %vm1535, %v1600, %v1601
        %v1603 = vrot.slane %v1601, 4
        %v1604 = vrot.slane %v1466, 5
        %v1605 = vsel %vm1535, %v1603, %v1604
        %v1606 = vrot.slane %v1467, 5
        %v1607 = vrot.slane %v1606, 4
        %v1608 = vrot.slane %v1468, 5
        %v1609 = vsel %vm1535, %v1607, %v1608
        %v1610 = vrot.slane %v1608, 4
        %v1611 = vrot.slane %v1469, 5
        %v1612 = vsel %vm1535, %v1610, %v1611
        %v1613 = vrot.slane %v1470, 5
        %v1614 = vrot.slane %v1613, 4
        %v1615 = vrot.slane %v1471, 5
        %v1616 = vsel %vm1535, %v1614, %v1615
        %v1617 = vrot.slane %v1615, 4
        %v1618 = vrot.slane %v1472, 5
        %v1619 = vsel %vm1535, %v1617, %v1618
        %v1620 = vrot.slane %v1473, 5
        %v1621 = vrot.slane %v1620, 4
        %v1622 = vrot.slane %v1474, 5
        %v1623 = vsel %vm1535, %v1621, %v1622
        %v1624 = vrot.slane %v1622, 4
        %v1625 = vrot.slane %v1475, 5
        %v1626 = vsel %vm1535, %v1624, %v1625
        %v1627 = vrot.slane %v1476, 5
        %v1628 = vrot.slane %v1627, 4
        %v1629 = vrot.slane %v1477, 5
        %v1630 = vsel %vm1535, %v1628, %v1629
        %v1631 = vrot.slane %v1629, 4
        %v1632 = vrot.slane %v1478, 5
        %v1633 = vsel %vm1535, %v1631, %v1632
        %v1634 = vrot.slane %v1479, 5
        %v1635 = vrot.slane %v1634, 4
        %v1636 = vrot.slane %v1480, 5
        %v1637 = vsel %vm1535, %v1635, %v1636
        %v1638 = vrot.slane %v1636, 4
        %v1639 = vrot.slane %v1481, 5
        %v1640 = vsel %vm1535, %v1638, %v1639
        %v1641 = vrot.slane %v1482, 5
        %v1642 = vrot.slane %v1641, 4
        %v1643 = vrot.slane %v1483, 5
        %v1644 = vsel %vm1535, %v1642, %v1643
        %v1645 = vrot.slane %v1643, 4
        %v1646 = vrot.slane %v1484, 5
        %v1647 = vsel %vm1535, %v1645, %v1646
        %v1648 = vld [vmem:[#allocation2] sm:$0xff]
        %v1649 = vld [vmem:[#allocation2 + $0x8] sm:$0xff]
        %v1650 = vld [vmem:[#allocation2 + $0x10] sm:$0xff]
        %v1651 = vld [vmem:[#allocation2 + $0x18] sm:$0xff]
        %v1652 = vld [vmem:[#allocation2 + $0x20] sm:$0xff]
        %v1653 = vld [vmem:[#allocation2 + $0x28] sm:$0xff]
        %v1654 = vld [vmem:[#allocation2 + $0x30] sm:$0xff]
        %v1655 = vld [vmem:[#allocation2 + $0x38] sm:$0xff]
        %v1656 = vld [vmem:[#allocation2 + $0x40] sm:$0xff]
        %v1657 = vld [vmem:[#allocation2 + $0x48] sm:$0xff]
        %v1658 = vld [vmem:[#allocation2 + $0x50] sm:$0xff]
        %v1659 = vld [vmem:[#allocation2 + $0x58] sm:$0xff]
        %v1660 = vld [vmem:[#allocation2 + $0x60] sm:$0xff]
        %v1661 = vld [vmem:[#allocation2 + $0x68] sm:$0xff]
        %v1662 = vld [vmem:[#allocation2 + $0x70] sm:$0xff]
        %v1663 = vld [vmem:[#allocation2 + $0x78] sm:$0xff]
        %v1664 = vld [vmem:[#allocation2 + $0x80] sm:$0xff]
        %v1665 = vld [vmem:[#allocation2 + $0x88] sm:$0xff]
        %v1666 = vld [vmem:[#allocation2 + $0x90] sm:$0xff]
        %v1667 = vld [vmem:[#allocation2 + $0x98] sm:$0xff]
        %v1668 = vld [vmem:[#allocation2 + $0xa0] sm:$0xff]
        %v1669 = vld [vmem:[#allocation2 + $0xa8] sm:$0xff]
        %v1670 = vld [vmem:[#allocation2 + $0xb0] sm:$0xff]
        %v1671 = vld [vmem:[#allocation2 + $0xb8] sm:$0xff]
        %v1672 = vld [vmem:[#allocation2 + $0xc0] sm:$0xff]
        %v1673 = vld [vmem:[#allocation2 + $0xc8] sm:$0xff]
        %v1674 = vld [vmem:[#allocation2 + $0xd0] sm:$0xff]
        %v1675 = vld [vmem:[#allocation2 + $0xd8] sm:$0xff]
        %v1676 = vld [vmem:[#allocation2 + $0xe0] sm:$0xff]
        %v1677 = vld [vmem:[#allocation2 + $0xe8] sm:$0xff]
        %v1678 = vld [vmem:[#allocation2 + $0xf0] sm:$0xff]
        %v1679 = vld [vmem:[#allocation2 + $0xf8] sm:$0xff]
        %s1680 = scalar_lea.vmem %s1, 4
        %v1681 = vld [vmem:[%s1680] sm:$0x3]
        %v1682 = vunpack.c.l.b16 %v1539
        %v1683 = vunpack.c.l.b16 %v1542
        %v1684 = vunpack.c.l.b16 %v1546
        %v1685 = vunpack.c.l.b16 %v1549
        %v1686 = vunpack.c.l.b16 %v1553
        %v1687 = vunpack.c.l.b16 %v1556
        %v1688 = vunpack.c.l.b16 %v1560
        %v1689 = vunpack.c.l.b16 %v1563
        %v1690 = vunpack.c.l.b16 %v1567
        %v1691 = vunpack.c.l.b16 %v1570
        %v1692 = vunpack.c.l.b16 %v1574
        %v1693 = vunpack.c.l.b16 %v1577
        %v1694 = vunpack.c.l.b16 %v1581
        %v1695 = vunpack.c.l.b16 %v1584
        %v1696 = vunpack.c.l.b16 %v1588
        %v1697 = vunpack.c.l.b16 %v1591
        %v1698 = vunpack.c.l.b16 %v1595
        %v1699 = vunpack.c.l.b16 %v1598
        %v1700 = vunpack.c.l.b16 %v1602
        %v1701 = vunpack.c.l.b16 %v1605
        %v1702 = vunpack.c.l.b16 %v1609
        %v1703 = vunpack.c.l.b16 %v1612
        %v1704 = vunpack.c.l.b16 %v1616
        %v1705 = vunpack.c.l.b16 %v1619
        %v1706 = vunpack.c.l.b16 %v1623
        %v1707 = vunpack.c.l.b16 %v1626
        %v1708 = vunpack.c.l.b16 %v1630
        %v1709 = vunpack.c.l.b16 %v1633
        %v1710 = vunpack.c.l.b16 %v1637
        %v1711 = vunpack.c.l.b16 %v1640
        %v1712 = vunpack.c.l.b16 %v1644
        %v1713 = vunpack.c.l.b16 %v1647
        %v1714 = vpack.c.b16 %v1683, %v1682
        %v1715 = vpack.c.b16 %v1685, %v1684
        %v1716 = vpack.c.b16 %v1687, %v1686
        %v1717 = vpack.c.b16 %v1689, %v1688
        %v1718 = vpack.c.b16 %v1691, %v1690
        %v1719 = vpack.c.b16 %v1693, %v1692
        %v1720 = vpack.c.b16 %v1695, %v1694
        %v1721 = vpack.c.b16 %v1697, %v1696
        %v1722 = vpack.c.b16 %v1699, %v1698
        %v1723 = vpack.c.b16 %v1701, %v1700
        %v1724 = vpack.c.b16 %v1703, %v1702
        %v1725 = vpack.c.b16 %v1705, %v1704
        %v1726 = vpack.c.b16 %v1707, %v1706
        %v1727 = vpack.c.b16 %v1709, %v1708
        %v1728 = vpack.c.b16 %v1711, %v1710
        %v1729 = vpack.c.b16 %v1713, %v1712
        %v1731 = vsel %vm366, %v1714, 0
        %v1734 = vsel %vm366, %v1715, 0
        %v1737 = vsel %vm366, %v1716, 0
        %v1740 = vsel %vm366, %v1717, 0
        %v1743 = vsel %vm366, %v1718, 0
        %v1746 = vsel %vm366, %v1719, 0
        %v1749 = vsel %vm366, %v1720, 0
        %v1752 = vsel %vm366, %v1721, 0
        %v1755 = vsel %vm366, %v1722, 0
        %v1758 = vsel %vm366, %v1723, 0
        %v1761 = vsel %vm366, %v1724, 0
        %v1764 = vsel %vm366, %v1725, 0
        %v1767 = vsel %vm366, %v1726, 0
        %v1770 = vsel %vm366, %v1727, 0
        %v1773 = vsel %vm366, %v1728, 0
        %v1776 = vsel %vm366, %v1729, 0
        %v1779 = vsel %vm415, %v1681, 0
        %1781 = vmatprep.subr.bf16.mxu0 0
        %1782 = vmatpush1.bf16.msra.mxu0 %v1779
        %1783 = vmatprep.subr.bf16.mxu0 0
        %1784 = vmatpush1.bf16.msra.mxu0 0
        %1785 = vmatprep.subr.bf16.mxu0 0
        %1786 = vmatpush1.bf16.msra.mxu0 0
        %1787 = vmatprep.subr.bf16.mxu0 0
        %1788 = vmatpush1.bf16.msra.mxu0 0
        %1789 = vmatprep.subr.bf16.mxu0 0
        %1790 = vmatpush1.bf16.msra.mxu0 0
        %1791 = vmatprep.subr.bf16.mxu0 0
        %1792 = vmatpush1.bf16.msra.mxu0 0
        %1793 = vmatprep.subr.bf16.mxu0 0
        %1794 = vmatpush1.bf16.msra.mxu0 0
        %1795 = vmatprep.subr.bf16.mxu0 0
        %1796 = vmatpush1.bf16.msra.mxu0 0
        %1797 = vmatprep.subr.bf16.mxu0 0
        %1798 = vmatpush1.bf16.msra.mxu0 0
        %1799 = vmatprep.subr.bf16.mxu0 0
        %1800 = vmatpush1.bf16.msra.mxu0 0
        %1801 = vmatprep.subr.bf16.mxu0 0
        %1802 = vmatpush1.bf16.msra.mxu0 0
        %1803 = vmatprep.subr.bf16.mxu0 0
        %1804 = vmatpush1.bf16.msra.mxu0 0
        %1805 = vmatprep.subr.bf16.mxu0 0
        %1806 = vmatpush1.bf16.msra.mxu0 0
        %1807 = vmatprep.subr.bf16.mxu0 0
        %1808 = vmatpush1.bf16.msra.mxu0 0
        %1809 = vmatprep.subr.bf16.mxu0 0
        %1810 = vmatpush1.bf16.msra.mxu0 0
        %1811 = vmatprep.subr.bf16.mxu0 0
        %1812 = vmatpush1.bf16.msra.mxu0 0
        %1813 = vmatprep.mubr.bf16.mxu0 0
        %1814 = vmatmul.mubr.bf16.gmra.mrb[0].mxu0 %v1731
        %v1815 = vpop.f32.mrb[0].mxu0
        %v1816 = vadd.f32 0.0, %v1815
        %v1817 = vpop.f32.mrb[0].mxu0
        %v1818 = vpop.f32.mrb[0].mxu0
        %v1819 = vadd.f32 0.0, %v1818
        %v1820 = vpop.f32.mrb[0].mxu0
        %1821 = vmatprep.mubr.bf16.mxu0 0
        %1822 = vmatmul.mubr.bf16.gmra.mrb[0].mxu0 %v1734
        %v1823 = vpop.f32.mrb[0].mxu0
        %v1824 = vadd.f32 0.0, %v1823
        %v1825 = vpop.f32.mrb[0].mxu0
        %v1826 = vpop.f32.mrb[0].mxu0
        %v1827 = vadd.f32 0.0, %v1826
        %v1828 = vpop.f32.mrb[0].mxu0
        %1829 = vmatprep.mubr.bf16.mxu0 0
        %1830 = vmatmul.mubr.bf16.gmra.mrb[0].mxu0 %v1737
        %v1831 = vpop.f32.mrb[0].mxu0
        %v1832 = vadd.f32 0.0, %v1831
        %v1833 = vpop.f32.mrb[0].mxu0
        %v1834 = vpop.f32.mrb[0].mxu0
        %v1835 = vadd.f32 0.0, %v1834
        %v1836 = vpop.f32.mrb[0].mxu0
        %1837 = vmatprep.mubr.bf16.mxu0 0
        %1838 = vmatmul.mubr.bf16.gmra.mrb[0].mxu0 %v1740
        %v1839 = vpop.f32.mrb[0].mxu0
        %v1840 = vadd.f32 0.0, %v1839
        %v1841 = vpop.f32.mrb[0].mxu0
        %v1842 = vpop.f32.mrb[0].mxu0
        %v1843 = vadd.f32 0.0, %v1842
        %v1844 = vpop.f32.mrb[0].mxu0
        %1845 = vmatprep.mubr.bf16.mxu0 0
        %1846 = vmatmul.mubr.bf16.gmra.mrb[0].mxu0 %v1743
        %v1847 = vpop.f32.mrb[0].mxu0
        %v1848 = vadd.f32 0.0, %v1847
        %v1849 = vpop.f32.mrb[0].mxu0
        %v1850 = vpop.f32.mrb[0].mxu0
        %v1851 = vadd.f32 0.0, %v1850
        %v1852 = vpop.f32.mrb[0].mxu0
        %1853 = vmatprep.mubr.bf16.mxu0 0
        %1854 = vmatmul.mubr.bf16.gmra.mrb[0].mxu0 %v1746
        %v1855 = vpop.f32.mrb[0].mxu0
        %v1856 = vadd.f32 0.0, %v1855
        %v1857 = vpop.f32.mrb[0].mxu0
        %v1858 = vpop.f32.mrb[0].mxu0
        %v1859 = vadd.f32 0.0, %v1858
        %v1860 = vpop.f32.mrb[0].mxu0
        %1861 = vmatprep.mubr.bf16.mxu0 0
        %1862 = vmatmul.mubr.bf16.gmra.mrb[0].mxu0 %v1749
        %v1863 = vpop.f32.mrb[0].mxu0
        %v1864 = vadd.f32 0.0, %v1863
        %v1865 = vpop.f32.mrb[0].mxu0
        %v1866 = vpop.f32.mrb[0].mxu0
        %v1867 = vadd.f32 0.0, %v1866
        %v1868 = vpop.f32.mrb[0].mxu0
        %1869 = vmatprep.mubr.bf16.mxu0 0
        %1870 = vmatmul.mubr.bf16.gmra.mrb[0].mxu0 %v1752
        %v1871 = vpop.f32.mrb[0].mxu0
        %v1872 = vadd.f32 0.0, %v1871
        %v1873 = vpop.f32.mrb[0].mxu0
        %v1874 = vpop.f32.mrb[0].mxu0
        %v1875 = vadd.f32 0.0, %v1874
        %v1876 = vpop.f32.mrb[0].mxu0
        %1877 = vmatprep.mubr.bf16.mxu0 0
        %1878 = vmatmul.mubr.bf16.gmra.mrb[0].mxu0 %v1755
        %v1879 = vpop.f32.mrb[0].mxu0
        %v1880 = vadd.f32 0.0, %v1879
        %v1881 = vpop.f32.mrb[0].mxu0
        %v1882 = vpop.f32.mrb[0].mxu0
        %v1883 = vadd.f32 0.0, %v1882
        %v1884 = vpop.f32.mrb[0].mxu0
        %1885 = vmatprep.mubr.bf16.mxu0 0
        %1886 = vmatmul.mubr.bf16.gmra.mrb[0].mxu0 %v1758
        %v1887 = vpop.f32.mrb[0].mxu0
        %v1888 = vadd.f32 0.0, %v1887
        %v1889 = vpop.f32.mrb[0].mxu0
        %v1890 = vpop.f32.mrb[0].mxu0
        %v1891 = vadd.f32 0.0, %v1890
        %v1892 = vpop.f32.mrb[0].mxu0
        %1893 = vmatprep.mubr.bf16.mxu0 0
        %1894 = vmatmul.mubr.bf16.gmra.mrb[0].mxu0 %v1761
        %v1895 = vpop.f32.mrb[0].mxu0
        %v1896 = vadd.f32 0.0, %v1895
        %v1897 = vpop.f32.mrb[0].mxu0
        %v1898 = vpop.f32.mrb[0].mxu0
        %v1899 = vadd.f32 0.0, %v1898
        %v1900 = vpop.f32.mrb[0].mxu0
        %1901 = vmatprep.mubr.bf16.mxu0 0
        %1902 = vmatmul.mubr.bf16.gmra.mrb[0].mxu0 %v1764
        %v1903 = vpop.f32.mrb[0].mxu0
        %v1904 = vadd.f32 0.0, %v1903
        %v1905 = vpop.f32.mrb[0].mxu0
        %v1906 = vpop.f32.mrb[0].mxu0
        %v1907 = vadd.f32 0.0, %v1906
        %v1908 = vpop.f32.mrb[0].mxu0
        %1909 = vmatprep.mubr.bf16.mxu0 0
        %1910 = vmatmul.mubr.bf16.gmra.mrb[0].mxu0 %v1767
        %v1911 = vpop.f32.mrb[0].mxu0
        %v1912 = vadd.f32 0.0, %v1911
        %v1913 = vpop.f32.mrb[0].mxu0
        %v1914 = vpop.f32.mrb[0].mxu0
        %v1915 = vadd.f32 0.0, %v1914
        %v1916 = vpop.f32.mrb[0].mxu0
        %1917 = vmatprep.mubr.bf16.mxu0 0
        %1918 = vmatmul.mubr.bf16.gmra.mrb[0].mxu0 %v1770
        %v1919 = vpop.f32.mrb[0].mxu0
        %v1920 = vadd.f32 0.0, %v1919
        %v1921 = vpop.f32.mrb[0].mxu0
        %v1922 = vpop.f32.mrb[0].mxu0
        %v1923 = vadd.f32 0.0, %v1922
        %v1924 = vpop.f32.mrb[0].mxu0
        %1925 = vmatprep.mubr.bf16.mxu0 0
        %1926 = vmatmul.mubr.bf16.gmra.mrb[0].mxu0 %v1773
        %v1927 = vpop.f32.mrb[0].mxu0
        %v1928 = vadd.f32 0.0, %v1927
        %v1929 = vpop.f32.mrb[0].mxu0
        %v1930 = vpop.f32.mrb[0].mxu0
        %v1931 = vadd.f32 0.0, %v1930
        %v1932 = vpop.f32.mrb[0].mxu0
        %1933 = vmatprep.mubr.bf16.mxu0 0
        %1934 = vmatmul.mubr.bf16.gmra.mrb[0].mxu0 %v1776
        %v1935 = vpop.f32.mrb[0].mxu0
        %v1936 = vadd.f32 0.0, %v1935
        %v1937 = vpop.f32.mrb[0].mxu0
        %v1938 = vpop.f32.mrb[0].mxu0
        %v1939 = vadd.f32 0.0, %v1938
        %v1940 = vpop.f32.mrb[0].mxu0
        %1941 = vdwg.mxu0
        %v1942 = vadd.f32 %v1648, %v1816
        %v1943 = vadd.f32 %v1649, %v1819
        %v1944 = vadd.f32 %v1650, %v1824
        %v1945 = vadd.f32 %v1651, %v1827
        %v1946 = vadd.f32 %v1652, %v1832
        %v1947 = vadd.f32 %v1653, %v1835
        %v1948 = vadd.f32 %v1654, %v1840
        %v1949 = vadd.f32 %v1655, %v1843
        %v1950 = vadd.f32 %v1656, %v1848
        %v1951 = vadd.f32 %v1657, %v1851
        %v1952 = vadd.f32 %v1658, %v1856
        %v1953 = vadd.f32 %v1659, %v1859
        %v1954 = vadd.f32 %v1660, %v1864
        %v1955 = vadd.f32 %v1661, %v1867
        %v1956 = vadd.f32 %v1662, %v1872
        %v1957 = vadd.f32 %v1663, %v1875
        %v1958 = vadd.f32 %v1664, %v1880
        %v1959 = vadd.f32 %v1665, %v1883
        %v1960 = vadd.f32 %v1666, %v1888
        %v1961 = vadd.f32 %v1667, %v1891
        %v1962 = vadd.f32 %v1668, %v1896
        %v1963 = vadd.f32 %v1669, %v1899
        %v1964 = vadd.f32 %v1670, %v1904
        %v1965 = vadd.f32 %v1671, %v1907
        %v1966 = vadd.f32 %v1672, %v1912
        %v1967 = vadd.f32 %v1673, %v1915
        %v1968 = vadd.f32 %v1674, %v1920
        %v1969 = vadd.f32 %v1675, %v1923
        %v1970 = vadd.f32 %v1676, %v1928
        %v1971 = vadd.f32 %v1677, %v1931
        %v1972 = vadd.f32 %v1678, %v1936
        %v1973 = vadd.f32 %v1679, %v1939
        %1974 = vst [vmem:[#allocation2] sm:$0xff] %v1942
        %1975 = vst [vmem:[#allocation2 + $0x8] sm:$0xff] %v1943
        %1976 = vst [vmem:[#allocation2 + $0x10] sm:$0xff] %v1944
        %1977 = vst [vmem:[#allocation2 + $0x18] sm:$0xff] %v1945
        %1978 = vst [vmem:[#allocation2 + $0x20] sm:$0xff] %v1946
        %1979 = vst [vmem:[#allocation2 + $0x28] sm:$0xff] %v1947
        %1980 = vst [vmem:[#allocation2 + $0x30] sm:$0xff] %v1948
        %1981 = vst [vmem:[#allocation2 + $0x38] sm:$0xff] %v1949
        %1982 = vst [vmem:[#allocation2 + $0x40] sm:$0xff] %v1950
        %1983 = vst [vmem:[#allocation2 + $0x48] sm:$0xff] %v1951
        %1984 = vst [vmem:[#allocation2 + $0x50] sm:$0xff] %v1952
        %1985 = vst [vmem:[#allocation2 + $0x58] sm:$0xff] %v1953
        %1986 = vst [vmem:[#allocation2 + $0x60] sm:$0xff] %v1954
        %1987 = vst [vmem:[#allocation2 + $0x68] sm:$0xff] %v1955
        %1988 = vst [vmem:[#allocation2 + $0x70] sm:$0xff] %v1956
        %1989 = vst [vmem:[#allocation2 + $0x78] sm:$0xff] %v1957
        %1990 = vst [vmem:[#allocation2 + $0x80] sm:$0xff] %v1958
        %1991 = vst [vmem:[#allocation2 + $0x88] sm:$0xff] %v1959
        %1992 = vst [vmem:[#allocation2 + $0x90] sm:$0xff] %v1960
        %1993 = vst [vmem:[#allocation2 + $0x98] sm:$0xff] %v1961
        %1994 = vst [vmem:[#allocation2 + $0xa0] sm:$0xff] %v1962
        %1995 = vst [vmem:[#allocation2 + $0xa8] sm:$0xff] %v1963
        %1996 = vst [vmem:[#allocation2 + $0xb0] sm:$0xff] %v1964
        %1997 = vst [vmem:[#allocation2 + $0xb8] sm:$0xff] %v1965
        %1998 = vst [vmem:[#allocation2 + $0xc0] sm:$0xff] %v1966
        %1999 = vst [vmem:[#allocation2 + $0xc8] sm:$0xff] %v1967
        %2000 = vst [vmem:[#allocation2 + $0xd0] sm:$0xff] %v1968
        %2001 = vst [vmem:[#allocation2 + $0xd8] sm:$0xff] %v1969
        %2002 = vst [vmem:[#allocation2 + $0xe0] sm:$0xff] %v1970
        %2003 = vst [vmem:[#allocation2 + $0xe8] sm:$0xff] %v1971
        %2004 = vst [vmem:[#allocation2 + $0xf0] sm:$0xff] %v1972
        %2005 = vst [vmem:[#allocation2 + $0xf8] sm:$0xff] %v1973
        %s2006 = sadd.s32 %s217, 1
        %s2007 = smul.u32 %s2006, 3
        %s2008 = smul.addr %s2007, 4
        %s2009 = scalar_lea.vmem %s182, %s2008
        %v2010 = vld [vmem:[%s2009] sm:$0xf]
        %v2011 = vld [vmem:[%s2009 + $0x4] sm:$0xf]
        %v2012 = vld [vmem:[%s2009 + $0xc] sm:$0xf]
        %v2013 = vld [vmem:[%s2009 + $0x10] sm:$0xf]
        %v2014 = vld [vmem:[%s2009 + $0x18] sm:$0xf]
        %v2015 = vld [vmem:[%s2009 + $0x1c] sm:$0xf]
        %v2016 = vld [vmem:[%s2009 + $0x24] sm:$0xf]
        %v2017 = vld [vmem:[%s2009 + $0x28] sm:$0xf]
        %v2018 = vld [vmem:[%s2009 + $0x30] sm:$0xf]
        %v2019 = vld [vmem:[%s2009 + $0x34] sm:$0xf]
        %v2020 = vld [vmem:[%s2009 + $0x3c] sm:$0xf]
        %v2021 = vld [vmem:[%s2009 + $0x40] sm:$0xf]
        %v2022 = vld [vmem:[%s2009 + $0x48] sm:$0xf]
        %v2023 = vld [vmem:[%s2009 + $0x4c] sm:$0xf]
        %v2024 = vld [vmem:[%s2009 + $0x54] sm:$0xf]
        %v2025 = vld [vmem:[%s2009 + $0x58] sm:$0xf]
        %v2026 = vld [vmem:[%s2009 + $0x60] sm:$0xf]
        %v2027 = vld [vmem:[%s2009 + $0x64] sm:$0xf]
        %v2028 = vld [vmem:[%s2009 + $0x6c] sm:$0xf]
        %v2029 = vld [vmem:[%s2009 + $0x70] sm:$0xf]
        %v2030 = vld [vmem:[%s2009 + $0x78] sm:$0xf]
        %v2031 = vld [vmem:[%s2009 + $0x7c] sm:$0xf]
        %v2032 = vld [vmem:[%s2009 + $0x84] sm:$0xf]
        %v2033 = vld [vmem:[%s2009 + $0x88] sm:$0xf]
        %v2034 = vld [vmem:[%s2009 + $0x90] sm:$0xf]
        %v2035 = vld [vmem:[%s2009 + $0x94] sm:$0xf]
        %v2036 = vld [vmem:[%s2009 + $0x9c] sm:$0xf]
        %v2037 = vld [vmem:[%s2009 + $0xa0] sm:$0xf]
        %v2038 = vld [vmem:[%s2009 + $0xa8] sm:$0xf]
        %v2039 = vld [vmem:[%s2009 + $0xac] sm:$0xf]
        %v2040 = vld [vmem:[%s2009 + $0xb4] sm:$0xf]
        %v2041 = vld [vmem:[%s2009 + $0xb8] sm:$0xf]
        %v2042 = vld [vmem:[#allocation2] sm:$0xff]
        %v2043 = vld [vmem:[#allocation2 + $0x8] sm:$0xff]
        %v2044 = vld [vmem:[#allocation2 + $0x10] sm:$0xff]
        %v2045 = vld [vmem:[#allocation2 + $0x18] sm:$0xff]
        %v2046 = vld [vmem:[#allocation2 + $0x20] sm:$0xff]
        %v2047 = vld [vmem:[#allocation2 + $0x28] sm:$0xff]
        %v2048 = vld [vmem:[#allocation2 + $0x30] sm:$0xff]
        %v2049 = vld [vmem:[#allocation2 + $0x38] sm:$0xff]
        %v2050 = vld [vmem:[#allocation2 + $0x40] sm:$0xff]
        %v2051 = vld [vmem:[#allocation2 + $0x48] sm:$0xff]
        %v2052 = vld [vmem:[#allocation2 + $0x50] sm:$0xff]
        %v2053 = vld [vmem:[#allocation2 + $0x58] sm:$0xff]
        %v2054 = vld [vmem:[#allocation2 + $0x60] sm:$0xff]
        %v2055 = vld [vmem:[#allocation2 + $0x68] sm:$0xff]
        %v2056 = vld [vmem:[#allocation2 + $0x70] sm:$0xff]
        %v2057 = vld [vmem:[#allocation2 + $0x78] sm:$0xff]
        %v2058 = vld [vmem:[#allocation2 + $0x80] sm:$0xff]
        %v2059 = vld [vmem:[#allocation2 + $0x88] sm:$0xff]
        %v2060 = vld [vmem:[#allocation2 + $0x90] sm:$0xff]
        %v2061 = vld [vmem:[#allocation2 + $0x98] sm:$0xff]
        %v2062 = vld [vmem:[#allocation2 + $0xa0] sm:$0xff]
        %v2063 = vld [vmem:[#allocation2 + $0xa8] sm:$0xff]
        %v2064 = vld [vmem:[#allocation2 + $0xb0] sm:$0xff]
        %v2065 = vld [vmem:[#allocation2 + $0xb8] sm:$0xff]
        %v2066 = vld [vmem:[#allocation2 + $0xc0] sm:$0xff]
        %v2067 = vld [vmem:[#allocation2 + $0xc8] sm:$0xff]
        %v2068 = vld [vmem:[#allocation2 + $0xd0] sm:$0xff]
        %v2069 = vld [vmem:[#allocation2 + $0xd8] sm:$0xff]
        %v2070 = vld [vmem:[#allocation2 + $0xe0] sm:$0xff]
        %v2071 = vld [vmem:[#allocation2 + $0xe8] sm:$0xff]
        %v2072 = vld [vmem:[#allocation2 + $0xf0] sm:$0xff]
        %v2073 = vld [vmem:[#allocation2 + $0xf8] sm:$0xff]
        %s2074 = scalar_lea.vmem %s1, 6
        %v2075 = vld [vmem:[%s2074] sm:$0x3]
        %v2108 = vunpack.c.l.b16 %v2010
        %v2109 = vunpack.c.l.b16 %v2011
        %v2110 = vunpack.c.l.b16 %v2012
        %v2111 = vunpack.c.l.b16 %v2013
        %v2112 = vunpack.c.l.b16 %v2014
        %v2113 = vunpack.c.l.b16 %v2015
        %v2114 = vunpack.c.l.b16 %v2016
        %v2115 = vunpack.c.l.b16 %v2017
        %v2116 = vunpack.c.l.b16 %v2018
        %v2117 = vunpack.c.l.b16 %v2019
        %v2118 = vunpack.c.l.b16 %v2020
        %v2119 = vunpack.c.l.b16 %v2021
        %v2120 = vunpack.c.l.b16 %v2022
        %v2121 = vunpack.c.l.b16 %v2023
        %v2122 = vunpack.c.l.b16 %v2024
        %v2123 = vunpack.c.l.b16 %v2025
        %v2124 = vunpack.c.l.b16 %v2026
        %v2125 = vunpack.c.l.b16 %v2027
        %v2126 = vunpack.c.l.b16 %v2028
        %v2127 = vunpack.c.l.b16 %v2029
        %v2128 = vunpack.c.l.b16 %v2030
        %v2129 = vunpack.c.l.b16 %v2031
        %v2130 = vunpack.c.l.b16 %v2032
        %v2131 = vunpack.c.l.b16 %v2033
        %v2132 = vunpack.c.l.b16 %v2034
        %v2133 = vunpack.c.l.b16 %v2035
        %v2134 = vunpack.c.l.b16 %v2036
        %v2135 = vunpack.c.l.b16 %v2037
        %v2136 = vunpack.c.l.b16 %v2038
        %v2137 = vunpack.c.l.b16 %v2039
        %v2138 = vunpack.c.l.b16 %v2040
        %v2139 = vunpack.c.l.b16 %v2041
        %v2140 = vpack.c.b16 %v2109, %v2108
        %v2141 = vpack.c.b16 %v2111, %v2110
        %v2142 = vpack.c.b16 %v2113, %v2112
        %v2143 = vpack.c.b16 %v2115, %v2114
        %v2144 = vpack.c.b16 %v2117, %v2116
        %v2145 = vpack.c.b16 %v2119, %v2118
        %v2146 = vpack.c.b16 %v2121, %v2120
        %v2147 = vpack.c.b16 %v2123, %v2122
        %v2148 = vpack.c.b16 %v2125, %v2124
        %v2149 = vpack.c.b16 %v2127, %v2126
        %v2150 = vpack.c.b16 %v2129, %v2128
        %v2151 = vpack.c.b16 %v2131, %v2130
        %v2152 = vpack.c.b16 %v2133, %v2132
        %v2153 = vpack.c.b16 %v2135, %v2134
        %v2154 = vpack.c.b16 %v2137, %v2136
        %v2155 = vpack.c.b16 %v2139, %v2138
        %v2157 = vsel %vm366, %v2140, 0
        %v2160 = vsel %vm366, %v2141, 0
        %v2163 = vsel %vm366, %v2142, 0
        %v2166 = vsel %vm366, %v2143, 0
        %v2169 = vsel %vm366, %v2144, 0
        %v2172 = vsel %vm366, %v2145, 0
        %v2175 = vsel %vm366, %v2146, 0
        %v2178 = vsel %vm366, %v2147, 0
        %v2181 = vsel %vm366, %v2148, 0
        %v2184 = vsel %vm366, %v2149, 0
        %v2187 = vsel %vm366, %v2150, 0
        %v2190 = vsel %vm366, %v2151, 0
        %v2193 = vsel %vm366, %v2152, 0
        %v2196 = vsel %vm366, %v2153, 0
        %v2199 = vsel %vm366, %v2154, 0
        %v2202 = vsel %vm366, %v2155, 0
        %v2205 = vsel %vm415, %v2075, 0
        %2207 = vmatprep.subr.bf16.mxu0 0
        %2208 = vmatpush1.bf16.msra.mxu0 %v2205
        %2209 = vmatprep.subr.bf16.mxu0 0
        %2210 = vmatpush1.bf16.msra.mxu0 0
        %2211 = vmatprep.subr.bf16.mxu0 0
        %2212 = vmatpush1.bf16.msra.mxu0 0
        %2213 = vmatprep.subr.bf16.mxu0 0
        %2214 = vmatpush1.bf16.msra.mxu0 0
        %2215 = vmatprep.subr.bf16.mxu0 0
        %2216 = vmatpush1.bf16.msra.mxu0 0
        %2217 = vmatprep.subr.bf16.mxu0 0
        %2218 = vmatpush1.bf16.msra.mxu0 0
        %2219 = vmatprep.subr.bf16.mxu0 0
        %2220 = vmatpush1.bf16.msra.mxu0 0
        %2221 = vmatprep.subr.bf16.mxu0 0
        %2222 = vmatpush1.bf16.msra.mxu0 0
        %2223 = vmatprep.subr.bf16.mxu0 0
        %2224 = vmatpush1.bf16.msra.mxu0 0
        %2225 = vmatprep.subr.bf16.mxu0 0
        %2226 = vmatpush1.bf16.msra.mxu0 0
        %2227 = vmatprep.subr.bf16.mxu0 0
        %2228 = vmatpush1.bf16.msra.mxu0 0
        %2229 = vmatprep.subr.bf16.mxu0 0
        %2230 = vmatpush1.bf16.msra.mxu0 0
        %2231 = vmatprep.subr.bf16.mxu0 0
        %2232 = vmatpush1.bf16.msra.mxu0 0
        %2233 = vmatprep.subr.bf16.mxu0 0
        %2234 = vmatpush1.bf16.msra.mxu0 0
        %2235 = vmatprep.subr.bf16.mxu0 0
        %2236 = vmatpush1.bf16.msra.mxu0 0
        %2237 = vmatprep.subr.bf16.mxu0 0
        %2238 = vmatpush1.bf16.msra.mxu0 0
        %2239 = vmatprep.mubr.bf16.mxu0 0
        %2240 = vmatmul.mubr.bf16.gmra.mrb[0].mxu0 %v2157
        %v2241 = vpop.f32.mrb[0].mxu0
        %v2242 = vadd.f32 0.0, %v2241
        %v2243 = vpop.f32.mrb[0].mxu0
        %v2244 = vpop.f32.mrb[0].mxu0
        %v2245 = vadd.f32 0.0, %v2244
        %v2246 = vpop.f32.mrb[0].mxu0
        %2247 = vmatprep.mubr.bf16.mxu0 0
        %2248 = vmatmul.mubr.bf16.gmra.mrb[0].mxu0 %v2160
        %v2249 = vpop.f32.mrb[0].mxu0
        %v2250 = vadd.f32 0.0, %v2249
        %v2251 = vpop.f32.mrb[0].mxu0
        %v2252 = vpop.f32.mrb[0].mxu0
        %v2253 = vadd.f32 0.0, %v2252
        %v2254 = vpop.f32.mrb[0].mxu0
        %2255 = vmatprep.mubr.bf16.mxu0 0
        %2256 = vmatmul.mubr.bf16.gmra.mrb[0].mxu0 %v2163
        %v2257 = vpop.f32.mrb[0].mxu0
        %v2258 = vadd.f32 0.0, %v2257
        %v2259 = vpop.f32.mrb[0].mxu0
        %v2260 = vpop.f32.mrb[0].mxu0
        %v2261 = vadd.f32 0.0, %v2260
        %v2262 = vpop.f32.mrb[0].mxu0
        %2263 = vmatprep.mubr.bf16.mxu0 0
        %2264 = vmatmul.mubr.bf16.gmra.mrb[0].mxu0 %v2166
        %v2265 = vpop.f32.mrb[0].mxu0
        %v2266 = vadd.f32 0.0, %v2265
        %v2267 = vpop.f32.mrb[0].mxu0
        %v2268 = vpop.f32.mrb[0].mxu0
        %v2269 = vadd.f32 0.0, %v2268
        %v2270 = vpop.f32.mrb[0].mxu0
        %2271 = vmatprep.mubr.bf16.mxu0 0
        %2272 = vmatmul.mubr.bf16.gmra.mrb[0].mxu0 %v2169
        %v2273 = vpop.f32.mrb[0].mxu0
        %v2274 = vadd.f32 0.0, %v2273
        %v2275 = vpop.f32.mrb[0].mxu0
        %v2276 = vpop.f32.mrb[0].mxu0
        %v2277 = vadd.f32 0.0, %v2276
        %v2278 = vpop.f32.mrb[0].mxu0
        %2279 = vmatprep.mubr.bf16.mxu0 0
        %2280 = vmatmul.mubr.bf16.gmra.mrb[0].mxu0 %v2172
        %v2281 = vpop.f32.mrb[0].mxu0
        %v2282 = vadd.f32 0.0, %v2281
        %v2283 = vpop.f32.mrb[0].mxu0
        %v2284 = vpop.f32.mrb[0].mxu0
        %v2285 = vadd.f32 0.0, %v2284
        %v2286 = vpop.f32.mrb[0].mxu0
        %2287 = vmatprep.mubr.bf16.mxu0 0
        %2288 = vmatmul.mubr.bf16.gmra.mrb[0].mxu0 %v2175
        %v2289 = vpop.f32.mrb[0].mxu0
        %v2290 = vadd.f32 0.0, %v2289
        %v2291 = vpop.f32.mrb[0].mxu0
        %v2292 = vpop.f32.mrb[0].mxu0
        %v2293 = vadd.f32 0.0, %v2292
        %v2294 = vpop.f32.mrb[0].mxu0
        %2295 = vmatprep.mubr.bf16.mxu0 0
        %2296 = vmatmul.mubr.bf16.gmra.mrb[0].mxu0 %v2178
        %v2297 = vpop.f32.mrb[0].mxu0
        %v2298 = vadd.f32 0.0, %v2297
        %v2299 = vpop.f32.mrb[0].mxu0
        %v2300 = vpop.f32.mrb[0].mxu0
        %v2301 = vadd.f32 0.0, %v2300
        %v2302 = vpop.f32.mrb[0].mxu0
        %2303 = vmatprep.mubr.bf16.mxu0 0
        %2304 = vmatmul.mubr.bf16.gmra.mrb[0].mxu0 %v2181
        %v2305 = vpop.f32.mrb[0].mxu0
        %v2306 = vadd.f32 0.0, %v2305
        %v2307 = vpop.f32.mrb[0].mxu0
        %v2308 = vpop.f32.mrb[0].mxu0
        %v2309 = vadd.f32 0.0, %v2308
        %v2310 = vpop.f32.mrb[0].mxu0
        %2311 = vmatprep.mubr.bf16.mxu0 0
        %2312 = vmatmul.mubr.bf16.gmra.mrb[0].mxu0 %v2184
        %v2313 = vpop.f32.mrb[0].mxu0
        %v2314 = vadd.f32 0.0, %v2313
        %v2315 = vpop.f32.mrb[0].mxu0
        %v2316 = vpop.f32.mrb[0].mxu0
        %v2317 = vadd.f32 0.0, %v2316
        %v2318 = vpop.f32.mrb[0].mxu0
        %2319 = vmatprep.mubr.bf16.mxu0 0
        %2320 = vmatmul.mubr.bf16.gmra.mrb[0].mxu0 %v2187
        %v2321 = vpop.f32.mrb[0].mxu0
        %v2322 = vadd.f32 0.0, %v2321
        %v2323 = vpop.f32.mrb[0].mxu0
        %v2324 = vpop.f32.mrb[0].mxu0
        %v2325 = vadd.f32 0.0, %v2324
        %v2326 = vpop.f32.mrb[0].mxu0
        %2327 = vmatprep.mubr.bf16.mxu0 0
        %2328 = vmatmul.mubr.bf16.gmra.mrb[0].mxu0 %v2190
        %v2329 = vpop.f32.mrb[0].mxu0
        %v2330 = vadd.f32 0.0, %v2329
        %v2331 = vpop.f32.mrb[0].mxu0
        %v2332 = vpop.f32.mrb[0].mxu0
        %v2333 = vadd.f32 0.0, %v2332
        %v2334 = vpop.f32.mrb[0].mxu0
        %2335 = vmatprep.mubr.bf16.mxu0 0
        %2336 = vmatmul.mubr.bf16.gmra.mrb[0].mxu0 %v2193
        %v2337 = vpop.f32.mrb[0].mxu0
        %v2338 = vadd.f32 0.0, %v2337
        %v2339 = vpop.f32.mrb[0].mxu0
        %v2340 = vpop.f32.mrb[0].mxu0
        %v2341 = vadd.f32 0.0, %v2340
        %v2342 = vpop.f32.mrb[0].mxu0
        %2343 = vmatprep.mubr.bf16.mxu0 0
        %2344 = vmatmul.mubr.bf16.gmra.mrb[0].mxu0 %v2196
        %v2345 = vpop.f32.mrb[0].mxu0
        %v2346 = vadd.f32 0.0, %v2345
        %v2347 = vpop.f32.mrb[0].mxu0
        %v2348 = vpop.f32.mrb[0].mxu0
        %v2349 = vadd.f32 0.0, %v2348
        %v2350 = vpop.f32.mrb[0].mxu0
        %2351 = vmatprep.mubr.bf16.mxu0 0
        %2352 = vmatmul.mubr.bf16.gmra.mrb[0].mxu0 %v2199
        %v2353 = vpop.f32.mrb[0].mxu0
        %v2354 = vadd.f32 0.0, %v2353
        %v2355 = vpop.f32.mrb[0].mxu0
        %v2356 = vpop.f32.mrb[0].mxu0
        %v2357 = vadd.f32 0.0, %v2356
        %v2358 = vpop.f32.mrb[0].mxu0
        %2359 = vmatprep.mubr.bf16.mxu0 0
        %2360 = vmatmul.mubr.bf16.gmra.mrb[0].mxu0 %v2202
        %v2361 = vpop.f32.mrb[0].mxu0
        %v2362 = vadd.f32 0.0, %v2361
        %v2363 = vpop.f32.mrb[0].mxu0
        %v2364 = vpop.f32.mrb[0].mxu0
        %v2365 = vadd.f32 0.0, %v2364
        %v2366 = vpop.f32.mrb[0].mxu0
        %2367 = vdwg.mxu0
        %v2368 = vadd.f32 %v2042, %v2242
        %v2369 = vadd.f32 %v2043, %v2245
        %v2370 = vadd.f32 %v2044, %v2250
        %v2371 = vadd.f32 %v2045, %v2253
        %v2372 = vadd.f32 %v2046, %v2258
        %v2373 = vadd.f32 %v2047, %v2261
        %v2374 = vadd.f32 %v2048, %v2266
        %v2375 = vadd.f32 %v2049, %v2269
        %v2376 = vadd.f32 %v2050, %v2274
        %v2377 = vadd.f32 %v2051, %v2277
        %v2378 = vadd.f32 %v2052, %v2282
        %v2379 = vadd.f32 %v2053, %v2285
        %v2380 = vadd.f32 %v2054, %v2290
        %v2381 = vadd.f32 %v2055, %v2293
        %v2382 = vadd.f32 %v2056, %v2298
        %v2383 = vadd.f32 %v2057, %v2301
        %v2384 = vadd.f32 %v2058, %v2306
        %v2385 = vadd.f32 %v2059, %v2309
        %v2386 = vadd.f32 %v2060, %v2314
        %v2387 = vadd.f32 %v2061, %v2317
        %v2388 = vadd.f32 %v2062, %v2322
        %v2389 = vadd.f32 %v2063, %v2325
        %v2390 = vadd.f32 %v2064, %v2330
        %v2391 = vadd.f32 %v2065, %v2333
        %v2392 = vadd.f32 %v2066, %v2338
        %v2393 = vadd.f32 %v2067, %v2341
        %v2394 = vadd.f32 %v2068, %v2346
        %v2395 = vadd.f32 %v2069, %v2349
        %v2396 = vadd.f32 %v2070, %v2354
        %v2397 = vadd.f32 %v2071, %v2357
        %v2398 = vadd.f32 %v2072, %v2362
        %v2399 = vadd.f32 %v2073, %v2365
        %2400 = vst [vmem:[#allocation2] sm:$0xff] %v2368
        %2401 = vst [vmem:[#allocation2 + $0x8] sm:$0xff] %v2369
        %2402 = vst [vmem:[#allocation2 + $0x10] sm:$0xff] %v2370
        %2403 = vst [vmem:[#allocation2 + $0x18] sm:$0xff] %v2371
        %2404 = vst [vmem:[#allocation2 + $0x20] sm:$0xff] %v2372
        %2405 = vst [vmem:[#allocation2 + $0x28] sm:$0xff] %v2373
        %2406 = vst [vmem:[#allocation2 + $0x30] sm:$0xff] %v2374
        %2407 = vst [vmem:[#allocation2 + $0x38] sm:$0xff] %v2375
        %2408 = vst [vmem:[#allocation2 + $0x40] sm:$0xff] %v2376
        %2409 = vst [vmem:[#allocation2 + $0x48] sm:$0xff] %v2377
        %2410 = vst [vmem:[#allocation2 + $0x50] sm:$0xff] %v2378
        %2411 = vst [vmem:[#allocation2 + $0x58] sm:$0xff] %v2379
        %2412 = vst [vmem:[#allocation2 + $0x60] sm:$0xff] %v2380
        %2413 = vst [vmem:[#allocation2 + $0x68] sm:$0xff] %v2381
        %2414 = vst [vmem:[#allocation2 + $0x70] sm:$0xff] %v2382
        %2415 = vst [vmem:[#allocation2 + $0x78] sm:$0xff] %v2383
        %2416 = vst [vmem:[#allocation2 + $0x80] sm:$0xff] %v2384
        %2417 = vst [vmem:[#allocation2 + $0x88] sm:$0xff] %v2385
        %2418 = vst [vmem:[#allocation2 + $0x90] sm:$0xff] %v2386
        %2419 = vst [vmem:[#allocation2 + $0x98] sm:$0xff] %v2387
        %2420 = vst [vmem:[#allocation2 + $0xa0] sm:$0xff] %v2388
        %2421 = vst [vmem:[#allocation2 + $0xa8] sm:$0xff] %v2389
        %2422 = vst [vmem:[#allocation2 + $0xb0] sm:$0xff] %v2390
        %2423 = vst [vmem:[#allocation2 + $0xb8] sm:$0xff] %v2391
        %2424 = vst [vmem:[#allocation2 + $0xc0] sm:$0xff] %v2392
        %2425 = vst [vmem:[#allocation2 + $0xc8] sm:$0xff] %v2393
        %2426 = vst [vmem:[#allocation2 + $0xd0] sm:$0xff] %v2394
        %2427 = vst [vmem:[#allocation2 + $0xd8] sm:$0xff] %v2395
        %2428 = vst [vmem:[#allocation2 + $0xe0] sm:$0xff] %v2396
        %2429 = vst [vmem:[#allocation2 + $0xe8] sm:$0xff] %v2397
        %2430 = vst [vmem:[#allocation2 + $0xf0] sm:$0xff] %v2398
        %2431 = vst [vmem:[#allocation2 + $0xf8] sm:$0xff] %v2399
        %v2432 = vld [vmem:[%s2009] sm:$0xf]
        %v2433 = vld [vmem:[%s2009 + $0x4] sm:$0xf]
        %v2434 = vld [vmem:[%s2009 + $0x8] sm:$0x1]
        %v2435 = vld [vmem:[%s2009 + $0xc] sm:$0xf]
        %v2436 = vld [vmem:[%s2009 + $0x10] sm:$0xf]
        %v2437 = vld [vmem:[%s2009 + $0x14] sm:$0x1]
        %v2438 = vld [vmem:[%s2009 + $0x18] sm:$0xf]
        %v2439 = vld [vmem:[%s2009 + $0x1c] sm:$0xf]
        %v2440 = vld [vmem:[%s2009 + $0x20] sm:$0x1]
        %v2441 = vld [vmem:[%s2009 + $0x24] sm:$0xf]
        %v2442 = vld [vmem:[%s2009 + $0x28] sm:$0xf]
        %v2443 = vld [vmem:[%s2009 + $0x2c] sm:$0x1]
        %v2444 = vld [vmem:[%s2009 + $0x30] sm:$0xf]
        %v2445 = vld [vmem:[%s2009 + $0x34] sm:$0xf]
        %v2446 = vld [vmem:[%s2009 + $0x38] sm:$0x1]
        %v2447 = vld [vmem:[%s2009 + $0x3c] sm:$0xf]
        %v2448 = vld [vmem:[%s2009 + $0x40] sm:$0xf]
        %v2449 = vld [vmem:[%s2009 + $0x44] sm:$0x1]
        %v2450 = vld [vmem:[%s2009 + $0x48] sm:$0xf]
        %v2451 = vld [vmem:[%s2009 + $0x4c] sm:$0xf]
        %v2452 = vld [vmem:[%s2009 + $0x50] sm:$0x1]
        %v2453 = vld [vmem:[%s2009 + $0x54] sm:$0xf]
        %v2454 = vld [vmem:[%s2009 + $0x58] sm:$0xf]
        %v2455 = vld [vmem:[%s2009 + $0x5c] sm:$0x1]
        %v2456 = vld [vmem:[%s2009 + $0x60] sm:$0xf]
        %v2457 = vld [vmem:[%s2009 + $0x64] sm:$0xf]
        %v2458 = vld [vmem:[%s2009 + $0x68] sm:$0x1]
        %v2459 = vld [vmem:[%s2009 + $0x6c] sm:$0xf]
        %v2460 = vld [vmem:[%s2009 + $0x70] sm:$0xf]
        %v2461 = vld [vmem:[%s2009 + $0x74] sm:$0x1]
        %v2462 = vld [vmem:[%s2009 + $0x78] sm:$0xf]
        %v2463 = vld [vmem:[%s2009 + $0x7c] sm:$0xf]
        %v2464 = vld [vmem:[%s2009 + $0x80] sm:$0x1]
        %v2465 = vld [vmem:[%s2009 + $0x84] sm:$0xf]
        %v2466 = vld [vmem:[%s2009 + $0x88] sm:$0xf]
        %v2467 = vld [vmem:[%s2009 + $0x8c] sm:$0x1]
        %v2468 = vld [vmem:[%s2009 + $0x90] sm:$0xf]
        %v2469 = vld [vmem:[%s2009 + $0x94] sm:$0xf]
        %v2470 = vld [vmem:[%s2009 + $0x98] sm:$0x1]
        %v2471 = vld [vmem:[%s2009 + $0x9c] sm:$0xf]
        %v2472 = vld [vmem:[%s2009 + $0xa0] sm:$0xf]
        %v2473 = vld [vmem:[%s2009 + $0xa4] sm:$0x1]
        %v2474 = vld [vmem:[%s2009 + $0xa8] sm:$0xf]
        %v2475 = vld [vmem:[%s2009 + $0xac] sm:$0xf]
        %v2476 = vld [vmem:[%s2009 + $0xb0] sm:$0x1]
        %v2477 = vld [vmem:[%s2009 + $0xb4] sm:$0xf]
        %v2478 = vld [vmem:[%s2009 + $0xb8] sm:$0xf]
        %v2479 = vld [vmem:[%s2009 + $0xbc] sm:$0x1]
        %v2481 = vshrl.u32 %v2432, 16
        %v2483 = vrot.slane %v2481, 4
        %v2484 = vshll.u32 %v2432, 16
        %v2486 = vrot.slane %v2484, 5
        %v2487 = vor.u32 %v2483, %v2486
        %v2488 = vrot.slane %v2487, 4
        %v2490 = vshll.u32 %v2433, 16
        %v2492 = vrot.slane %v2490, 5
        %v2493 = vsel %vm694, %v2488, %v2492
        %v2494 = vshrl.u32 %v2433, 16
        %v2496 = vrot.slane %v2494, 4
        %v2497 = vor.u32 %v2496, %v2492
        %v2498 = vrot.slane %v2497, 4
        %v2500 = vshll.u32 %v2434, 16
        %v2502 = vrot.slane %v2500, 5
        %v2503 = vsel %vm694, %v2498, %v2502
        %v2505 = vshrl.u32 %v2435, 16
        %v2507 = vrot.slane %v2505, 4
        %v2508 = vshll.u32 %v2435, 16
        %v2510 = vrot.slane %v2508, 5
        %v2511 = vor.u32 %v2507, %v2510
        %v2512 = vrot.slane %v2511, 4
        %v2514 = vshll.u32 %v2436, 16
        %v2516 = vrot.slane %v2514, 5
        %v2517 = vsel %vm694, %v2512, %v2516
        %v2518 = vshrl.u32 %v2436, 16
        %v2520 = vrot.slane %v2518, 4
        %v2521 = vor.u32 %v2520, %v2516
        %v2522 = vrot.slane %v2521, 4
        %v2524 = vshll.u32 %v2437, 16
        %v2526 = vrot.slane %v2524, 5
        %v2527 = vsel %vm694, %v2522, %v2526
        %v2529 = vshrl.u32 %v2438, 16
        %v2531 = vrot.slane %v2529, 4
        %v2532 = vshll.u32 %v2438, 16
        %v2534 = vrot.slane %v2532, 5
        %v2535 = vor.u32 %v2531, %v2534
        %v2536 = vrot.slane %v2535, 4
        %v2538 = vshll.u32 %v2439, 16
        %v2540 = vrot.slane %v2538, 5
        %v2541 = vsel %vm694, %v2536, %v2540
        %v2542 = vshrl.u32 %v2439, 16
        %v2544 = vrot.slane %v2542, 4
        %v2545 = vor.u32 %v2544, %v2540
        %v2546 = vrot.slane %v2545, 4
        %v2548 = vshll.u32 %v2440, 16
        %v2550 = vrot.slane %v2548, 5
        %v2551 = vsel %vm694, %v2546, %v2550
        %v2553 = vshrl.u32 %v2441, 16
        %v2555 = vrot.slane %v2553, 4
        %v2556 = vshll.u32 %v2441, 16
        %v2558 = vrot.slane %v2556, 5
        %v2559 = vor.u32 %v2555, %v2558
        %v2560 = vrot.slane %v2559, 4
        %v2562 = vshll.u32 %v2442, 16
        %v2564 = vrot.slane %v2562, 5
        %v2565 = vsel %vm694, %v2560, %v2564
        %v2566 = vshrl.u32 %v2442, 16
        %v2568 = vrot.slane %v2566, 4
        %v2569 = vor.u32 %v2568, %v2564
        %v2570 = vrot.slane %v2569, 4
        %v2572 = vshll.u32 %v2443, 16
        %v2574 = vrot.slane %v2572, 5
        %v2575 = vsel %vm694, %v2570, %v2574
        %v2577 = vshrl.u32 %v2444, 16
        %v2579 = vrot.slane %v2577, 4
        %v2580 = vshll.u32 %v2444, 16
        %v2582 = vrot.slane %v2580, 5
        %v2583 = vor.u32 %v2579, %v2582
        %v2584 = vrot.slane %v2583, 4
        %v2586 = vshll.u32 %v2445, 16
        %v2588 = vrot.slane %v2586, 5
        %v2589 = vsel %vm694, %v2584, %v2588
        %v2590 = vshrl.u32 %v2445, 16
        %v2592 = vrot.slane %v2590, 4
        %v2593 = vor.u32 %v2592, %v2588
        %v2594 = vrot.slane %v2593, 4
        %v2596 = vshll.u32 %v2446, 16
        %v2598 = vrot.slane %v2596, 5
        %v2599 = vsel %vm694, %v2594, %v2598
        %v2601 = vshrl.u32 %v2447, 16
        %v2603 = vrot.slane %v2601, 4
        %v2604 = vshll.u32 %v2447, 16
        %v2606 = vrot.slane %v2604, 5
        %v2607 = vor.u32 %v2603, %v2606
        %v2608 = vrot.slane %v2607, 4
        %v2610 = vshll.u32 %v2448, 16
        %v2612 = vrot.slane %v2610, 5
        %v2613 = vsel %vm694, %v2608, %v2612
        %v2614 = vshrl.u32 %v2448, 16
        %v2616 = vrot.slane %v2614, 4
        %v2617 = vor.u32 %v2616, %v2612
        %v2618 = vrot.slane %v2617, 4
        %v2620 = vshll.u32 %v2449, 16
        %v2622 = vrot.slane %v2620, 5
        %v2623 = vsel %vm694, %v2618, %v2622
        %v2625 = vshrl.u32 %v2450, 16
        %v2627 = vrot.slane %v2625, 4
        %v2628 = vshll.u32 %v2450, 16
        %v2630 = vrot.slane %v2628, 5
        %v2631 = vor.u32 %v2627, %v2630
        %v2632 = vrot.slane %v2631, 4
        %v2634 = vshll.u32 %v2451, 16
        %v2636 = vrot.slane %v2634, 5
        %v2637 = vsel %vm694, %v2632, %v2636
        %v2638 = vshrl.u32 %v2451, 16
        %v2640 = vrot.slane %v2638, 4
        %v2641 = vor.u32 %v2640, %v2636
        %v2642 = vrot.slane %v2641, 4
        %v2644 = vshll.u32 %v2452, 16
        %v2646 = vrot.slane %v2644, 5
        %v2647 = vsel %vm694, %v2642, %v2646
        %v2649 = vshrl.u32 %v2453, 16
        %v2651 = vrot.slane %v2649, 4
        %v2652 = vshll.u32 %v2453, 16
        %v2654 = vrot.slane %v2652, 5
        %v2655 = vor.u32 %v2651, %v2654
        %v2656 = vrot.slane %v2655, 4
        %v2658 = vshll.u32 %v2454, 16
        %v2660 = vrot.slane %v2658, 5
        %v2661 = vsel %vm694, %v2656, %v2660
        %v2662 = vshrl.u32 %v2454, 16
        %v2664 = vrot.slane %v2662, 4
        %v2665 = vor.u32 %v2664, %v2660
        %v2666 = vrot.slane %v2665, 4
        %v2668 = vshll.u32 %v2455, 16
        %v2670 = vrot.slane %v2668, 5
        %v2671 = vsel %vm694, %v2666, %v2670
        %v2673 = vshrl.u32 %v2456, 16
        %v2675 = vrot.slane %v2673, 4
        %v2676 = vshll.u32 %v2456, 16
        %v2678 = vrot.slane %v2676, 5
        %v2679 = vor.u32 %v2675, %v2678
        %v2680 = vrot.slane %v2679, 4
        %v2682 = vshll.u32 %v2457, 16
        %v2684 = vrot.slane %v2682, 5
        %v2685 = vsel %vm694, %v2680, %v2684
        %v2686 = vshrl.u32 %v2457, 16
        %v2688 = vrot.slane %v2686, 4
        %v2689 = vor.u32 %v2688, %v2684
        %v2690 = vrot.slane %v2689, 4
        %v2692 = vshll.u32 %v2458, 16
        %v2694 = vrot.slane %v2692, 5
        %v2695 = vsel %vm694, %v2690, %v2694
        %v2697 = vshrl.u32 %v2459, 16
        %v2699 = vrot.slane %v2697, 4
        %v2700 = vshll.u32 %v2459, 16
        %v2702 = vrot.slane %v2700, 5
        %v2703 = vor.u32 %v2699, %v2702
        %v2704 = vrot.slane %v2703, 4
        %v2706 = vshll.u32 %v2460, 16
        %v2708 = vrot.slane %v2706, 5
        %v2709 = vsel %vm694, %v2704, %v2708
        %v2710 = vshrl.u32 %v2460, 16
        %v2712 = vrot.slane %v2710, 4
        %v2713 = vor.u32 %v2712, %v2708
        %v2714 = vrot.slane %v2713, 4
        %v2716 = vshll.u32 %v2461, 16
        %v2718 = vrot.slane %v2716, 5
        %v2719 = vsel %vm694, %v2714, %v2718
        %v2721 = vshrl.u32 %v2462, 16
        %v2723 = vrot.slane %v2721, 4
        %v2724 = vshll.u32 %v2462, 16
        %v2726 = vrot.slane %v2724, 5
        %v2727 = vor.u32 %v2723, %v2726
        %v2728 = vrot.slane %v2727, 4
        %v2730 = vshll.u32 %v2463, 16
        %v2732 = vrot.slane %v2730, 5
        %v2733 = vsel %vm694, %v2728, %v2732
        %v2734 = vshrl.u32 %v2463, 16
        %v2736 = vrot.slane %v2734, 4
        %v2737 = vor.u32 %v2736, %v2732
        %v2738 = vrot.slane %v2737, 4
        %v2740 = vshll.u32 %v2464, 16
        %v2742 = vrot.slane %v2740, 5
        %v2743 = vsel %vm694, %v2738, %v2742
        %v2745 = vshrl.u32 %v2465, 16
        %v2747 = vrot.slane %v2745, 4
        %v2748 = vshll.u32 %v2465, 16
        %v2750 = vrot.slane %v2748, 5
        %v2751 = vor.u32 %v2747, %v2750
        %v2752 = vrot.slane %v2751, 4
        %v2754 = vshll.u32 %v2466, 16
        %v2756 = vrot.slane %v2754, 5
        %v2757 = vsel %vm694, %v2752, %v2756
        %v2758 = vshrl.u32 %v2466, 16
        %v2760 = vrot.slane %v2758, 4
        %v2761 = vor.u32 %v2760, %v2756
        %v2762 = vrot.slane %v2761, 4
        %v2764 = vshll.u32 %v2467, 16
        %v2766 = vrot.slane %v2764, 5
        %v2767 = vsel %vm694, %v2762, %v2766
        %v2769 = vshrl.u32 %v2468, 16
        %v2771 = vrot.slane %v2769, 4
        %v2772 = vshll.u32 %v2468, 16
        %v2774 = vrot.slane %v2772, 5
        %v2775 = vor.u32 %v2771, %v2774
        %v2776 = vrot.slane %v2775, 4
        %v2778 = vshll.u32 %v2469, 16
        %v2780 = vrot.slane %v2778, 5
        %v2781 = vsel %vm694, %v2776, %v2780
        %v2782 = vshrl.u32 %v2469, 16
        %v2784 = vrot.slane %v2782, 4
        %v2785 = vor.u32 %v2784, %v2780
        %v2786 = vrot.slane %v2785, 4
        %v2788 = vshll.u32 %v2470, 16
        %v2790 = vrot.slane %v2788, 5
        %v2791 = vsel %vm694, %v2786, %v2790
        %v2793 = vshrl.u32 %v2471, 16
        %v2795 = vrot.slane %v2793, 4
        %v2796 = vshll.u32 %v2471, 16
        %v2798 = vrot.slane %v2796, 5
        %v2799 = vor.u32 %v2795, %v2798
        %v2800 = vrot.slane %v2799, 4
        %v2802 = vshll.u32 %v2472, 16
        %v2804 = vrot.slane %v2802, 5
        %v2805 = vsel %vm694, %v2800, %v2804
        %v2806 = vshrl.u32 %v2472, 16
        %v2808 = vrot.slane %v2806, 4
        %v2809 = vor.u32 %v2808, %v2804
        %v2810 = vrot.slane %v2809, 4
        %v2812 = vshll.u32 %v2473, 16
        %v2814 = vrot.slane %v2812, 5
        %v2815 = vsel %vm694, %v2810, %v2814
        %v2817 = vshrl.u32 %v2474, 16
        %v2819 = vrot.slane %v2817, 4
        %v2820 = vshll.u32 %v2474, 16
        %v2822 = vrot.slane %v2820, 5
        %v2823 = vor.u32 %v2819, %v2822
        %v2824 = vrot.slane %v2823, 4
        %v2826 = vshll.u32 %v2475, 16
        %v2828 = vrot.slane %v2826, 5
        %v2829 = vsel %vm694, %v2824, %v2828
        %v2830 = vshrl.u32 %v2475, 16
        %v2832 = vrot.slane %v2830, 4
        %v2833 = vor.u32 %v2832, %v2828
        %v2834 = vrot.slane %v2833, 4
        %v2836 = vshll.u32 %v2476, 16
        %v2838 = vrot.slane %v2836, 5
        %v2839 = vsel %vm694, %v2834, %v2838
        %v2841 = vshrl.u32 %v2477, 16
        %v2843 = vrot.slane %v2841, 4
        %v2844 = vshll.u32 %v2477, 16
        %v2846 = vrot.slane %v2844, 5
        %v2847 = vor.u32 %v2843, %v2846
        %v2848 = vrot.slane %v2847, 4
        %v2850 = vshll.u32 %v2478, 16
        %v2852 = vrot.slane %v2850, 5
        %v2853 = vsel %vm694, %v2848, %v2852
        %v2854 = vshrl.u32 %v2478, 16
        %v2856 = vrot.slane %v2854, 4
        %v2857 = vor.u32 %v2856, %v2852
        %v2858 = vrot.slane %v2857, 4
        %v2860 = vshll.u32 %v2479, 16
        %v2862 = vrot.slane %v2860, 5
        %v2863 = vsel %vm694, %v2858, %v2862
        %v2864 = vld [vmem:[#allocation2] sm:$0xff]
        %v2865 = vld [vmem:[#allocation2 + $0x8] sm:$0xff]
        %v2866 = vld [vmem:[#allocation2 + $0x10] sm:$0xff]
        %v2867 = vld [vmem:[#allocation2 + $0x18] sm:$0xff]
        %v2868 = vld [vmem:[#allocation2 + $0x20] sm:$0xff]
        %v2869 = vld [vmem:[#allocation2 + $0x28] sm:$0xff]
        %v2870 = vld [vmem:[#allocation2 + $0x30] sm:$0xff]
        %v2871 = vld [vmem:[#allocation2 + $0x38] sm:$0xff]
        %v2872 = vld [vmem:[#allocation2 + $0x40] sm:$0xff]
        %v2873 = vld [vmem:[#allocation2 + $0x48] sm:$0xff]
        %v2874 = vld [vmem:[#allocation2 + $0x50] sm:$0xff]
        %v2875 = vld [vmem:[#allocation2 + $0x58] sm:$0xff]
        %v2876 = vld [vmem:[#allocation2 + $0x60] sm:$0xff]
        %v2877 = vld [vmem:[#allocation2 + $0x68] sm:$0xff]
        %v2878 = vld [vmem:[#allocation2 + $0x70] sm:$0xff]
        %v2879 = vld [vmem:[#allocation2 + $0x78] sm:$0xff]
        %v2880 = vld [vmem:[#allocation2 + $0x80] sm:$0xff]
        %v2881 = vld [vmem:[#allocation2 + $0x88] sm:$0xff]
        %v2882 = vld [vmem:[#allocation2 + $0x90] sm:$0xff]
        %v2883 = vld [vmem:[#allocation2 + $0x98] sm:$0xff]
        %v2884 = vld [vmem:[#allocation2 + $0xa0] sm:$0xff]
        %v2885 = vld [vmem:[#allocation2 + $0xa8] sm:$0xff]
        %v2886 = vld [vmem:[#allocation2 + $0xb0] sm:$0xff]
        %v2887 = vld [vmem:[#allocation2 + $0xb8] sm:$0xff]
        %v2888 = vld [vmem:[#allocation2 + $0xc0] sm:$0xff]
        %v2889 = vld [vmem:[#allocation2 + $0xc8] sm:$0xff]
        %v2890 = vld [vmem:[#allocation2 + $0xd0] sm:$0xff]
        %v2891 = vld [vmem:[#allocation2 + $0xd8] sm:$0xff]
        %v2892 = vld [vmem:[#allocation2 + $0xe0] sm:$0xff]
        %v2893 = vld [vmem:[#allocation2 + $0xe8] sm:$0xff]
        %v2894 = vld [vmem:[#allocation2 + $0xf0] sm:$0xff]
        %v2895 = vld [vmem:[#allocation2 + $0xf8] sm:$0xff]
        %s2896 = scalar_lea.vmem %s1, 8
        %v2897 = vld [vmem:[%s2896] sm:$0x3]
        %v2898 = vunpack.c.l.b16 %v2493
        %v2899 = vunpack.c.l.b16 %v2503
        %v2900 = vunpack.c.l.b16 %v2517
        %v2901 = vunpack.c.l.b16 %v2527
        %v2902 = vunpack.c.l.b16 %v2541
        %v2903 = vunpack.c.l.b16 %v2551
        %v2904 = vunpack.c.l.b16 %v2565
        %v2905 = vunpack.c.l.b16 %v2575
        %v2906 = vunpack.c.l.b16 %v2589
        %v2907 = vunpack.c.l.b16 %v2599
        %v2908 = vunpack.c.l.b16 %v2613
        %v2909 = vunpack.c.l.b16 %v2623
        %v2910 = vunpack.c.l.b16 %v2637
        %v2911 = vunpack.c.l.b16 %v2647
        %v2912 = vunpack.c.l.b16 %v2661
        %v2913 = vunpack.c.l.b16 %v2671
        %v2914 = vunpack.c.l.b16 %v2685
        %v2915 = vunpack.c.l.b16 %v2695
        %v2916 = vunpack.c.l.b16 %v2709
        %v2917 = vunpack.c.l.b16 %v2719
        %v2918 = vunpack.c.l.b16 %v2733
        %v2919 = vunpack.c.l.b16 %v2743
        %v2920 = vunpack.c.l.b16 %v2757
        %v2921 = vunpack.c.l.b16 %v2767
        %v2922 = vunpack.c.l.b16 %v2781
        %v2923 = vunpack.c.l.b16 %v2791
        %v2924 = vunpack.c.l.b16 %v2805
        %v2925 = vunpack.c.l.b16 %v2815
        %v2926 = vunpack.c.l.b16 %v2829
        %v2927 = vunpack.c.l.b16 %v2839
        %v2928 = vunpack.c.l.b16 %v2853
        %v2929 = vunpack.c.l.b16 %v2863
        %v2930 = vpack.c.b16 %v2899, %v2898
        %v2931 = vpack.c.b16 %v2901, %v2900
        %v2932 = vpack.c.b16 %v2903, %v2902
        %v2933 = vpack.c.b16 %v2905, %v2904
        %v2934 = vpack.c.b16 %v2907, %v2906
        %v2935 = vpack.c.b16 %v2909, %v2908
        %v2936 = vpack.c.b16 %v2911, %v2910
        %v2937 = vpack.c.b16 %v2913, %v2912
        %v2938 = vpack.c.b16 %v2915, %v2914
        %v2939 = vpack.c.b16 %v2917, %v2916
        %v2940 = vpack.c.b16 %v2919, %v2918
        %v2941 = vpack.c.b16 %v2921, %v2920
        %v2942 = vpack.c.b16 %v2923, %v2922
        %v2943 = vpack.c.b16 %v2925, %v2924
        %v2944 = vpack.c.b16 %v2927, %v2926
        %v2945 = vpack.c.b16 %v2929, %v2928
        %v2947 = vsel %vm366, %v2930, 0
        %v2950 = vsel %vm366, %v2931, 0
        %v2953 = vsel %vm366, %v2932, 0
        %v2956 = vsel %vm366, %v2933, 0
        %v2959 = vsel %vm366, %v2934, 0
        %v2962 = vsel %vm366, %v2935, 0
        %v2965 = vsel %vm366, %v2936, 0
        %v2968 = vsel %vm366, %v2937, 0
        %v2971 = vsel %vm366, %v2938, 0
        %v2974 = vsel %vm366, %v2939, 0
        %v2977 = vsel %vm366, %v2940, 0
        %v2980 = vsel %vm366, %v2941, 0
        %v2983 = vsel %vm366, %v2942, 0
        %v2986 = vsel %vm366, %v2943, 0
        %v2989 = vsel %vm366, %v2944, 0
        %v2992 = vsel %vm366, %v2945, 0
        %v2995 = vsel %vm415, %v2897, 0
        %2997 = vmatprep.subr.bf16.mxu0 0
        %2998 = vmatpush1.bf16.msra.mxu0 %v2995
        %2999 = vmatprep.subr.bf16.mxu0 0
        %3000 = vmatpush1.bf16.msra.mxu0 0
        %3001 = vmatprep.subr.bf16.mxu0 0
        %3002 = vmatpush1.bf16.msra.mxu0 0
        %3003 = vmatprep.subr.bf16.mxu0 0
        %3004 = vmatpush1.bf16.msra.mxu0 0
        %3005 = vmatprep.subr.bf16.mxu0 0
        %3006 = vmatpush1.bf16.msra.mxu0 0
        %3007 = vmatprep.subr.bf16.mxu0 0
        %3008 = vmatpush1.bf16.msra.mxu0 0
        %3009 = vmatprep.subr.bf16.mxu0 0
        %3010 = vmatpush1.bf16.msra.mxu0 0
        %3011 = vmatprep.subr.bf16.mxu0 0
        %3012 = vmatpush1.bf16.msra.mxu0 0
        %3013 = vmatprep.subr.bf16.mxu0 0
        %3014 = vmatpush1.bf16.msra.mxu0 0
        %3015 = vmatprep.subr.bf16.mxu0 0
        %3016 = vmatpush1.bf16.msra.mxu0 0
        %3017 = vmatprep.subr.bf16.mxu0 0
        %3018 = vmatpush1.bf16.msra.mxu0 0
        %3019 = vmatprep.subr.bf16.mxu0 0
        %3020 = vmatpush1.bf16.msra.mxu0 0
        %3021 = vmatprep.subr.bf16.mxu0 0
        %3022 = vmatpush1.bf16.msra.mxu0 0
        %3023 = vmatprep.subr.bf16.mxu0 0
        %3024 = vmatpush1.bf16.msra.mxu0 0
        %3025 = vmatprep.subr.bf16.mxu0 0
        %3026 = vmatpush1.bf16.msra.mxu0 0
        %3027 = vmatprep.subr.bf16.mxu0 0
        %3028 = vmatpush1.bf16.msra.mxu0 0
        %3029 = vmatprep.mubr.bf16.mxu0 0
        %3030 = vmatmul.mubr.bf16.gmra.mrb[0].mxu0 %v2947
        %v3031 = vpop.f32.mrb[0].mxu0
        %v3032 = vadd.f32 0.0, %v3031
        %v3033 = vpop.f32.mrb[0].mxu0
        %v3034 = vpop.f32.mrb[0].mxu0
        %v3035 = vadd.f32 0.0, %v3034
        %v3036 = vpop.f32.mrb[0].mxu0
        %3037 = vmatprep.mubr.bf16.mxu0 0
        %3038 = vmatmul.mubr.bf16.gmra.mrb[0].mxu0 %v2950
        %v3039 = vpop.f32.mrb[0].mxu0
        %v3040 = vadd.f32 0.0, %v3039
        %v3041 = vpop.f32.mrb[0].mxu0
        %v3042 = vpop.f32.mrb[0].mxu0
        %v3043 = vadd.f32 0.0, %v3042
        %v3044 = vpop.f32.mrb[0].mxu0
        %3045 = vmatprep.mubr.bf16.mxu0 0
        %3046 = vmatmul.mubr.bf16.gmra.mrb[0].mxu0 %v2953
        %v3047 = vpop.f32.mrb[0].mxu0
        %v3048 = vadd.f32 0.0, %v3047
        %v3049 = vpop.f32.mrb[0].mxu0
        %v3050 = vpop.f32.mrb[0].mxu0
        %v3051 = vadd.f32 0.0, %v3050
        %v3052 = vpop.f32.mrb[0].mxu0
        %3053 = vmatprep.mubr.bf16.mxu0 0
        %3054 = vmatmul.mubr.bf16.gmra.mrb[0].mxu0 %v2956
        %v3055 = vpop.f32.mrb[0].mxu0
        %v3056 = vadd.f32 0.0, %v3055
        %v3057 = vpop.f32.mrb[0].mxu0
        %v3058 = vpop.f32.mrb[0].mxu0
        %v3059 = vadd.f32 0.0, %v3058
        %v3060 = vpop.f32.mrb[0].mxu0
        %3061 = vmatprep.mubr.bf16.mxu0 0
        %3062 = vmatmul.mubr.bf16.gmra.mrb[0].mxu0 %v2959
        %v3063 = vpop.f32.mrb[0].mxu0
        %v3064 = vadd.f32 0.0, %v3063
        %v3065 = vpop.f32.mrb[0].mxu0
        %v3066 = vpop.f32.mrb[0].mxu0
        %v3067 = vadd.f32 0.0, %v3066
        %v3068 = vpop.f32.mrb[0].mxu0
        %3069 = vmatprep.mubr.bf16.mxu0 0
        %3070 = vmatmul.mubr.bf16.gmra.mrb[0].mxu0 %v2962
        %v3071 = vpop.f32.mrb[0].mxu0
        %v3072 = vadd.f32 0.0, %v3071
        %v3073 = vpop.f32.mrb[0].mxu0
        %v3074 = vpop.f32.mrb[0].mxu0
        %v3075 = vadd.f32 0.0, %v3074
        %v3076 = vpop.f32.mrb[0].mxu0
        %3077 = vmatprep.mubr.bf16.mxu0 0
        %3078 = vmatmul.mubr.bf16.gmra.mrb[0].mxu0 %v2965
        %v3079 = vpop.f32.mrb[0].mxu0
        %v3080 = vadd.f32 0.0, %v3079
        %v3081 = vpop.f32.mrb[0].mxu0
        %v3082 = vpop.f32.mrb[0].mxu0
        %v3083 = vadd.f32 0.0, %v3082
        %v3084 = vpop.f32.mrb[0].mxu0
        %3085 = vmatprep.mubr.bf16.mxu0 0
        %3086 = vmatmul.mubr.bf16.gmra.mrb[0].mxu0 %v2968
        %v3087 = vpop.f32.mrb[0].mxu0
        %v3088 = vadd.f32 0.0, %v3087
        %v3089 = vpop.f32.mrb[0].mxu0
        %v3090 = vpop.f32.mrb[0].mxu0
        %v3091 = vadd.f32 0.0, %v3090
        %v3092 = vpop.f32.mrb[0].mxu0
        %3093 = vmatprep.mubr.bf16.mxu0 0
        %3094 = vmatmul.mubr.bf16.gmra.mrb[0].mxu0 %v2971
        %v3095 = vpop.f32.mrb[0].mxu0
        %v3096 = vadd.f32 0.0, %v3095
        %v3097 = vpop.f32.mrb[0].mxu0
        %v3098 = vpop.f32.mrb[0].mxu0
        %v3099 = vadd.f32 0.0, %v3098
        %v3100 = vpop.f32.mrb[0].mxu0
        %3101 = vmatprep.mubr.bf16.mxu0 0
        %3102 = vmatmul.mubr.bf16.gmra.mrb[0].mxu0 %v2974
        %v3103 = vpop.f32.mrb[0].mxu0
        %v3104 = vadd.f32 0.0, %v3103
        %v3105 = vpop.f32.mrb[0].mxu0
        %v3106 = vpop.f32.mrb[0].mxu0
        %v3107 = vadd.f32 0.0, %v3106
        %v3108 = vpop.f32.mrb[0].mxu0
        %3109 = vmatprep.mubr.bf16.mxu0 0
        %3110 = vmatmul.mubr.bf16.gmra.mrb[0].mxu0 %v2977
        %v3111 = vpop.f32.mrb[0].mxu0
        %v3112 = vadd.f32 0.0, %v3111
        %v3113 = vpop.f32.mrb[0].mxu0
        %v3114 = vpop.f32.mrb[0].mxu0
        %v3115 = vadd.f32 0.0, %v3114
        %v3116 = vpop.f32.mrb[0].mxu0
        %3117 = vmatprep.mubr.bf16.mxu0 0
        %3118 = vmatmul.mubr.bf16.gmra.mrb[0].mxu0 %v2980
        %v3119 = vpop.f32.mrb[0].mxu0
        %v3120 = vadd.f32 0.0, %v3119
        %v3121 = vpop.f32.mrb[0].mxu0
        %v3122 = vpop.f32.mrb[0].mxu0
        %v3123 = vadd.f32 0.0, %v3122
        %v3124 = vpop.f32.mrb[0].mxu0
        %3125 = vmatprep.mubr.bf16.mxu0 0
        %3126 = vmatmul.mubr.bf16.gmra.mrb[0].mxu0 %v2983
        %v3127 = vpop.f32.mrb[0].mxu0
        %v3128 = vadd.f32 0.0, %v3127
        %v3129 = vpop.f32.mrb[0].mxu0
        %v3130 = vpop.f32.mrb[0].mxu0
        %v3131 = vadd.f32 0.0, %v3130
        %v3132 = vpop.f32.mrb[0].mxu0
        %3133 = vmatprep.mubr.bf16.mxu0 0
        %3134 = vmatmul.mubr.bf16.gmra.mrb[0].mxu0 %v2986
        %v3135 = vpop.f32.mrb[0].mxu0
        %v3136 = vadd.f32 0.0, %v3135
        %v3137 = vpop.f32.mrb[0].mxu0
        %v3138 = vpop.f32.mrb[0].mxu0
        %v3139 = vadd.f32 0.0, %v3138
        %v3140 = vpop.f32.mrb[0].mxu0
        %3141 = vmatprep.mubr.bf16.mxu0 0
        %3142 = vmatmul.mubr.bf16.gmra.mrb[0].mxu0 %v2989
        %v3143 = vpop.f32.mrb[0].mxu0
        %v3144 = vadd.f32 0.0, %v3143
        %v3145 = vpop.f32.mrb[0].mxu0
        %v3146 = vpop.f32.mrb[0].mxu0
        %v3147 = vadd.f32 0.0, %v3146
        %v3148 = vpop.f32.mrb[0].mxu0
        %3149 = vmatprep.mubr.bf16.mxu0 0
        %3150 = vmatmul.mubr.bf16.gmra.mrb[0].mxu0 %v2992
        %v3151 = vpop.f32.mrb[0].mxu0
        %v3152 = vadd.f32 0.0, %v3151
        %v3153 = vpop.f32.mrb[0].mxu0
        %v3154 = vpop.f32.mrb[0].mxu0
        %v3155 = vadd.f32 0.0, %v3154
        %v3156 = vpop.f32.mrb[0].mxu0
        %3157 = vdwg.mxu0
        %v3158 = vadd.f32 %v2864, %v3032
        %v3159 = vadd.f32 %v2865, %v3035
        %v3160 = vadd.f32 %v2866, %v3040
        %v3161 = vadd.f32 %v2867, %v3043
        %v3162 = vadd.f32 %v2868, %v3048
        %v3163 = vadd.f32 %v2869, %v3051
        %v3164 = vadd.f32 %v2870, %v3056
        %v3165 = vadd.f32 %v2871, %v3059
        %v3166 = vadd.f32 %v2872, %v3064
        %v3167 = vadd.f32 %v2873, %v3067
        %v3168 = vadd.f32 %v2874, %v3072
        %v3169 = vadd.f32 %v2875, %v3075
        %v3170 = vadd.f32 %v2876, %v3080
        %v3171 = vadd.f32 %v2877, %v3083
        %v3172 = vadd.f32 %v2878, %v3088
        %v3173 = vadd.f32 %v2879, %v3091
        %v3174 = vadd.f32 %v2880, %v3096
        %v3175 = vadd.f32 %v2881, %v3099
        %v3176 = vadd.f32 %v2882, %v3104
        %v3177 = vadd.f32 %v2883, %v3107
        %v3178 = vadd.f32 %v2884, %v3112
        %v3179 = vadd.f32 %v2885, %v3115
        %v3180 = vadd.f32 %v2886, %v3120
        %v3181 = vadd.f32 %v2887, %v3123
        %v3182 = vadd.f32 %v2888, %v3128
        %v3183 = vadd.f32 %v2889, %v3131
        %v3184 = vadd.f32 %v2890, %v3136
        %v3185 = vadd.f32 %v2891, %v3139
        %v3186 = vadd.f32 %v2892, %v3144
        %v3187 = vadd.f32 %v2893, %v3147
        %v3188 = vadd.f32 %v2894, %v3152
        %v3189 = vadd.f32 %v2895, %v3155
        %3190 = vst [vmem:[#allocation2] sm:$0xff] %v3158
        %3191 = vst [vmem:[#allocation2 + $0x8] sm:$0xff] %v3159
        %3192 = vst [vmem:[#allocation2 + $0x10] sm:$0xff] %v3160
        %3193 = vst [vmem:[#allocation2 + $0x18] sm:$0xff] %v3161
        %3194 = vst [vmem:[#allocation2 + $0x20] sm:$0xff] %v3162
        %3195 = vst [vmem:[#allocation2 + $0x28] sm:$0xff] %v3163
        %3196 = vst [vmem:[#allocation2 + $0x30] sm:$0xff] %v3164
        %3197 = vst [vmem:[#allocation2 + $0x38] sm:$0xff] %v3165
        %3198 = vst [vmem:[#allocation2 + $0x40] sm:$0xff] %v3166
        %3199 = vst [vmem:[#allocation2 + $0x48] sm:$0xff] %v3167
        %3200 = vst [vmem:[#allocation2 + $0x50] sm:$0xff] %v3168
        %3201 = vst [vmem:[#allocation2 + $0x58] sm:$0xff] %v3169
        %3202 = vst [vmem:[#allocation2 + $0x60] sm:$0xff] %v3170
        %3203 = vst [vmem:[#allocation2 + $0x68] sm:$0xff] %v3171
        %3204 = vst [vmem:[#allocation2 + $0x70] sm:$0xff] %v3172
        %3205 = vst [vmem:[#allocation2 + $0x78] sm:$0xff] %v3173
        %3206 = vst [vmem:[#allocation2 + $0x80] sm:$0xff] %v3174
        %3207 = vst [vmem:[#allocation2 + $0x88] sm:$0xff] %v3175
        %3208 = vst [vmem:[#allocation2 + $0x90] sm:$0xff] %v3176
        %3209 = vst [vmem:[#allocation2 + $0x98] sm:$0xff] %v3177
        %3210 = vst [vmem:[#allocation2 + $0xa0] sm:$0xff] %v3178
        %3211 = vst [vmem:[#allocation2 + $0xa8] sm:$0xff] %v3179
        %3212 = vst [vmem:[#allocation2 + $0xb0] sm:$0xff] %v3180
        %3213 = vst [vmem:[#allocation2 + $0xb8] sm:$0xff] %v3181
        %3214 = vst [vmem:[#allocation2 + $0xc0] sm:$0xff] %v3182
        %3215 = vst [vmem:[#allocation2 + $0xc8] sm:$0xff] %v3183
        %3216 = vst [vmem:[#allocation2 + $0xd0] sm:$0xff] %v3184
        %3217 = vst [vmem:[#allocation2 + $0xd8] sm:$0xff] %v3185
        %3218 = vst [vmem:[#allocation2 + $0xe0] sm:$0xff] %v3186
        %3219 = vst [vmem:[#allocation2 + $0xe8] sm:$0xff] %v3187
        %3220 = vst [vmem:[#allocation2 + $0xf0] sm:$0xff] %v3188
        %3221 = vst [vmem:[#allocation2 + $0xf8] sm:$0xff] %v3189
        %v3222 = vld [vmem:[%s2009] sm:$0xe]
        %v3223 = vld [vmem:[%s2009 + $0x4] sm:$0xf]
        %v3224 = vld [vmem:[%s2009 + $0x8] sm:$0x1]
        %v3225 = vld [vmem:[%s2009 + $0xc] sm:$0xe]
        %v3226 = vld [vmem:[%s2009 + $0x10] sm:$0xf]
        %v3227 = vld [vmem:[%s2009 + $0x14] sm:$0x1]
        %v3228 = vld [vmem:[%s2009 + $0x18] sm:$0xe]
        %v3229 = vld [vmem:[%s2009 + $0x1c] sm:$0xf]
        %v3230 = vld [vmem:[%s2009 + $0x20] sm:$0x1]
        %v3231 = vld [vmem:[%s2009 + $0x24] sm:$0xe]
        %v3232 = vld [vmem:[%s2009 + $0x28] sm:$0xf]
        %v3233 = vld [vmem:[%s2009 + $0x2c] sm:$0x1]
        %v3234 = vld [vmem:[%s2009 + $0x30] sm:$0xe]
        %v3235 = vld [vmem:[%s2009 + $0x34] sm:$0xf]
        %v3236 = vld [vmem:[%s2009 + $0x38] sm:$0x1]
        %v3237 = vld [vmem:[%s2009 + $0x3c] sm:$0xe]
        %v3238 = vld [vmem:[%s2009 + $0x40] sm:$0xf]
        %v3239 = vld [vmem:[%s2009 + $0x44] sm:$0x1]
        %v3240 = vld [vmem:[%s2009 + $0x48] sm:$0xe]
        %v3241 = vld [vmem:[%s2009 + $0x4c] sm:$0xf]
        %v3242 = vld [vmem:[%s2009 + $0x50] sm:$0x1]
        %v3243 = vld [vmem:[%s2009 + $0x54] sm:$0xe]
        %v3244 = vld [vmem:[%s2009 + $0x58] sm:$0xf]
        %v3245 = vld [vmem:[%s2009 + $0x5c] sm:$0x1]
        %v3246 = vld [vmem:[%s2009 + $0x60] sm:$0xe]
        %v3247 = vld [vmem:[%s2009 + $0x64] sm:$0xf]
        %v3248 = vld [vmem:[%s2009 + $0x68] sm:$0x1]
        %v3249 = vld [vmem:[%s2009 + $0x6c] sm:$0xe]
        %v3250 = vld [vmem:[%s2009 + $0x70] sm:$0xf]
        %v3251 = vld [vmem:[%s2009 + $0x74] sm:$0x1]
        %v3252 = vld [vmem:[%s2009 + $0x78] sm:$0xe]
        %v3253 = vld [vmem:[%s2009 + $0x7c] sm:$0xf]
        %v3254 = vld [vmem:[%s2009 + $0x80] sm:$0x1]
        %v3255 = vld [vmem:[%s2009 + $0x84] sm:$0xe]
        %v3256 = vld [vmem:[%s2009 + $0x88] sm:$0xf]
        %v3257 = vld [vmem:[%s2009 + $0x8c] sm:$0x1]
        %v3258 = vld [vmem:[%s2009 + $0x90] sm:$0xe]
        %v3259 = vld [vmem:[%s2009 + $0x94] sm:$0xf]
        %v3260 = vld [vmem:[%s2009 + $0x98] sm:$0x1]
        %v3261 = vld [vmem:[%s2009 + $0x9c] sm:$0xe]
        %v3262 = vld [vmem:[%s2009 + $0xa0] sm:$0xf]
        %v3263 = vld [vmem:[%s2009 + $0xa4] sm:$0x1]
        %v3264 = vld [vmem:[%s2009 + $0xa8] sm:$0xe]
        %v3265 = vld [vmem:[%s2009 + $0xac] sm:$0xf]
        %v3266 = vld [vmem:[%s2009 + $0xb0] sm:$0x1]
        %v3267 = vld [vmem:[%s2009 + $0xb4] sm:$0xe]
        %v3268 = vld [vmem:[%s2009 + $0xb8] sm:$0xf]
        %v3269 = vld [vmem:[%s2009 + $0xbc] sm:$0x1]
        %v3318 = vrot.slane %v3222, 5
        %v3319 = vrot.slane %v3318, 4
        %v3320 = vrot.slane %v3223, 5
        %v3321 = vsel %vm1535, %v3319, %v3320
        %v3322 = vrot.slane %v3320, 4
        %v3323 = vrot.slane %v3224, 5
        %v3324 = vsel %vm1535, %v3322, %v3323
        %v3325 = vrot.slane %v3225, 5
        %v3326 = vrot.slane %v3325, 4
        %v3327 = vrot.slane %v3226, 5
        %v3328 = vsel %vm1535, %v3326, %v3327
        %v3329 = vrot.slane %v3327, 4
        %v3330 = vrot.slane %v3227, 5
        %v3331 = vsel %vm1535, %v3329, %v3330
        %v3332 = vrot.slane %v3228, 5
        %v3333 = vrot.slane %v3332, 4
        %v3334 = vrot.slane %v3229, 5
        %v3335 = vsel %vm1535, %v3333, %v3334
        %v3336 = vrot.slane %v3334, 4
        %v3337 = vrot.slane %v3230, 5
        %v3338 = vsel %vm1535, %v3336, %v3337
        %v3339 = vrot.slane %v3231, 5
        %v3340 = vrot.slane %v3339, 4
        %v3341 = vrot.slane %v3232, 5
        %v3342 = vsel %vm1535, %v3340, %v3341
        %v3343 = vrot.slane %v3341, 4
        %v3344 = vrot.slane %v3233, 5
        %v3345 = vsel %vm1535, %v3343, %v3344
        %v3346 = vrot.slane %v3234, 5
        %v3347 = vrot.slane %v3346, 4
        %v3348 = vrot.slane %v3235, 5
        %v3349 = vsel %vm1535, %v3347, %v3348
        %v3350 = vrot.slane %v3348, 4
        %v3351 = vrot.slane %v3236, 5
        %v3352 = vsel %vm1535, %v3350, %v3351
        %v3353 = vrot.slane %v3237, 5
        %v3354 = vrot.slane %v3353, 4
        %v3355 = vrot.slane %v3238, 5
        %v3356 = vsel %vm1535, %v3354, %v3355
        %v3357 = vrot.slane %v3355, 4
        %v3358 = vrot.slane %v3239, 5
        %v3359 = vsel %vm1535, %v3357, %v3358
        %v3360 = vrot.slane %v3240, 5
        %v3361 = vrot.slane %v3360, 4
        %v3362 = vrot.slane %v3241, 5
        %v3363 = vsel %vm1535, %v3361, %v3362
        %v3364 = vrot.slane %v3362, 4
        %v3365 = vrot.slane %v3242, 5
        %v3366 = vsel %vm1535, %v3364, %v3365
        %v3367 = vrot.slane %v3243, 5
        %v3368 = vrot.slane %v3367, 4
        %v3369 = vrot.slane %v3244, 5
        %v3370 = vsel %vm1535, %v3368, %v3369
        %v3371 = vrot.slane %v3369, 4
        %v3372 = vrot.slane %v3245, 5
        %v3373 = vsel %vm1535, %v3371, %v3372
        %v3374 = vrot.slane %v3246, 5
        %v3375 = vrot.slane %v3374, 4
        %v3376 = vrot.slane %v3247, 5
        %v3377 = vsel %vm1535, %v3375, %v3376
        %v3378 = vrot.slane %v3376, 4
        %v3379 = vrot.slane %v3248, 5
        %v3380 = vsel %vm1535, %v3378, %v3379
        %v3381 = vrot.slane %v3249, 5
        %v3382 = vrot.slane %v3381, 4
        %v3383 = vrot.slane %v3250, 5
        %v3384 = vsel %vm1535, %v3382, %v3383
        %v3385 = vrot.slane %v3383, 4
        %v3386 = vrot.slane %v3251, 5
        %v3387 = vsel %vm1535, %v3385, %v3386
        %v3388 = vrot.slane %v3252, 5
        %v3389 = vrot.slane %v3388, 4
        %v3390 = vrot.slane %v3253, 5
        %v3391 = vsel %vm1535, %v3389, %v3390
        %v3392 = vrot.slane %v3390, 4
        %v3393 = vrot.slane %v3254, 5
        %v3394 = vsel %vm1535, %v3392, %v3393
        %v3395 = vrot.slane %v3255, 5
        %v3396 = vrot.slane %v3395, 4
        %v3397 = vrot.slane %v3256, 5
        %v3398 = vsel %vm1535, %v3396, %v3397
        %v3399 = vrot.slane %v3397, 4
        %v3400 = vrot.slane %v3257, 5
        %v3401 = vsel %vm1535, %v3399, %v3400
        %v3402 = vrot.slane %v3258, 5
        %v3403 = vrot.slane %v3402, 4
        %v3404 = vrot.slane %v3259, 5
        %v3405 = vsel %vm1535, %v3403, %v3404
        %v3406 = vrot.slane %v3404, 4
        %v3407 = vrot.slane %v3260, 5
        %v3408 = vsel %vm1535, %v3406, %v3407
        %v3409 = vrot.slane %v3261, 5
        %v3410 = vrot.slane %v3409, 4
        %v3411 = vrot.slane %v3262, 5
        %v3412 = vsel %vm1535, %v3410, %v3411
        %v3413 = vrot.slane %v3411, 4
        %v3414 = vrot.slane %v3263, 5
        %v3415 = vsel %vm1535, %v3413, %v3414
        %v3416 = vrot.slane %v3264, 5
        %v3417 = vrot.slane %v3416, 4
        %v3418 = vrot.slane %v3265, 5
        %v3419 = vsel %vm1535, %v3417, %v3418
        %v3420 = vrot.slane %v3418, 4
        %v3421 = vrot.slane %v3266, 5
        %v3422 = vsel %vm1535, %v3420, %v3421
        %v3423 = vrot.slane %v3267, 5
        %v3424 = vrot.slane %v3423, 4
        %v3425 = vrot.slane %v3268, 5
        %v3426 = vsel %vm1535, %v3424, %v3425
        %v3427 = vrot.slane %v3425, 4
        %v3428 = vrot.slane %v3269, 5
        %v3429 = vsel %vm1535, %v3427, %v3428
        %v3430 = vld [vmem:[#allocation2] sm:$0xff]
        %v3431 = vld [vmem:[#allocation2 + $0x8] sm:$0xff]
        %v3432 = vld [vmem:[#allocation2 + $0x10] sm:$0xff]
        %v3433 = vld [vmem:[#allocation2 + $0x18] sm:$0xff]
        %v3434 = vld [vmem:[#allocation2 + $0x20] sm:$0xff]
        %v3435 = vld [vmem:[#allocation2 + $0x28] sm:$0xff]
        %v3436 = vld [vmem:[#allocation2 + $0x30] sm:$0xff]
        %v3437 = vld [vmem:[#allocation2 + $0x38] sm:$0xff]
        %v3438 = vld [vmem:[#allocation2 + $0x40] sm:$0xff]
        %v3439 = vld [vmem:[#allocation2 + $0x48] sm:$0xff]
        %v3440 = vld [vmem:[#allocation2 + $0x50] sm:$0xff]
        %v3441 = vld [vmem:[#allocation2 + $0x58] sm:$0xff]
        %v3442 = vld [vmem:[#allocation2 + $0x60] sm:$0xff]
        %v3443 = vld [vmem:[#allocation2 + $0x68] sm:$0xff]
        %v3444 = vld [vmem:[#allocation2 + $0x70] sm:$0xff]
        %v3445 = vld [vmem:[#allocation2 + $0x78] sm:$0xff]
        %v3446 = vld [vmem:[#allocation2 + $0x80] sm:$0xff]
        %v3447 = vld [vmem:[#allocation2 + $0x88] sm:$0xff]
        %v3448 = vld [vmem:[#allocation2 + $0x90] sm:$0xff]
        %v3449 = vld [vmem:[#allocation2 + $0x98] sm:$0xff]
        %v3450 = vld [vmem:[#allocation2 + $0xa0] sm:$0xff]
        %v3451 = vld [vmem:[#allocation2 + $0xa8] sm:$0xff]
        %v3452 = vld [vmem:[#allocation2 + $0xb0] sm:$0xff]
        %v3453 = vld [vmem:[#allocation2 + $0xb8] sm:$0xff]
        %v3454 = vld [vmem:[#allocation2 + $0xc0] sm:$0xff]
        %v3455 = vld [vmem:[#allocation2 + $0xc8] sm:$0xff]
        %v3456 = vld [vmem:[#allocation2 + $0xd0] sm:$0xff]
        %v3457 = vld [vmem:[#allocation2 + $0xd8] sm:$0xff]
        %v3458 = vld [vmem:[#allocation2 + $0xe0] sm:$0xff]
        %v3459 = vld [vmem:[#allocation2 + $0xe8] sm:$0xff]
        %v3460 = vld [vmem:[#allocation2 + $0xf0] sm:$0xff]
        %v3461 = vld [vmem:[#allocation2 + $0xf8] sm:$0xff]
        %s3462 = scalar_lea.vmem %s1, 10
        %v3463 = vld [vmem:[%s3462] sm:$0x3]
        %v3464 = vunpack.c.l.b16 %v3321
        %v3465 = vunpack.c.l.b16 %v3324
        %v3466 = vunpack.c.l.b16 %v3328
        %v3467 = vunpack.c.l.b16 %v3331
        %v3468 = vunpack.c.l.b16 %v3335
        %v3469 = vunpack.c.l.b16 %v3338
        %v3470 = vunpack.c.l.b16 %v3342
        %v3471 = vunpack.c.l.b16 %v3345
        %v3472 = vunpack.c.l.b16 %v3349
        %v3473 = vunpack.c.l.b16 %v3352
        %v3474 = vunpack.c.l.b16 %v3356
        %v3475 = vunpack.c.l.b16 %v3359
        %v3476 = vunpack.c.l.b16 %v3363
        %v3477 = vunpack.c.l.b16 %v3366
        %v3478 = vunpack.c.l.b16 %v3370
        %v3479 = vunpack.c.l.b16 %v3373
        %v3480 = vunpack.c.l.b16 %v3377
        %v3481 = vunpack.c.l.b16 %v3380
        %v3482 = vunpack.c.l.b16 %v3384
        %v3483 = vunpack.c.l.b16 %v3387
        %v3484 = vunpack.c.l.b16 %v3391
        %v3485 = vunpack.c.l.b16 %v3394
        %v3486 = vunpack.c.l.b16 %v3398
        %v3487 = vunpack.c.l.b16 %v3401
        %v3488 = vunpack.c.l.b16 %v3405
        %v3489 = vunpack.c.l.b16 %v3408
        %v3490 = vunpack.c.l.b16 %v3412
        %v3491 = vunpack.c.l.b16 %v3415
        %v3492 = vunpack.c.l.b16 %v3419
        %v3493 = vunpack.c.l.b16 %v3422
        %v3494 = vunpack.c.l.b16 %v3426
        %v3495 = vunpack.c.l.b16 %v3429
        %v3496 = vpack.c.b16 %v3465, %v3464
        %v3497 = vpack.c.b16 %v3467, %v3466
        %v3498 = vpack.c.b16 %v3469, %v3468
        %v3499 = vpack.c.b16 %v3471, %v3470
        %v3500 = vpack.c.b16 %v3473, %v3472
        %v3501 = vpack.c.b16 %v3475, %v3474
        %v3502 = vpack.c.b16 %v3477, %v3476
        %v3503 = vpack.c.b16 %v3479, %v3478
        %v3504 = vpack.c.b16 %v3481, %v3480
        %v3505 = vpack.c.b16 %v3483, %v3482
        %v3506 = vpack.c.b16 %v3485, %v3484
        %v3507 = vpack.c.b16 %v3487, %v3486
        %v3508 = vpack.c.b16 %v3489, %v3488
        %v3509 = vpack.c.b16 %v3491, %v3490
        %v3510 = vpack.c.b16 %v3493, %v3492
        %v3511 = vpack.c.b16 %v3495, %v3494
        %v3513 = vsel %vm366, %v3496, 0
        %v3516 = vsel %vm366, %v3497, 0
        %v3519 = vsel %vm366, %v3498, 0
        %v3522 = vsel %vm366, %v3499, 0
        %v3525 = vsel %vm366, %v3500, 0
        %v3528 = vsel %vm366, %v3501, 0
        %v3531 = vsel %vm366, %v3502, 0
        %v3534 = vsel %vm366, %v3503, 0
        %v3537 = vsel %vm366, %v3504, 0
        %v3540 = vsel %vm366, %v3505, 0
        %v3543 = vsel %vm366, %v3506, 0
        %v3546 = vsel %vm366, %v3507, 0
        %v3549 = vsel %vm366, %v3508, 0
        %v3552 = vsel %vm366, %v3509, 0
        %v3555 = vsel %vm366, %v3510, 0
        %v3558 = vsel %vm366, %v3511, 0
        %v3561 = vsel %vm415, %v3463, 0
        %3563 = vmatprep.subr.bf16.mxu0 0
        %3564 = vmatpush1.bf16.msra.mxu0 %v3561
        %3565 = vmatprep.subr.bf16.mxu0 0
        %3566 = vmatpush1.bf16.msra.mxu0 0
        %3567 = vmatprep.subr.bf16.mxu0 0
        %3568 = vmatpush1.bf16.msra.mxu0 0
        %3569 = vmatprep.subr.bf16.mxu0 0
        %3570 = vmatpush1.bf16.msra.mxu0 0
        %3571 = vmatprep.subr.bf16.mxu0 0
        %3572 = vmatpush1.bf16.msra.mxu0 0
        %3573 = vmatprep.subr.bf16.mxu0 0
        %3574 = vmatpush1.bf16.msra.mxu0 0
        %3575 = vmatprep.subr.bf16.mxu0 0
        %3576 = vmatpush1.bf16.msra.mxu0 0
        %3577 = vmatprep.subr.bf16.mxu0 0
        %3578 = vmatpush1.bf16.msra.mxu0 0
        %3579 = vmatprep.subr.bf16.mxu0 0
        %3580 = vmatpush1.bf16.msra.mxu0 0
        %3581 = vmatprep.subr.bf16.mxu0 0
        %3582 = vmatpush1.bf16.msra.mxu0 0
        %3583 = vmatprep.subr.bf16.mxu0 0
        %3584 = vmatpush1.bf16.msra.mxu0 0
        %3585 = vmatprep.subr.bf16.mxu0 0
        %3586 = vmatpush1.bf16.msra.mxu0 0
        %3587 = vmatprep.subr.bf16.mxu0 0
        %3588 = vmatpush1.bf16.msra.mxu0 0
        %3589 = vmatprep.subr.bf16.mxu0 0
        %3590 = vmatpush1.bf16.msra.mxu0 0
        %3591 = vmatprep.subr.bf16.mxu0 0
        %3592 = vmatpush1.bf16.msra.mxu0 0
        %3593 = vmatprep.subr.bf16.mxu0 0
        %3594 = vmatpush1.bf16.msra.mxu0 0
        %3595 = vmatprep.mubr.bf16.mxu0 0
        %3596 = vmatmul.mubr.bf16.gmra.mrb[0].mxu0 %v3513
        %v3597 = vpop.f32.mrb[0].mxu0
        %v3598 = vadd.f32 0.0, %v3597
        %v3599 = vpop.f32.mrb[0].mxu0
        %v3600 = vpop.f32.mrb[0].mxu0
        %v3601 = vadd.f32 0.0, %v3600
        %v3602 = vpop.f32.mrb[0].mxu0
        %3603 = vmatprep.mubr.bf16.mxu0 0
        %3604 = vmatmul.mubr.bf16.gmra.mrb[0].mxu0 %v3516
        %v3605 = vpop.f32.mrb[0].mxu0
        %v3606 = vadd.f32 0.0, %v3605
        %v3607 = vpop.f32.mrb[0].mxu0
        %v3608 = vpop.f32.mrb[0].mxu0
        %v3609 = vadd.f32 0.0, %v3608
        %v3610 = vpop.f32.mrb[0].mxu0
        %3611 = vmatprep.mubr.bf16.mxu0 0
        %3612 = vmatmul.mubr.bf16.gmra.mrb[0].mxu0 %v3519
        %v3613 = vpop.f32.mrb[0].mxu0
        %v3614 = vadd.f32 0.0, %v3613
        %v3615 = vpop.f32.mrb[0].mxu0
        %v3616 = vpop.f32.mrb[0].mxu0
        %v3617 = vadd.f32 0.0, %v3616
        %v3618 = vpop.f32.mrb[0].mxu0
        %3619 = vmatprep.mubr.bf16.mxu0 0
        %3620 = vmatmul.mubr.bf16.gmra.mrb[0].mxu0 %v3522
        %v3621 = vpop.f32.mrb[0].mxu0
        %v3622 = vadd.f32 0.0, %v3621
        %v3623 = vpop.f32.mrb[0].mxu0
        %v3624 = vpop.f32.mrb[0].mxu0
        %v3625 = vadd.f32 0.0, %v3624
        %v3626 = vpop.f32.mrb[0].mxu0
        %3627 = vmatprep.mubr.bf16.mxu0 0
        %3628 = vmatmul.mubr.bf16.gmra.mrb[0].mxu0 %v3525
        %v3629 = vpop.f32.mrb[0].mxu0
        %v3630 = vadd.f32 0.0, %v3629
        %v3631 = vpop.f32.mrb[0].mxu0
        %v3632 = vpop.f32.mrb[0].mxu0
        %v3633 = vadd.f32 0.0, %v3632
        %v3634 = vpop.f32.mrb[0].mxu0
        %3635 = vmatprep.mubr.bf16.mxu0 0
        %3636 = vmatmul.mubr.bf16.gmra.mrb[0].mxu0 %v3528
        %v3637 = vpop.f32.mrb[0].mxu0
        %v3638 = vadd.f32 0.0, %v3637
        %v3639 = vpop.f32.mrb[0].mxu0
        %v3640 = vpop.f32.mrb[0].mxu0
        %v3641 = vadd.f32 0.0, %v3640
        %v3642 = vpop.f32.mrb[0].mxu0
        %3643 = vmatprep.mubr.bf16.mxu0 0
        %3644 = vmatmul.mubr.bf16.gmra.mrb[0].mxu0 %v3531
        %v3645 = vpop.f32.mrb[0].mxu0
        %v3646 = vadd.f32 0.0, %v3645
        %v3647 = vpop.f32.mrb[0].mxu0
        %v3648 = vpop.f32.mrb[0].mxu0
        %v3649 = vadd.f32 0.0, %v3648
        %v3650 = vpop.f32.mrb[0].mxu0
        %3651 = vmatprep.mubr.bf16.mxu0 0
        %3652 = vmatmul.mubr.bf16.gmra.mrb[0].mxu0 %v3534
        %v3653 = vpop.f32.mrb[0].mxu0
        %v3654 = vadd.f32 0.0, %v3653
        %v3655 = vpop.f32.mrb[0].mxu0
        %v3656 = vpop.f32.mrb[0].mxu0
        %v3657 = vadd.f32 0.0, %v3656
        %v3658 = vpop.f32.mrb[0].mxu0
        %3659 = vmatprep.mubr.bf16.mxu0 0
        %3660 = vmatmul.mubr.bf16.gmra.mrb[0].mxu0 %v3537
        %v3661 = vpop.f32.mrb[0].mxu0
        %v3662 = vadd.f32 0.0, %v3661
        %v3663 = vpop.f32.mrb[0].mxu0
        %v3664 = vpop.f32.mrb[0].mxu0
        %v3665 = vadd.f32 0.0, %v3664
        %v3666 = vpop.f32.mrb[0].mxu0
        %3667 = vmatprep.mubr.bf16.mxu0 0
        %3668 = vmatmul.mubr.bf16.gmra.mrb[0].mxu0 %v3540
        %v3669 = vpop.f32.mrb[0].mxu0
        %v3670 = vadd.f32 0.0, %v3669
        %v3671 = vpop.f32.mrb[0].mxu0
        %v3672 = vpop.f32.mrb[0].mxu0
        %v3673 = vadd.f32 0.0, %v3672
        %v3674 = vpop.f32.mrb[0].mxu0
        %3675 = vmatprep.mubr.bf16.mxu0 0
        %3676 = vmatmul.mubr.bf16.gmra.mrb[0].mxu0 %v3543
        %v3677 = vpop.f32.mrb[0].mxu0
        %v3678 = vadd.f32 0.0, %v3677
        %v3679 = vpop.f32.mrb[0].mxu0
        %v3680 = vpop.f32.mrb[0].mxu0
        %v3681 = vadd.f32 0.0, %v3680
        %v3682 = vpop.f32.mrb[0].mxu0
        %3683 = vmatprep.mubr.bf16.mxu0 0
        %3684 = vmatmul.mubr.bf16.gmra.mrb[0].mxu0 %v3546
        %v3685 = vpop.f32.mrb[0].mxu0
        %v3686 = vadd.f32 0.0, %v3685
        %v3687 = vpop.f32.mrb[0].mxu0
        %v3688 = vpop.f32.mrb[0].mxu0
        %v3689 = vadd.f32 0.0, %v3688
        %v3690 = vpop.f32.mrb[0].mxu0
        %3691 = vmatprep.mubr.bf16.mxu0 0
        %3692 = vmatmul.mubr.bf16.gmra.mrb[0].mxu0 %v3549
        %v3693 = vpop.f32.mrb[0].mxu0
        %v3694 = vadd.f32 0.0, %v3693
        %v3695 = vpop.f32.mrb[0].mxu0
        %v3696 = vpop.f32.mrb[0].mxu0
        %v3697 = vadd.f32 0.0, %v3696
        %v3698 = vpop.f32.mrb[0].mxu0
        %3699 = vmatprep.mubr.bf16.mxu0 0
        %3700 = vmatmul.mubr.bf16.gmra.mrb[0].mxu0 %v3552
        %v3701 = vpop.f32.mrb[0].mxu0
        %v3702 = vadd.f32 0.0, %v3701
        %v3703 = vpop.f32.mrb[0].mxu0
        %v3704 = vpop.f32.mrb[0].mxu0
        %v3705 = vadd.f32 0.0, %v3704
        %v3706 = vpop.f32.mrb[0].mxu0
        %3707 = vmatprep.mubr.bf16.mxu0 0
        %3708 = vmatmul.mubr.bf16.gmra.mrb[0].mxu0 %v3555
        %v3709 = vpop.f32.mrb[0].mxu0
        %v3710 = vadd.f32 0.0, %v3709
        %v3711 = vpop.f32.mrb[0].mxu0
        %v3712 = vpop.f32.mrb[0].mxu0
        %v3713 = vadd.f32 0.0, %v3712
        %v3714 = vpop.f32.mrb[0].mxu0
        %3715 = vmatprep.mubr.bf16.mxu0 0
        %3716 = vmatmul.mubr.bf16.gmra.mrb[0].mxu0 %v3558
        %v3717 = vpop.f32.mrb[0].mxu0
        %v3718 = vadd.f32 0.0, %v3717
        %v3719 = vpop.f32.mrb[0].mxu0
        %v3720 = vpop.f32.mrb[0].mxu0
        %v3721 = vadd.f32 0.0, %v3720
        %v3722 = vpop.f32.mrb[0].mxu0
        %3723 = vdwg.mxu0
        %v3724 = vadd.f32 %v3430, %v3598
        %v3725 = vadd.f32 %v3431, %v3601
        %v3726 = vadd.f32 %v3432, %v3606
        %v3727 = vadd.f32 %v3433, %v3609
        %v3728 = vadd.f32 %v3434, %v3614
        %v3729 = vadd.f32 %v3435, %v3617
        %v3730 = vadd.f32 %v3436, %v3622
        %v3731 = vadd.f32 %v3437, %v3625
        %v3732 = vadd.f32 %v3438, %v3630
        %v3733 = vadd.f32 %v3439, %v3633
        %v3734 = vadd.f32 %v3440, %v3638
        %v3735 = vadd.f32 %v3441, %v3641
        %v3736 = vadd.f32 %v3442, %v3646
        %v3737 = vadd.f32 %v3443, %v3649
        %v3738 = vadd.f32 %v3444, %v3654
        %v3739 = vadd.f32 %v3445, %v3657
        %v3740 = vadd.f32 %v3446, %v3662
        %v3741 = vadd.f32 %v3447, %v3665
        %v3742 = vadd.f32 %v3448, %v3670
        %v3743 = vadd.f32 %v3449, %v3673
        %v3744 = vadd.f32 %v3450, %v3678
        %v3745 = vadd.f32 %v3451, %v3681
        %v3746 = vadd.f32 %v3452, %v3686
        %v3747 = vadd.f32 %v3453, %v3689
        %v3748 = vadd.f32 %v3454, %v3694
        %v3749 = vadd.f32 %v3455, %v3697
        %v3750 = vadd.f32 %v3456, %v3702
        %v3751 = vadd.f32 %v3457, %v3705
        %v3752 = vadd.f32 %v3458, %v3710
        %v3753 = vadd.f32 %v3459, %v3713
        %v3754 = vadd.f32 %v3460, %v3718
        %v3755 = vadd.f32 %v3461, %v3721
        %3756 = vst [vmem:[#allocation2] sm:$0xff] %v3724
        %3757 = vst [vmem:[#allocation2 + $0x8] sm:$0xff] %v3725
        %3758 = vst [vmem:[#allocation2 + $0x10] sm:$0xff] %v3726
        %3759 = vst [vmem:[#allocation2 + $0x18] sm:$0xff] %v3727
        %3760 = vst [vmem:[#allocation2 + $0x20] sm:$0xff] %v3728
        %3761 = vst [vmem:[#allocation2 + $0x28] sm:$0xff] %v3729
        %3762 = vst [vmem:[#allocation2 + $0x30] sm:$0xff] %v3730
        %3763 = vst [vmem:[#allocation2 + $0x38] sm:$0xff] %v3731
        %3764 = vst [vmem:[#allocation2 + $0x40] sm:$0xff] %v3732
        %3765 = vst [vmem:[#allocation2 + $0x48] sm:$0xff] %v3733
        %3766 = vst [vmem:[#allocation2 + $0x50] sm:$0xff] %v3734
        %3767 = vst [vmem:[#allocation2 + $0x58] sm:$0xff] %v3735
        %3768 = vst [vmem:[#allocation2 + $0x60] sm:$0xff] %v3736
        %3769 = vst [vmem:[#allocation2 + $0x68] sm:$0xff] %v3737
        %3770 = vst [vmem:[#allocation2 + $0x70] sm:$0xff] %v3738
        %3771 = vst [vmem:[#allocation2 + $0x78] sm:$0xff] %v3739
        %3772 = vst [vmem:[#allocation2 + $0x80] sm:$0xff] %v3740
        %3773 = vst [vmem:[#allocation2 + $0x88] sm:$0xff] %v3741
        %3774 = vst [vmem:[#allocation2 + $0x90] sm:$0xff] %v3742
        %3775 = vst [vmem:[#allocation2 + $0x98] sm:$0xff] %v3743
        %3776 = vst [vmem:[#allocation2 + $0xa0] sm:$0xff] %v3744
        %3777 = vst [vmem:[#allocation2 + $0xa8] sm:$0xff] %v3745
        %3778 = vst [vmem:[#allocation2 + $0xb0] sm:$0xff] %v3746
        %3779 = vst [vmem:[#allocation2 + $0xb8] sm:$0xff] %v3747
        %3780 = vst [vmem:[#allocation2 + $0xc0] sm:$0xff] %v3748
        %3781 = vst [vmem:[#allocation2 + $0xc8] sm:$0xff] %v3749
        %3782 = vst [vmem:[#allocation2 + $0xd0] sm:$0xff] %v3750
        %3783 = vst [vmem:[#allocation2 + $0xd8] sm:$0xff] %v3751
        %3784 = vst [vmem:[#allocation2 + $0xe0] sm:$0xff] %v3752
        %3785 = vst [vmem:[#allocation2 + $0xe8] sm:$0xff] %v3753
        %3786 = vst [vmem:[#allocation2 + $0xf0] sm:$0xff] %v3754
        %3787 = vst [vmem:[#allocation2 + $0xf8] sm:$0xff] %v3755
        %s3788 = sadd.s32 %s217, 2
        %s3789 = smul.u32 %s3788, 3
        %s3790 = smul.addr %s3789, 4
        %s3791 = scalar_lea.vmem %s182, %s3790
        %v3792 = vld [vmem:[%s3791] sm:$0xf]
        %v3793 = vld [vmem:[%s3791 + $0x4] sm:$0xf]
        %v3794 = vld [vmem:[%s3791 + $0xc] sm:$0xf]
        %v3795 = vld [vmem:[%s3791 + $0x10] sm:$0xf]
        %v3796 = vld [vmem:[%s3791 + $0x18] sm:$0xf]
        %v3797 = vld [vmem:[%s3791 + $0x1c] sm:$0xf]
        %v3798 = vld [vmem:[%s3791 + $0x24] sm:$0xf]
        %v3799 = vld [vmem:[%s3791 + $0x28] sm:$0xf]
        %v3800 = vld [vmem:[%s3791 + $0x30] sm:$0xf]
        %v3801 = vld [vmem:[%s3791 + $0x34] sm:$0xf]
        %v3802 = vld [vmem:[%s3791 + $0x3c] sm:$0xf]
        %v3803 = vld [vmem:[%s3791 + $0x40] sm:$0xf]
        %v3804 = vld [vmem:[%s3791 + $0x48] sm:$0xf]
        %v3805 = vld [vmem:[%s3791 + $0x4c] sm:$0xf]
        %v3806 = vld [vmem:[%s3791 + $0x54] sm:$0xf]
        %v3807 = vld [vmem:[%s3791 + $0x58] sm:$0xf]
        %v3808 = vld [vmem:[%s3791 + $0x60] sm:$0xf]
        %v3809 = vld [vmem:[%s3791 + $0x64] sm:$0xf]
        %v3810 = vld [vmem:[%s3791 + $0x6c] sm:$0xf]
        %v3811 = vld [vmem:[%s3791 + $0x70] sm:$0xf]
        %v3812 = vld [vmem:[%s3791 + $0x78] sm:$0xf]
        %v3813 = vld [vmem:[%s3791 + $0x7c] sm:$0xf]
        %v3814 = vld [vmem:[%s3791 + $0x84] sm:$0xf]
        %v3815 = vld [vmem:[%s3791 + $0x88] sm:$0xf]
        %v3816 = vld [vmem:[%s3791 + $0x90] sm:$0xf]
        %v3817 = vld [vmem:[%s3791 + $0x94] sm:$0xf]
        %v3818 = vld [vmem:[%s3791 + $0x9c] sm:$0xf]
        %v3819 = vld [vmem:[%s3791 + $0xa0] sm:$0xf]
        %v3820 = vld [vmem:[%s3791 + $0xa8] sm:$0xf]
        %v3821 = vld [vmem:[%s3791 + $0xac] sm:$0xf]
        %v3822 = vld [vmem:[%s3791 + $0xb4] sm:$0xf]
        %v3823 = vld [vmem:[%s3791 + $0xb8] sm:$0xf]
        %v3824 = vld [vmem:[#allocation2] sm:$0xff]
        %v3825 = vld [vmem:[#allocation2 + $0x8] sm:$0xff]
        %v3826 = vld [vmem:[#allocation2 + $0x10] sm:$0xff]
        %v3827 = vld [vmem:[#allocation2 + $0x18] sm:$0xff]
        %v3828 = vld [vmem:[#allocation2 + $0x20] sm:$0xff]
        %v3829 = vld [vmem:[#allocation2 + $0x28] sm:$0xff]
        %v3830 = vld [vmem:[#allocation2 + $0x30] sm:$0xff]
        %v3831 = vld [vmem:[#allocation2 + $0x38] sm:$0xff]
        %v3832 = vld [vmem:[#allocation2 + $0x40] sm:$0xff]
        %v3833 = vld [vmem:[#allocation2 + $0x48] sm:$0xff]
        %v3834 = vld [vmem:[#allocation2 + $0x50] sm:$0xff]
        %v3835 = vld [vmem:[#allocation2 + $0x58] sm:$0xff]
        %v3836 = vld [vmem:[#allocation2 + $0x60] sm:$0xff]
        %v3837 = vld [vmem:[#allocation2 + $0x68] sm:$0xff]
        %v3838 = vld [vmem:[#allocation2 + $0x70] sm:$0xff]
        %v3839 = vld [vmem:[#allocation2 + $0x78] sm:$0xff]
        %v3840 = vld [vmem:[#allocation2 + $0x80] sm:$0xff]
        %v3841 = vld [vmem:[#allocation2 + $0x88] sm:$0xff]
        %v3842 = vld [vmem:[#allocation2 + $0x90] sm:$0xff]
        %v3843 = vld [vmem:[#allocation2 + $0x98] sm:$0xff]
        %v3844 = vld [vmem:[#allocation2 + $0xa0] sm:$0xff]
        %v3845 = vld [vmem:[#allocation2 + $0xa8] sm:$0xff]
        %v3846 = vld [vmem:[#allocation2 + $0xb0] sm:$0xff]
        %v3847 = vld [vmem:[#allocation2 + $0xb8] sm:$0xff]
        %v3848 = vld [vmem:[#allocation2 + $0xc0] sm:$0xff]
        %v3849 = vld [vmem:[#allocation2 + $0xc8] sm:$0xff]
        %v3850 = vld [vmem:[#allocation2 + $0xd0] sm:$0xff]
        %v3851 = vld [vmem:[#allocation2 + $0xd8] sm:$0xff]
        %v3852 = vld [vmem:[#allocation2 + $0xe0] sm:$0xff]
        %v3853 = vld [vmem:[#allocation2 + $0xe8] sm:$0xff]
        %v3854 = vld [vmem:[#allocation2 + $0xf0] sm:$0xff]
        %v3855 = vld [vmem:[#allocation2 + $0xf8] sm:$0xff]
        %s3856 = scalar_lea.vmem %s1, 12
        %v3857 = vld [vmem:[%s3856] sm:$0x3]
        %v3890 = vunpack.c.l.b16 %v3792
        %v3891 = vunpack.c.l.b16 %v3793
        %v3892 = vunpack.c.l.b16 %v3794
        %v3893 = vunpack.c.l.b16 %v3795
        %v3894 = vunpack.c.l.b16 %v3796
        %v3895 = vunpack.c.l.b16 %v3797
        %v3896 = vunpack.c.l.b16 %v3798
        %v3897 = vunpack.c.l.b16 %v3799
        %v3898 = vunpack.c.l.b16 %v3800
        %v3899 = vunpack.c.l.b16 %v3801
        %v3900 = vunpack.c.l.b16 %v3802
        %v3901 = vunpack.c.l.b16 %v3803
        %v3902 = vunpack.c.l.b16 %v3804
        %v3903 = vunpack.c.l.b16 %v3805
        %v3904 = vunpack.c.l.b16 %v3806
        %v3905 = vunpack.c.l.b16 %v3807
        %v3906 = vunpack.c.l.b16 %v3808
        %v3907 = vunpack.c.l.b16 %v3809
        %v3908 = vunpack.c.l.b16 %v3810
        %v3909 = vunpack.c.l.b16 %v3811
        %v3910 = vunpack.c.l.b16 %v3812
        %v3911 = vunpack.c.l.b16 %v3813
        %v3912 = vunpack.c.l.b16 %v3814
        %v3913 = vunpack.c.l.b16 %v3815
        %v3914 = vunpack.c.l.b16 %v3816
        %v3915 = vunpack.c.l.b16 %v3817
        %v3916 = vunpack.c.l.b16 %v3818
        %v3917 = vunpack.c.l.b16 %v3819
        %v3918 = vunpack.c.l.b16 %v3820
        %v3919 = vunpack.c.l.b16 %v3821
        %v3920 = vunpack.c.l.b16 %v3822
        %v3921 = vunpack.c.l.b16 %v3823
        %v3922 = vpack.c.b16 %v3891, %v3890
        %v3923 = vpack.c.b16 %v3893, %v3892
        %v3924 = vpack.c.b16 %v3895, %v3894
        %v3925 = vpack.c.b16 %v3897, %v3896
        %v3926 = vpack.c.b16 %v3899, %v3898
        %v3927 = vpack.c.b16 %v3901, %v3900
        %v3928 = vpack.c.b16 %v3903, %v3902
        %v3929 = vpack.c.b16 %v3905, %v3904
        %v3930 = vpack.c.b16 %v3907, %v3906
        %v3931 = vpack.c.b16 %v3909, %v3908
        %v3932 = vpack.c.b16 %v3911, %v3910
        %v3933 = vpack.c.b16 %v3913, %v3912
        %v3934 = vpack.c.b16 %v3915, %v3914
        %v3935 = vpack.c.b16 %v3917, %v3916
        %v3936 = vpack.c.b16 %v3919, %v3918
        %v3937 = vpack.c.b16 %v3921, %v3920
        %v3939 = vsel %vm366, %v3922, 0
        %v3942 = vsel %vm366, %v3923, 0
        %v3945 = vsel %vm366, %v3924, 0
        %v3948 = vsel %vm366, %v3925, 0
        %v3951 = vsel %vm366, %v3926, 0
        %v3954 = vsel %vm366, %v3927, 0
        %v3957 = vsel %vm366, %v3928, 0
        %v3960 = vsel %vm366, %v3929, 0
        %v3963 = vsel %vm366, %v3930, 0
        %v3966 = vsel %vm366, %v3931, 0
        %v3969 = vsel %vm366, %v3932, 0
        %v3972 = vsel %vm366, %v3933, 0
        %v3975 = vsel %vm366, %v3934, 0
        %v3978 = vsel %vm366, %v3935, 0
        %v3981 = vsel %vm366, %v3936, 0
        %v3984 = vsel %vm366, %v3937, 0
        %v3987 = vsel %vm415, %v3857, 0
        %3989 = vmatprep.subr.bf16.mxu0 0
        %3990 = vmatpush1.bf16.msra.mxu0 %v3987
        %3991 = vmatprep.subr.bf16.mxu0 0
        %3992 = vmatpush1.bf16.msra.mxu0 0
        %3993 = vmatprep.subr.bf16.mxu0 0
        %3994 = vmatpush1.bf16.msra.mxu0 0
        %3995 = vmatprep.subr.bf16.mxu0 0
        %3996 = vmatpush1.bf16.msra.mxu0 0
        %3997 = vmatprep.subr.bf16.mxu0 0
        %3998 = vmatpush1.bf16.msra.mxu0 0
        %3999 = vmatprep.subr.bf16.mxu0 0
        %4000 = vmatpush1.bf16.msra.mxu0 0
        %4001 = vmatprep.subr.bf16.mxu0 0
        %4002 = vmatpush1.bf16.msra.mxu0 0
        %4003 = vmatprep.subr.bf16.mxu0 0
        %4004 = vmatpush1.bf16.msra.mxu0 0
        %4005 = vmatprep.subr.bf16.mxu0 0
        %4006 = vmatpush1.bf16.msra.mxu0 0
        %4007 = vmatprep.subr.bf16.mxu0 0
        %4008 = vmatpush1.bf16.msra.mxu0 0
        %4009 = vmatprep.subr.bf16.mxu0 0
        %4010 = vmatpush1.bf16.msra.mxu0 0
        %4011 = vmatprep.subr.bf16.mxu0 0
        %4012 = vmatpush1.bf16.msra.mxu0 0
        %4013 = vmatprep.subr.bf16.mxu0 0
        %4014 = vmatpush1.bf16.msra.mxu0 0
        %4015 = vmatprep.subr.bf16.mxu0 0
        %4016 = vmatpush1.bf16.msra.mxu0 0
        %4017 = vmatprep.subr.bf16.mxu0 0
        %4018 = vmatpush1.bf16.msra.mxu0 0
        %4019 = vmatprep.subr.bf16.mxu0 0
        %4020 = vmatpush1.bf16.msra.mxu0 0
        %4021 = vmatprep.mubr.bf16.mxu0 0
        %4022 = vmatmul.mubr.bf16.gmra.mrb[0].mxu0 %v3939
        %v4023 = vpop.f32.mrb[0].mxu0
        %v4024 = vadd.f32 0.0, %v4023
        %v4025 = vpop.f32.mrb[0].mxu0
        %v4026 = vpop.f32.mrb[0].mxu0
        %v4027 = vadd.f32 0.0, %v4026
        %v4028 = vpop.f32.mrb[0].mxu0
        %4029 = vmatprep.mubr.bf16.mxu0 0
        %4030 = vmatmul.mubr.bf16.gmra.mrb[0].mxu0 %v3942
        %v4031 = vpop.f32.mrb[0].mxu0
        %v4032 = vadd.f32 0.0, %v4031
        %v4033 = vpop.f32.mrb[0].mxu0
        %v4034 = vpop.f32.mrb[0].mxu0
        %v4035 = vadd.f32 0.0, %v4034
        %v4036 = vpop.f32.mrb[0].mxu0
        %4037 = vmatprep.mubr.bf16.mxu0 0
        %4038 = vmatmul.mubr.bf16.gmra.mrb[0].mxu0 %v3945
        %v4039 = vpop.f32.mrb[0].mxu0
        %v4040 = vadd.f32 0.0, %v4039
        %v4041 = vpop.f32.mrb[0].mxu0
        %v4042 = vpop.f32.mrb[0].mxu0
        %v4043 = vadd.f32 0.0, %v4042
        %v4044 = vpop.f32.mrb[0].mxu0
        %4045 = vmatprep.mubr.bf16.mxu0 0
        %4046 = vmatmul.mubr.bf16.gmra.mrb[0].mxu0 %v3948
        %v4047 = vpop.f32.mrb[0].mxu0
        %v4048 = vadd.f32 0.0, %v4047
        %v4049 = vpop.f32.mrb[0].mxu0
        %v4050 = vpop.f32.mrb[0].mxu0
        %v4051 = vadd.f32 0.0, %v4050
        %v4052 = vpop.f32.mrb[0].mxu0
        %4053 = vmatprep.mubr.bf16.mxu0 0
        %4054 = vmatmul.mubr.bf16.gmra.mrb[0].mxu0 %v3951
        %v4055 = vpop.f32.mrb[0].mxu0
        %v4056 = vadd.f32 0.0, %v4055
        %v4057 = vpop.f32.mrb[0].mxu0
        %v4058 = vpop.f32.mrb[0].mxu0
        %v4059 = vadd.f32 0.0, %v4058
        %v4060 = vpop.f32.mrb[0].mxu0
        %4061 = vmatprep.mubr.bf16.mxu0 0
        %4062 = vmatmul.mubr.bf16.gmra.mrb[0].mxu0 %v3954
        %v4063 = vpop.f32.mrb[0].mxu0
        %v4064 = vadd.f32 0.0, %v4063
        %v4065 = vpop.f32.mrb[0].mxu0
        %v4066 = vpop.f32.mrb[0].mxu0
        %v4067 = vadd.f32 0.0, %v4066
        %v4068 = vpop.f32.mrb[0].mxu0
        %4069 = vmatprep.mubr.bf16.mxu0 0
        %4070 = vmatmul.mubr.bf16.gmra.mrb[0].mxu0 %v3957
        %v4071 = vpop.f32.mrb[0].mxu0
        %v4072 = vadd.f32 0.0, %v4071
        %v4073 = vpop.f32.mrb[0].mxu0
        %v4074 = vpop.f32.mrb[0].mxu0
        %v4075 = vadd.f32 0.0, %v4074
        %v4076 = vpop.f32.mrb[0].mxu0
        %4077 = vmatprep.mubr.bf16.mxu0 0
        %4078 = vmatmul.mubr.bf16.gmra.mrb[0].mxu0 %v3960
        %v4079 = vpop.f32.mrb[0].mxu0
        %v4080 = vadd.f32 0.0, %v4079
        %v4081 = vpop.f32.mrb[0].mxu0
        %v4082 = vpop.f32.mrb[0].mxu0
        %v4083 = vadd.f32 0.0, %v4082
        %v4084 = vpop.f32.mrb[0].mxu0
        %4085 = vmatprep.mubr.bf16.mxu0 0
        %4086 = vmatmul.mubr.bf16.gmra.mrb[0].mxu0 %v3963
        %v4087 = vpop.f32.mrb[0].mxu0
        %v4088 = vadd.f32 0.0, %v4087
        %v4089 = vpop.f32.mrb[0].mxu0
        %v4090 = vpop.f32.mrb[0].mxu0
        %v4091 = vadd.f32 0.0, %v4090
        %v4092 = vpop.f32.mrb[0].mxu0
        %4093 = vmatprep.mubr.bf16.mxu0 0
        %4094 = vmatmul.mubr.bf16.gmra.mrb[0].mxu0 %v3966
        %v4095 = vpop.f32.mrb[0].mxu0
        %v4096 = vadd.f32 0.0, %v4095
        %v4097 = vpop.f32.mrb[0].mxu0
        %v4098 = vpop.f32.mrb[0].mxu0
        %v4099 = vadd.f32 0.0, %v4098
        %v4100 = vpop.f32.mrb[0].mxu0
        %4101 = vmatprep.mubr.bf16.mxu0 0
        %4102 = vmatmul.mubr.bf16.gmra.mrb[0].mxu0 %v3969
        %v4103 = vpop.f32.mrb[0].mxu0
        %v4104 = vadd.f32 0.0, %v4103
        %v4105 = vpop.f32.mrb[0].mxu0
        %v4106 = vpop.f32.mrb[0].mxu0
        %v4107 = vadd.f32 0.0, %v4106
        %v4108 = vpop.f32.mrb[0].mxu0
        %4109 = vmatprep.mubr.bf16.mxu0 0
        %4110 = vmatmul.mubr.bf16.gmra.mrb[0].mxu0 %v3972
        %v4111 = vpop.f32.mrb[0].mxu0
        %v4112 = vadd.f32 0.0, %v4111
        %v4113 = vpop.f32.mrb[0].mxu0
        %v4114 = vpop.f32.mrb[0].mxu0
        %v4115 = vadd.f32 0.0, %v4114
        %v4116 = vpop.f32.mrb[0].mxu0
        %4117 = vmatprep.mubr.bf16.mxu0 0
        %4118 = vmatmul.mubr.bf16.gmra.mrb[0].mxu0 %v3975
        %v4119 = vpop.f32.mrb[0].mxu0
        %v4120 = vadd.f32 0.0, %v4119
        %v4121 = vpop.f32.mrb[0].mxu0
        %v4122 = vpop.f32.mrb[0].mxu0
        %v4123 = vadd.f32 0.0, %v4122
        %v4124 = vpop.f32.mrb[0].mxu0
        %4125 = vmatprep.mubr.bf16.mxu0 0
        %4126 = vmatmul.mubr.bf16.gmra.mrb[0].mxu0 %v3978
        %v4127 = vpop.f32.mrb[0].mxu0
        %v4128 = vadd.f32 0.0, %v4127
        %v4129 = vpop.f32.mrb[0].mxu0
        %v4130 = vpop.f32.mrb[0].mxu0
        %v4131 = vadd.f32 0.0, %v4130
        %v4132 = vpop.f32.mrb[0].mxu0
        %4133 = vmatprep.mubr.bf16.mxu0 0
        %4134 = vmatmul.mubr.bf16.gmra.mrb[0].mxu0 %v3981
        %v4135 = vpop.f32.mrb[0].mxu0
        %v4136 = vadd.f32 0.0, %v4135
        %v4137 = vpop.f32.mrb[0].mxu0
        %v4138 = vpop.f32.mrb[0].mxu0
        %v4139 = vadd.f32 0.0, %v4138
        %v4140 = vpop.f32.mrb[0].mxu0
        %4141 = vmatprep.mubr.bf16.mxu0 0
        %4142 = vmatmul.mubr.bf16.gmra.mrb[0].mxu0 %v3984
        %v4143 = vpop.f32.mrb[0].mxu0
        %v4144 = vadd.f32 0.0, %v4143
        %v4145 = vpop.f32.mrb[0].mxu0
        %v4146 = vpop.f32.mrb[0].mxu0
        %v4147 = vadd.f32 0.0, %v4146
        %v4148 = vpop.f32.mrb[0].mxu0
        %4149 = vdwg.mxu0
        %v4150 = vadd.f32 %v3824, %v4024
        %v4151 = vadd.f32 %v3825, %v4027
        %v4152 = vadd.f32 %v3826, %v4032
        %v4153 = vadd.f32 %v3827, %v4035
        %v4154 = vadd.f32 %v3828, %v4040
        %v4155 = vadd.f32 %v3829, %v4043
        %v4156 = vadd.f32 %v3830, %v4048
        %v4157 = vadd.f32 %v3831, %v4051
        %v4158 = vadd.f32 %v3832, %v4056
        %v4159 = vadd.f32 %v3833, %v4059
        %v4160 = vadd.f32 %v3834, %v4064
        %v4161 = vadd.f32 %v3835, %v4067
        %v4162 = vadd.f32 %v3836, %v4072
        %v4163 = vadd.f32 %v3837, %v4075
        %v4164 = vadd.f32 %v3838, %v4080
        %v4165 = vadd.f32 %v3839, %v4083
        %v4166 = vadd.f32 %v3840, %v4088
        %v4167 = vadd.f32 %v3841, %v4091
        %v4168 = vadd.f32 %v3842, %v4096
        %v4169 = vadd.f32 %v3843, %v4099
        %v4170 = vadd.f32 %v3844, %v4104
        %v4171 = vadd.f32 %v3845, %v4107
        %v4172 = vadd.f32 %v3846, %v4112
        %v4173 = vadd.f32 %v3847, %v4115
        %v4174 = vadd.f32 %v3848, %v4120
        %v4175 = vadd.f32 %v3849, %v4123
        %v4176 = vadd.f32 %v3850, %v4128
        %v4177 = vadd.f32 %v3851, %v4131
        %v4178 = vadd.f32 %v3852, %v4136
        %v4179 = vadd.f32 %v3853, %v4139
        %v4180 = vadd.f32 %v3854, %v4144
        %v4181 = vadd.f32 %v3855, %v4147
        %4182 = vst [vmem:[#allocation2] sm:$0xff] %v4150
        %4183 = vst [vmem:[#allocation2 + $0x8] sm:$0xff] %v4151
        %4184 = vst [vmem:[#allocation2 + $0x10] sm:$0xff] %v4152
        %4185 = vst [vmem:[#allocation2 + $0x18] sm:$0xff] %v4153
        %4186 = vst [vmem:[#allocation2 + $0x20] sm:$0xff] %v4154
        %4187 = vst [vmem:[#allocation2 + $0x28] sm:$0xff] %v4155
        %4188 = vst [vmem:[#allocation2 + $0x30] sm:$0xff] %v4156
        %4189 = vst [vmem:[#allocation2 + $0x38] sm:$0xff] %v4157
        %4190 = vst [vmem:[#allocation2 + $0x40] sm:$0xff] %v4158
        %4191 = vst [vmem:[#allocation2 + $0x48] sm:$0xff] %v4159
        %4192 = vst [vmem:[#allocation2 + $0x50] sm:$0xff] %v4160
        %4193 = vst [vmem:[#allocation2 + $0x58] sm:$0xff] %v4161
        %4194 = vst [vmem:[#allocation2 + $0x60] sm:$0xff] %v4162
        %4195 = vst [vmem:[#allocation2 + $0x68] sm:$0xff] %v4163
        %4196 = vst [vmem:[#allocation2 + $0x70] sm:$0xff] %v4164
        %4197 = vst [vmem:[#allocation2 + $0x78] sm:$0xff] %v4165
        %4198 = vst [vmem:[#allocation2 + $0x80] sm:$0xff] %v4166
        %4199 = vst [vmem:[#allocation2 + $0x88] sm:$0xff] %v4167
        %4200 = vst [vmem:[#allocation2 + $0x90] sm:$0xff] %v4168
        %4201 = vst [vmem:[#allocation2 + $0x98] sm:$0xff] %v4169
        %4202 = vst [vmem:[#allocation2 + $0xa0] sm:$0xff] %v4170
        %4203 = vst [vmem:[#allocation2 + $0xa8] sm:$0xff] %v4171
        %4204 = vst [vmem:[#allocation2 + $0xb0] sm:$0xff] %v4172
        %4205 = vst [vmem:[#allocation2 + $0xb8] sm:$0xff] %v4173
        %4206 = vst [vmem:[#allocation2 + $0xc0] sm:$0xff] %v4174
        %4207 = vst [vmem:[#allocation2 + $0xc8] sm:$0xff] %v4175
        %4208 = vst [vmem:[#allocation2 + $0xd0] sm:$0xff] %v4176
        %4209 = vst [vmem:[#allocation2 + $0xd8] sm:$0xff] %v4177
        %4210 = vst [vmem:[#allocation2 + $0xe0] sm:$0xff] %v4178
        %4211 = vst [vmem:[#allocation2 + $0xe8] sm:$0xff] %v4179
        %4212 = vst [vmem:[#allocation2 + $0xf0] sm:$0xff] %v4180
        %4213 = vst [vmem:[#allocation2 + $0xf8] sm:$0xff] %v4181
        %v4214 = vld [vmem:[%s3791] sm:$0xf]
        %v4215 = vld [vmem:[%s3791 + $0x4] sm:$0xf]
        %v4216 = vld [vmem:[%s3791 + $0x8] sm:$0x1]
        %v4217 = vld [vmem:[%s3791 + $0xc] sm:$0xf]
        %v4218 = vld [vmem:[%s3791 + $0x10] sm:$0xf]
        %v4219 = vld [vmem:[%s3791 + $0x14] sm:$0x1]
        %v4220 = vld [vmem:[%s3791 + $0x18] sm:$0xf]
        %v4221 = vld [vmem:[%s3791 + $0x1c] sm:$0xf]
        %v4222 = vld [vmem:[%s3791 + $0x20] sm:$0x1]
        %v4223 = vld [vmem:[%s3791 + $0x24] sm:$0xf]
        %v4224 = vld [vmem:[%s3791 + $0x28] sm:$0xf]
        %v4225 = vld [vmem:[%s3791 + $0x2c] sm:$0x1]
        %v4226 = vld [vmem:[%s3791 + $0x30] sm:$0xf]
        %v4227 = vld [vmem:[%s3791 + $0x34] sm:$0xf]
        %v4228 = vld [vmem:[%s3791 + $0x38] sm:$0x1]
        %v4229 = vld [vmem:[%s3791 + $0x3c] sm:$0xf]
        %v4230 = vld [vmem:[%s3791 + $0x40] sm:$0xf]
        %v4231 = vld [vmem:[%s3791 + $0x44] sm:$0x1]
        %v4232 = vld [vmem:[%s3791 + $0x48] sm:$0xf]
        %v4233 = vld [vmem:[%s3791 + $0x4c] sm:$0xf]
        %v4234 = vld [vmem:[%s3791 + $0x50] sm:$0x1]
        %v4235 = vld [vmem:[%s3791 + $0x54] sm:$0xf]
        %v4236 = vld [vmem:[%s3791 + $0x58] sm:$0xf]
        %v4237 = vld [vmem:[%s3791 + $0x5c] sm:$0x1]
        %v4238 = vld [vmem:[%s3791 + $0x60] sm:$0xf]
        %v4239 = vld [vmem:[%s3791 + $0x64] sm:$0xf]
        %v4240 = vld [vmem:[%s3791 + $0x68] sm:$0x1]
        %v4241 = vld [vmem:[%s3791 + $0x6c] sm:$0xf]
        %v4242 = vld [vmem:[%s3791 + $0x70] sm:$0xf]
        %v4243 = vld [vmem:[%s3791 + $0x74] sm:$0x1]
        %v4244 = vld [vmem:[%s3791 + $0x78] sm:$0xf]
        %v4245 = vld [vmem:[%s3791 + $0x7c] sm:$0xf]
        %v4246 = vld [vmem:[%s3791 + $0x80] sm:$0x1]
        %v4247 = vld [vmem:[%s3791 + $0x84] sm:$0xf]
        %v4248 = vld [vmem:[%s3791 + $0x88] sm:$0xf]
        %v4249 = vld [vmem:[%s3791 + $0x8c] sm:$0x1]
        %v4250 = vld [vmem:[%s3791 + $0x90] sm:$0xf]
        %v4251 = vld [vmem:[%s3791 + $0x94] sm:$0xf]
        %v4252 = vld [vmem:[%s3791 + $0x98] sm:$0x1]
        %v4253 = vld [vmem:[%s3791 + $0x9c] sm:$0xf]
        %v4254 = vld [vmem:[%s3791 + $0xa0] sm:$0xf]
        %v4255 = vld [vmem:[%s3791 + $0xa4] sm:$0x1]
        %v4256 = vld [vmem:[%s3791 + $0xa8] sm:$0xf]
        %v4257 = vld [vmem:[%s3791 + $0xac] sm:$0xf]
        %v4258 = vld [vmem:[%s3791 + $0xb0] sm:$0x1]
        %v4259 = vld [vmem:[%s3791 + $0xb4] sm:$0xf]
        %v4260 = vld [vmem:[%s3791 + $0xb8] sm:$0xf]
        %v4261 = vld [vmem:[%s3791 + $0xbc] sm:$0x1]
        %v4263 = vshrl.u32 %v4214, 16
        %v4265 = vrot.slane %v4263, 4
        %v4266 = vshll.u32 %v4214, 16
        %v4268 = vrot.slane %v4266, 5
        %v4269 = vor.u32 %v4265, %v4268
        %v4270 = vrot.slane %v4269, 4
        %v4272 = vshll.u32 %v4215, 16
        %v4274 = vrot.slane %v4272, 5
        %v4275 = vsel %vm694, %v4270, %v4274
        %v4276 = vshrl.u32 %v4215, 16
        %v4278 = vrot.slane %v4276, 4
        %v4279 = vor.u32 %v4278, %v4274
        %v4280 = vrot.slane %v4279, 4
        %v4282 = vshll.u32 %v4216, 16
        %v4284 = vrot.slane %v4282, 5
        %v4285 = vsel %vm694, %v4280, %v4284
        %v4287 = vshrl.u32 %v4217, 16
        %v4289 = vrot.slane %v4287, 4
        %v4290 = vshll.u32 %v4217, 16
        %v4292 = vrot.slane %v4290, 5
        %v4293 = vor.u32 %v4289, %v4292
        %v4294 = vrot.slane %v4293, 4
        %v4296 = vshll.u32 %v4218, 16
        %v4298 = vrot.slane %v4296, 5
        %v4299 = vsel %vm694, %v4294, %v4298
        %v4300 = vshrl.u32 %v4218, 16
        %v4302 = vrot.slane %v4300, 4
        %v4303 = vor.u32 %v4302, %v4298
        %v4304 = vrot.slane %v4303, 4
        %v4306 = vshll.u32 %v4219, 16
        %v4308 = vrot.slane %v4306, 5
        %v4309 = vsel %vm694, %v4304, %v4308
        %v4311 = vshrl.u32 %v4220, 16
        %v4313 = vrot.slane %v4311, 4
        %v4314 = vshll.u32 %v4220, 16
        %v4316 = vrot.slane %v4314, 5
        %v4317 = vor.u32 %v4313, %v4316
        %v4318 = vrot.slane %v4317, 4
        %v4320 = vshll.u32 %v4221, 16
        %v4322 = vrot.slane %v4320, 5
        %v4323 = vsel %vm694, %v4318, %v4322
        %v4324 = vshrl.u32 %v4221, 16
        %v4326 = vrot.slane %v4324, 4
        %v4327 = vor.u32 %v4326, %v4322
        %v4328 = vrot.slane %v4327, 4
        %v4330 = vshll.u32 %v4222, 16
        %v4332 = vrot.slane %v4330, 5
        %v4333 = vsel %vm694, %v4328, %v4332
        %v4335 = vshrl.u32 %v4223, 16
        %v4337 = vrot.slane %v4335, 4
        %v4338 = vshll.u32 %v4223, 16
        %v4340 = vrot.slane %v4338, 5
        %v4341 = vor.u32 %v4337, %v4340
        %v4342 = vrot.slane %v4341, 4
        %v4344 = vshll.u32 %v4224, 16
        %v4346 = vrot.slane %v4344, 5
        %v4347 = vsel %vm694, %v4342, %v4346
        %v4348 = vshrl.u32 %v4224, 16
        %v4350 = vrot.slane %v4348, 4
        %v4351 = vor.u32 %v4350, %v4346
        %v4352 = vrot.slane %v4351, 4
        %v4354 = vshll.u32 %v4225, 16
        %v4356 = vrot.slane %v4354, 5
        %v4357 = vsel %vm694, %v4352, %v4356
        %v4359 = vshrl.u32 %v4226, 16
        %v4361 = vrot.slane %v4359, 4
        %v4362 = vshll.u32 %v4226, 16
        %v4364 = vrot.slane %v4362, 5
        %v4365 = vor.u32 %v4361, %v4364
        %v4366 = vrot.slane %v4365, 4
        %v4368 = vshll.u32 %v4227, 16
        %v4370 = vrot.slane %v4368, 5
        %v4371 = vsel %vm694, %v4366, %v4370
        %v4372 = vshrl.u32 %v4227, 16
        %v4374 = vrot.slane %v4372, 4
        %v4375 = vor.u32 %v4374, %v4370
        %v4376 = vrot.slane %v4375, 4
        %v4378 = vshll.u32 %v4228, 16
        %v4380 = vrot.slane %v4378, 5
        %v4381 = vsel %vm694, %v4376, %v4380
        %v4383 = vshrl.u32 %v4229, 16
        %v4385 = vrot.slane %v4383, 4
        %v4386 = vshll.u32 %v4229, 16
        %v4388 = vrot.slane %v4386, 5
        %v4389 = vor.u32 %v4385, %v4388
        %v4390 = vrot.slane %v4389, 4
        %v4392 = vshll.u32 %v4230, 16
        %v4394 = vrot.slane %v4392, 5
        %v4395 = vsel %vm694, %v4390, %v4394
        %v4396 = vshrl.u32 %v4230, 16
        %v4398 = vrot.slane %v4396, 4
        %v4399 = vor.u32 %v4398, %v4394
        %v4400 = vrot.slane %v4399, 4
        %v4402 = vshll.u32 %v4231, 16
        %v4404 = vrot.slane %v4402, 5
        %v4405 = vsel %vm694, %v4400, %v4404
        %v4407 = vshrl.u32 %v4232, 16
        %v4409 = vrot.slane %v4407, 4
        %v4410 = vshll.u32 %v4232, 16
        %v4412 = vrot.slane %v4410, 5
        %v4413 = vor.u32 %v4409, %v4412
        %v4414 = vrot.slane %v4413, 4
        %v4416 = vshll.u32 %v4233, 16
        %v4418 = vrot.slane %v4416, 5
        %v4419 = vsel %vm694, %v4414, %v4418
        %v4420 = vshrl.u32 %v4233, 16
        %v4422 = vrot.slane %v4420, 4
        %v4423 = vor.u32 %v4422, %v4418
        %v4424 = vrot.slane %v4423, 4
        %v4426 = vshll.u32 %v4234, 16
        %v4428 = vrot.slane %v4426, 5
        %v4429 = vsel %vm694, %v4424, %v4428
        %v4431 = vshrl.u32 %v4235, 16
        %v4433 = vrot.slane %v4431, 4
        %v4434 = vshll.u32 %v4235, 16
        %v4436 = vrot.slane %v4434, 5
        %v4437 = vor.u32 %v4433, %v4436
        %v4438 = vrot.slane %v4437, 4
        %v4440 = vshll.u32 %v4236, 16
        %v4442 = vrot.slane %v4440, 5
        %v4443 = vsel %vm694, %v4438, %v4442
        %v4444 = vshrl.u32 %v4236, 16
        %v4446 = vrot.slane %v4444, 4
        %v4447 = vor.u32 %v4446, %v4442
        %v4448 = vrot.slane %v4447, 4
        %v4450 = vshll.u32 %v4237, 16
        %v4452 = vrot.slane %v4450, 5
        %v4453 = vsel %vm694, %v4448, %v4452
        %v4455 = vshrl.u32 %v4238, 16
        %v4457 = vrot.slane %v4455, 4
        %v4458 = vshll.u32 %v4238, 16
        %v4460 = vrot.slane %v4458, 5
        %v4461 = vor.u32 %v4457, %v4460
        %v4462 = vrot.slane %v4461, 4
        %v4464 = vshll.u32 %v4239, 16
        %v4466 = vrot.slane %v4464, 5
        %v4467 = vsel %vm694, %v4462, %v4466
        %v4468 = vshrl.u32 %v4239, 16
        %v4470 = vrot.slane %v4468, 4
        %v4471 = vor.u32 %v4470, %v4466
        %v4472 = vrot.slane %v4471, 4
        %v4474 = vshll.u32 %v4240, 16
        %v4476 = vrot.slane %v4474, 5
        %v4477 = vsel %vm694, %v4472, %v4476
        %v4479 = vshrl.u32 %v4241, 16
        %v4481 = vrot.slane %v4479, 4
        %v4482 = vshll.u32 %v4241, 16
        %v4484 = vrot.slane %v4482, 5
        %v4485 = vor.u32 %v4481, %v4484
        %v4486 = vrot.slane %v4485, 4
        %v4488 = vshll.u32 %v4242, 16
        %v4490 = vrot.slane %v4488, 5
        %v4491 = vsel %vm694, %v4486, %v4490
        %v4492 = vshrl.u32 %v4242, 16
        %v4494 = vrot.slane %v4492, 4
        %v4495 = vor.u32 %v4494, %v4490
        %v4496 = vrot.slane %v4495, 4
        %v4498 = vshll.u32 %v4243, 16
        %v4500 = vrot.slane %v4498, 5
        %v4501 = vsel %vm694, %v4496, %v4500
        %v4503 = vshrl.u32 %v4244, 16
        %v4505 = vrot.slane %v4503, 4
        %v4506 = vshll.u32 %v4244, 16
        %v4508 = vrot.slane %v4506, 5
        %v4509 = vor.u32 %v4505, %v4508
        %v4510 = vrot.slane %v4509, 4
        %v4512 = vshll.u32 %v4245, 16
        %v4514 = vrot.slane %v4512, 5
        %v4515 = vsel %vm694, %v4510, %v4514
        %v4516 = vshrl.u32 %v4245, 16
        %v4518 = vrot.slane %v4516, 4
        %v4519 = vor.u32 %v4518, %v4514
        %v4520 = vrot.slane %v4519, 4
        %v4522 = vshll.u32 %v4246, 16
        %v4524 = vrot.slane %v4522, 5
        %v4525 = vsel %vm694, %v4520, %v4524
        %v4527 = vshrl.u32 %v4247, 16
        %v4529 = vrot.slane %v4527, 4
        %v4530 = vshll.u32 %v4247, 16
        %v4532 = vrot.slane %v4530, 5
        %v4533 = vor.u32 %v4529, %v4532
        %v4534 = vrot.slane %v4533, 4
        %v4536 = vshll.u32 %v4248, 16
        %v4538 = vrot.slane %v4536, 5
        %v4539 = vsel %vm694, %v4534, %v4538
        %v4540 = vshrl.u32 %v4248, 16
        %v4542 = vrot.slane %v4540, 4
        %v4543 = vor.u32 %v4542, %v4538
        %v4544 = vrot.slane %v4543, 4
        %v4546 = vshll.u32 %v4249, 16
        %v4548 = vrot.slane %v4546, 5
        %v4549 = vsel %vm694, %v4544, %v4548
        %v4551 = vshrl.u32 %v4250, 16
        %v4553 = vrot.slane %v4551, 4
        %v4554 = vshll.u32 %v4250, 16
        %v4556 = vrot.slane %v4554, 5
        %v4557 = vor.u32 %v4553, %v4556
        %v4558 = vrot.slane %v4557, 4
        %v4560 = vshll.u32 %v4251, 16
        %v4562 = vrot.slane %v4560, 5
        %v4563 = vsel %vm694, %v4558, %v4562
        %v4564 = vshrl.u32 %v4251, 16
        %v4566 = vrot.slane %v4564, 4
        %v4567 = vor.u32 %v4566, %v4562
        %v4568 = vrot.slane %v4567, 4
        %v4570 = vshll.u32 %v4252, 16
        %v4572 = vrot.slane %v4570, 5
        %v4573 = vsel %vm694, %v4568, %v4572
        %v4575 = vshrl.u32 %v4253, 16
        %v4577 = vrot.slane %v4575, 4
        %v4578 = vshll.u32 %v4253, 16
        %v4580 = vrot.slane %v4578, 5
        %v4581 = vor.u32 %v4577, %v4580
        %v4582 = vrot.slane %v4581, 4
        %v4584 = vshll.u32 %v4254, 16
        %v4586 = vrot.slane %v4584, 5
        %v4587 = vsel %vm694, %v4582, %v4586
        %v4588 = vshrl.u32 %v4254, 16
        %v4590 = vrot.slane %v4588, 4
        %v4591 = vor.u32 %v4590, %v4586
        %v4592 = vrot.slane %v4591, 4
        %v4594 = vshll.u32 %v4255, 16
        %v4596 = vrot.slane %v4594, 5
        %v4597 = vsel %vm694, %v4592, %v4596
        %v4599 = vshrl.u32 %v4256, 16
        %v4601 = vrot.slane %v4599, 4
        %v4602 = vshll.u32 %v4256, 16
        %v4604 = vrot.slane %v4602, 5
        %v4605 = vor.u32 %v4601, %v4604
        %v4606 = vrot.slane %v4605, 4
        %v4608 = vshll.u32 %v4257, 16
        %v4610 = vrot.slane %v4608, 5
        %v4611 = vsel %vm694, %v4606, %v4610
        %v4612 = vshrl.u32 %v4257, 16
        %v4614 = vrot.slane %v4612, 4
        %v4615 = vor.u32 %v4614, %v4610
        %v4616 = vrot.slane %v4615, 4
        %v4618 = vshll.u32 %v4258, 16
        %v4620 = vrot.slane %v4618, 5
        %v4621 = vsel %vm694, %v4616, %v4620
        %v4623 = vshrl.u32 %v4259, 16
        %v4625 = vrot.slane %v4623, 4
        %v4626 = vshll.u32 %v4259, 16
        %v4628 = vrot.slane %v4626, 5
        %v4629 = vor.u32 %v4625, %v4628
        %v4630 = vrot.slane %v4629, 4
        %v4632 = vshll.u32 %v4260, 16
        %v4634 = vrot.slane %v4632, 5
        %v4635 = vsel %vm694, %v4630, %v4634
        %v4636 = vshrl.u32 %v4260, 16
        %v4638 = vrot.slane %v4636, 4
        %v4639 = vor.u32 %v4638, %v4634
        %v4640 = vrot.slane %v4639, 4
        %v4642 = vshll.u32 %v4261, 16
        %v4644 = vrot.slane %v4642, 5
        %v4645 = vsel %vm694, %v4640, %v4644
        %v4646 = vld [vmem:[#allocation2] sm:$0xff]
        %v4647 = vld [vmem:[#allocation2 + $0x8] sm:$0xff]
        %v4648 = vld [vmem:[#allocation2 + $0x10] sm:$0xff]
        %v4649 = vld [vmem:[#allocation2 + $0x18] sm:$0xff]
        %v4650 = vld [vmem:[#allocation2 + $0x20] sm:$0xff]
        %v4651 = vld [vmem:[#allocation2 + $0x28] sm:$0xff]
        %v4652 = vld [vmem:[#allocation2 + $0x30] sm:$0xff]
        %v4653 = vld [vmem:[#allocation2 + $0x38] sm:$0xff]
        %v4654 = vld [vmem:[#allocation2 + $0x40] sm:$0xff]
        %v4655 = vld [vmem:[#allocation2 + $0x48] sm:$0xff]
        %v4656 = vld [vmem:[#allocation2 + $0x50] sm:$0xff]
        %v4657 = vld [vmem:[#allocation2 + $0x58] sm:$0xff]
        %v4658 = vld [vmem:[#allocation2 + $0x60] sm:$0xff]
        %v4659 = vld [vmem:[#allocation2 + $0x68] sm:$0xff]
        %v4660 = vld [vmem:[#allocation2 + $0x70] sm:$0xff]
        %v4661 = vld [vmem:[#allocation2 + $0x78] sm:$0xff]
        %v4662 = vld [vmem:[#allocation2 + $0x80] sm:$0xff]
        %v4663 = vld [vmem:[#allocation2 + $0x88] sm:$0xff]
        %v4664 = vld [vmem:[#allocation2 + $0x90] sm:$0xff]
        %v4665 = vld [vmem:[#allocation2 + $0x98] sm:$0xff]
        %v4666 = vld [vmem:[#allocation2 + $0xa0] sm:$0xff]
        %v4667 = vld [vmem:[#allocation2 + $0xa8] sm:$0xff]
        %v4668 = vld [vmem:[#allocation2 + $0xb0] sm:$0xff]
        %v4669 = vld [vmem:[#allocation2 + $0xb8] sm:$0xff]
        %v4670 = vld [vmem:[#allocation2 + $0xc0] sm:$0xff]
        %v4671 = vld [vmem:[#allocation2 + $0xc8] sm:$0xff]
        %v4672 = vld [vmem:[#allocation2 + $0xd0] sm:$0xff]
        %v4673 = vld [vmem:[#allocation2 + $0xd8] sm:$0xff]
        %v4674 = vld [vmem:[#allocation2 + $0xe0] sm:$0xff]
        %v4675 = vld [vmem:[#allocation2 + $0xe8] sm:$0xff]
        %v4676 = vld [vmem:[#allocation2 + $0xf0] sm:$0xff]
        %v4677 = vld [vmem:[#allocation2 + $0xf8] sm:$0xff]
        %s4678 = scalar_lea.vmem %s1, 14
        %v4679 = vld [vmem:[%s4678] sm:$0x3]
        %v4680 = vunpack.c.l.b16 %v4275
        %v4681 = vunpack.c.l.b16 %v4285
        %v4682 = vunpack.c.l.b16 %v4299
        %v4683 = vunpack.c.l.b16 %v4309
        %v4684 = vunpack.c.l.b16 %v4323
        %v4685 = vunpack.c.l.b16 %v4333
        %v4686 = vunpack.c.l.b16 %v4347
        %v4687 = vunpack.c.l.b16 %v4357
        %v4688 = vunpack.c.l.b16 %v4371
        %v4689 = vunpack.c.l.b16 %v4381
        %v4690 = vunpack.c.l.b16 %v4395
        %v4691 = vunpack.c.l.b16 %v4405
        %v4692 = vunpack.c.l.b16 %v4419
        %v4693 = vunpack.c.l.b16 %v4429
        %v4694 = vunpack.c.l.b16 %v4443
        %v4695 = vunpack.c.l.b16 %v4453
        %v4696 = vunpack.c.l.b16 %v4467
        %v4697 = vunpack.c.l.b16 %v4477
        %v4698 = vunpack.c.l.b16 %v4491
        %v4699 = vunpack.c.l.b16 %v4501
        %v4700 = vunpack.c.l.b16 %v4515
        %v4701 = vunpack.c.l.b16 %v4525
        %v4702 = vunpack.c.l.b16 %v4539
        %v4703 = vunpack.c.l.b16 %v4549
        %v4704 = vunpack.c.l.b16 %v4563
        %v4705 = vunpack.c.l.b16 %v4573
        %v4706 = vunpack.c.l.b16 %v4587
        %v4707 = vunpack.c.l.b16 %v4597
        %v4708 = vunpack.c.l.b16 %v4611
        %v4709 = vunpack.c.l.b16 %v4621
        %v4710 = vunpack.c.l.b16 %v4635
        %v4711 = vunpack.c.l.b16 %v4645
        %v4712 = vpack.c.b16 %v4681, %v4680
        %v4713 = vpack.c.b16 %v4683, %v4682
        %v4714 = vpack.c.b16 %v4685, %v4684
        %v4715 = vpack.c.b16 %v4687, %v4686
        %v4716 = vpack.c.b16 %v4689, %v4688
        %v4717 = vpack.c.b16 %v4691, %v4690
        %v4718 = vpack.c.b16 %v4693, %v4692
        %v4719 = vpack.c.b16 %v4695, %v4694
        %v4720 = vpack.c.b16 %v4697, %v4696
        %v4721 = vpack.c.b16 %v4699, %v4698
        %v4722 = vpack.c.b16 %v4701, %v4700
        %v4723 = vpack.c.b16 %v4703, %v4702
        %v4724 = vpack.c.b16 %v4705, %v4704
        %v4725 = vpack.c.b16 %v4707, %v4706
        %v4726 = vpack.c.b16 %v4709, %v4708
        %v4727 = vpack.c.b16 %v4711, %v4710
        %v4729 = vsel %vm366, %v4712, 0
        %v4732 = vsel %vm366, %v4713, 0
        %v4735 = vsel %vm366, %v4714, 0
        %v4738 = vsel %vm366, %v4715, 0
        %v4741 = vsel %vm366, %v4716, 0
        %v4744 = vsel %vm366, %v4717, 0
        %v4747 = vsel %vm366, %v4718, 0
        %v4750 = vsel %vm366, %v4719, 0
        %v4753 = vsel %vm366, %v4720, 0
        %v4756 = vsel %vm366, %v4721, 0
        %v4759 = vsel %vm366, %v4722, 0
        %v4762 = vsel %vm366, %v4723, 0
        %v4765 = vsel %vm366, %v4724, 0
        %v4768 = vsel %vm366, %v4725, 0
        %v4771 = vsel %vm366, %v4726, 0
        %v4774 = vsel %vm366, %v4727, 0
        %v4777 = vsel %vm415, %v4679, 0
        %4779 = vmatprep.subr.bf16.mxu0 0
        %4780 = vmatpush1.bf16.msra.mxu0 %v4777
        %4781 = vmatprep.subr.bf16.mxu0 0
        %4782 = vmatpush1.bf16.msra.mxu0 0
        %4783 = vmatprep.subr.bf16.mxu0 0
        %4784 = vmatpush1.bf16.msra.mxu0 0
        %4785 = vmatprep.subr.bf16.mxu0 0
        %4786 = vmatpush1.bf16.msra.mxu0 0
        %4787 = vmatprep.subr.bf16.mxu0 0
        %4788 = vmatpush1.bf16.msra.mxu0 0
        %4789 = vmatprep.subr.bf16.mxu0 0
        %4790 = vmatpush1.bf16.msra.mxu0 0
        %4791 = vmatprep.subr.bf16.mxu0 0
        %4792 = vmatpush1.bf16.msra.mxu0 0
        %4793 = vmatprep.subr.bf16.mxu0 0
        %4794 = vmatpush1.bf16.msra.mxu0 0
        %4795 = vmatprep.subr.bf16.mxu0 0
        %4796 = vmatpush1.bf16.msra.mxu0 0
        %4797 = vmatprep.subr.bf16.mxu0 0
        %4798 = vmatpush1.bf16.msra.mxu0 0
        %4799 = vmatprep.subr.bf16.mxu0 0
        %4800 = vmatpush1.bf16.msra.mxu0 0
        %4801 = vmatprep.subr.bf16.mxu0 0
        %4802 = vmatpush1.bf16.msra.mxu0 0
        %4803 = vmatprep.subr.bf16.mxu0 0
        %4804 = vmatpush1.bf16.msra.mxu0 0
        %4805 = vmatprep.subr.bf16.mxu0 0
        %4806 = vmatpush1.bf16.msra.mxu0 0
        %4807 = vmatprep.subr.bf16.mxu0 0
        %4808 = vmatpush1.bf16.msra.mxu0 0
        %4809 = vmatprep.subr.bf16.mxu0 0
        %4810 = vmatpush1.bf16.msra.mxu0 0
        %4811 = vmatprep.mubr.bf16.mxu0 0
        %4812 = vmatmul.mubr.bf16.gmra.mrb[0].mxu0 %v4729
        %v4813 = vpop.f32.mrb[0].mxu0
        %v4814 = vadd.f32 0.0, %v4813
        %v4815 = vpop.f32.mrb[0].mxu0
        %v4816 = vpop.f32.mrb[0].mxu0
        %v4817 = vadd.f32 0.0, %v4816
        %v4818 = vpop.f32.mrb[0].mxu0
        %4819 = vmatprep.mubr.bf16.mxu0 0
        %4820 = vmatmul.mubr.bf16.gmra.mrb[0].mxu0 %v4732
        %v4821 = vpop.f32.mrb[0].mxu0
        %v4822 = vadd.f32 0.0, %v4821
        %v4823 = vpop.f32.mrb[0].mxu0
        %v4824 = vpop.f32.mrb[0].mxu0
        %v4825 = vadd.f32 0.0, %v4824
        %v4826 = vpop.f32.mrb[0].mxu0
        %4827 = vmatprep.mubr.bf16.mxu0 0
        %4828 = vmatmul.mubr.bf16.gmra.mrb[0].mxu0 %v4735
        %v4829 = vpop.f32.mrb[0].mxu0
        %v4830 = vadd.f32 0.0, %v4829
        %v4831 = vpop.f32.mrb[0].mxu0
        %v4832 = vpop.f32.mrb[0].mxu0
        %v4833 = vadd.f32 0.0, %v4832
        %v4834 = vpop.f32.mrb[0].mxu0
        %4835 = vmatprep.mubr.bf16.mxu0 0
        %4836 = vmatmul.mubr.bf16.gmra.mrb[0].mxu0 %v4738
        %v4837 = vpop.f32.mrb[0].mxu0
        %v4838 = vadd.f32 0.0, %v4837
        %v4839 = vpop.f32.mrb[0].mxu0
        %v4840 = vpop.f32.mrb[0].mxu0
        %v4841 = vadd.f32 0.0, %v4840
        %v4842 = vpop.f32.mrb[0].mxu0
        %4843 = vmatprep.mubr.bf16.mxu0 0
        %4844 = vmatmul.mubr.bf16.gmra.mrb[0].mxu0 %v4741
        %v4845 = vpop.f32.mrb[0].mxu0
        %v4846 = vadd.f32 0.0, %v4845
        %v4847 = vpop.f32.mrb[0].mxu0
        %v4848 = vpop.f32.mrb[0].mxu0
        %v4849 = vadd.f32 0.0, %v4848
        %v4850 = vpop.f32.mrb[0].mxu0
        %4851 = vmatprep.mubr.bf16.mxu0 0
        %4852 = vmatmul.mubr.bf16.gmra.mrb[0].mxu0 %v4744
        %v4853 = vpop.f32.mrb[0].mxu0
        %v4854 = vadd.f32 0.0, %v4853
        %v4855 = vpop.f32.mrb[0].mxu0
        %v4856 = vpop.f32.mrb[0].mxu0
        %v4857 = vadd.f32 0.0, %v4856
        %v4858 = vpop.f32.mrb[0].mxu0
        %4859 = vmatprep.mubr.bf16.mxu0 0
        %4860 = vmatmul.mubr.bf16.gmra.mrb[0].mxu0 %v4747
        %v4861 = vpop.f32.mrb[0].mxu0
        %v4862 = vadd.f32 0.0, %v4861
        %v4863 = vpop.f32.mrb[0].mxu0
        %v4864 = vpop.f32.mrb[0].mxu0
        %v4865 = vadd.f32 0.0, %v4864
        %v4866 = vpop.f32.mrb[0].mxu0
        %4867 = vmatprep.mubr.bf16.mxu0 0
        %4868 = vmatmul.mubr.bf16.gmra.mrb[0].mxu0 %v4750
        %v4869 = vpop.f32.mrb[0].mxu0
        %v4870 = vadd.f32 0.0, %v4869
        %v4871 = vpop.f32.mrb[0].mxu0
        %v4872 = vpop.f32.mrb[0].mxu0
        %v4873 = vadd.f32 0.0, %v4872
        %v4874 = vpop.f32.mrb[0].mxu0
        %4875 = vmatprep.mubr.bf16.mxu0 0
        %4876 = vmatmul.mubr.bf16.gmra.mrb[0].mxu0 %v4753
        %v4877 = vpop.f32.mrb[0].mxu0
        %v4878 = vadd.f32 0.0, %v4877
        %v4879 = vpop.f32.mrb[0].mxu0
        %v4880 = vpop.f32.mrb[0].mxu0
        %v4881 = vadd.f32 0.0, %v4880
        %v4882 = vpop.f32.mrb[0].mxu0
        %4883 = vmatprep.mubr.bf16.mxu0 0
        %4884 = vmatmul.mubr.bf16.gmra.mrb[0].mxu0 %v4756
        %v4885 = vpop.f32.mrb[0].mxu0
        %v4886 = vadd.f32 0.0, %v4885
        %v4887 = vpop.f32.mrb[0].mxu0
        %v4888 = vpop.f32.mrb[0].mxu0
        %v4889 = vadd.f32 0.0, %v4888
        %v4890 = vpop.f32.mrb[0].mxu0
        %4891 = vmatprep.mubr.bf16.mxu0 0
        %4892 = vmatmul.mubr.bf16.gmra.mrb[0].mxu0 %v4759
        %v4893 = vpop.f32.mrb[0].mxu0
        %v4894 = vadd.f32 0.0, %v4893
        %v4895 = vpop.f32.mrb[0].mxu0
        %v4896 = vpop.f32.mrb[0].mxu0
        %v4897 = vadd.f32 0.0, %v4896
        %v4898 = vpop.f32.mrb[0].mxu0
        %4899 = vmatprep.mubr.bf16.mxu0 0
        %4900 = vmatmul.mubr.bf16.gmra.mrb[0].mxu0 %v4762
        %v4901 = vpop.f32.mrb[0].mxu0
        %v4902 = vadd.f32 0.0, %v4901
        %v4903 = vpop.f32.mrb[0].mxu0
        %v4904 = vpop.f32.mrb[0].mxu0
        %v4905 = vadd.f32 0.0, %v4904
        %v4906 = vpop.f32.mrb[0].mxu0
        %4907 = vmatprep.mubr.bf16.mxu0 0
        %4908 = vmatmul.mubr.bf16.gmra.mrb[0].mxu0 %v4765
        %v4909 = vpop.f32.mrb[0].mxu0
        %v4910 = vadd.f32 0.0, %v4909
        %v4911 = vpop.f32.mrb[0].mxu0
        %v4912 = vpop.f32.mrb[0].mxu0
        %v4913 = vadd.f32 0.0, %v4912
        %v4914 = vpop.f32.mrb[0].mxu0
        %4915 = vmatprep.mubr.bf16.mxu0 0
        %4916 = vmatmul.mubr.bf16.gmra.mrb[0].mxu0 %v4768
        %v4917 = vpop.f32.mrb[0].mxu0
        %v4918 = vadd.f32 0.0, %v4917
        %v4919 = vpop.f32.mrb[0].mxu0
        %v4920 = vpop.f32.mrb[0].mxu0
        %v4921 = vadd.f32 0.0, %v4920
        %v4922 = vpop.f32.mrb[0].mxu0
        %4923 = vmatprep.mubr.bf16.mxu0 0
        %4924 = vmatmul.mubr.bf16.gmra.mrb[0].mxu0 %v4771
        %v4925 = vpop.f32.mrb[0].mxu0
        %v4926 = vadd.f32 0.0, %v4925
        %v4927 = vpop.f32.mrb[0].mxu0
        %v4928 = vpop.f32.mrb[0].mxu0
        %v4929 = vadd.f32 0.0, %v4928
        %v4930 = vpop.f32.mrb[0].mxu0
        %4931 = vmatprep.mubr.bf16.mxu0 0
        %4932 = vmatmul.mubr.bf16.gmra.mrb[0].mxu0 %v4774
        %v4933 = vpop.f32.mrb[0].mxu0
        %v4934 = vadd.f32 0.0, %v4933
        %v4935 = vpop.f32.mrb[0].mxu0
        %v4936 = vpop.f32.mrb[0].mxu0
        %v4937 = vadd.f32 0.0, %v4936
        %v4938 = vpop.f32.mrb[0].mxu0
        %4939 = vdwg.mxu0
        %v4940 = vadd.f32 %v4646, %v4814
        %v4941 = vadd.f32 %v4647, %v4817
        %v4942 = vadd.f32 %v4648, %v4822
        %v4943 = vadd.f32 %v4649, %v4825
        %v4944 = vadd.f32 %v4650, %v4830
        %v4945 = vadd.f32 %v4651, %v4833
        %v4946 = vadd.f32 %v4652, %v4838
        %v4947 = vadd.f32 %v4653, %v4841
        %v4948 = vadd.f32 %v4654, %v4846
        %v4949 = vadd.f32 %v4655, %v4849
        %v4950 = vadd.f32 %v4656, %v4854
        %v4951 = vadd.f32 %v4657, %v4857
        %v4952 = vadd.f32 %v4658, %v4862
        %v4953 = vadd.f32 %v4659, %v4865
        %v4954 = vadd.f32 %v4660, %v4870
        %v4955 = vadd.f32 %v4661, %v4873
        %v4956 = vadd.f32 %v4662, %v4878
        %v4957 = vadd.f32 %v4663, %v4881
        %v4958 = vadd.f32 %v4664, %v4886
        %v4959 = vadd.f32 %v4665, %v4889
        %v4960 = vadd.f32 %v4666, %v4894
        %v4961 = vadd.f32 %v4667, %v4897
        %v4962 = vadd.f32 %v4668, %v4902
        %v4963 = vadd.f32 %v4669, %v4905
        %v4964 = vadd.f32 %v4670, %v4910
        %v4965 = vadd.f32 %v4671, %v4913
        %v4966 = vadd.f32 %v4672, %v4918
        %v4967 = vadd.f32 %v4673, %v4921
        %v4968 = vadd.f32 %v4674, %v4926
        %v4969 = vadd.f32 %v4675, %v4929
        %v4970 = vadd.f32 %v4676, %v4934
        %v4971 = vadd.f32 %v4677, %v4937
        %4972 = vst [vmem:[#allocation2] sm:$0xff] %v4940
        %4973 = vst [vmem:[#allocation2 + $0x8] sm:$0xff] %v4941
        %4974 = vst [vmem:[#allocation2 + $0x10] sm:$0xff] %v4942
        %4975 = vst [vmem:[#allocation2 + $0x18] sm:$0xff] %v4943
        %4976 = vst [vmem:[#allocation2 + $0x20] sm:$0xff] %v4944
        %4977 = vst [vmem:[#allocation2 + $0x28] sm:$0xff] %v4945
        %4978 = vst [vmem:[#allocation2 + $0x30] sm:$0xff] %v4946
        %4979 = vst [vmem:[#allocation2 + $0x38] sm:$0xff] %v4947
        %4980 = vst [vmem:[#allocation2 + $0x40] sm:$0xff] %v4948
        %4981 = vst [vmem:[#allocation2 + $0x48] sm:$0xff] %v4949
        %4982 = vst [vmem:[#allocation2 + $0x50] sm:$0xff] %v4950
        %4983 = vst [vmem:[#allocation2 + $0x58] sm:$0xff] %v4951
        %4984 = vst [vmem:[#allocation2 + $0x60] sm:$0xff] %v4952
        %4985 = vst [vmem:[#allocation2 + $0x68] sm:$0xff] %v4953
        %4986 = vst [vmem:[#allocation2 + $0x70] sm:$0xff] %v4954
        %4987 = vst [vmem:[#allocation2 + $0x78] sm:$0xff] %v4955
        %4988 = vst [vmem:[#allocation2 + $0x80] sm:$0xff] %v4956
        %4989 = vst [vmem:[#allocation2 + $0x88] sm:$0xff] %v4957
        %4990 = vst [vmem:[#allocation2 + $0x90] sm:$0xff] %v4958
        %4991 = vst [vmem:[#allocation2 + $0x98] sm:$0xff] %v4959
        %4992 = vst [vmem:[#allocation2 + $0xa0] sm:$0xff] %v4960
        %4993 = vst [vmem:[#allocation2 + $0xa8] sm:$0xff] %v4961
        %4994 = vst [vmem:[#allocation2 + $0xb0] sm:$0xff] %v4962
        %4995 = vst [vmem:[#allocation2 + $0xb8] sm:$0xff] %v4963
        %4996 = vst [vmem:[#allocation2 + $0xc0] sm:$0xff] %v4964
        %4997 = vst [vmem:[#allocation2 + $0xc8] sm:$0xff] %v4965
        %4998 = vst [vmem:[#allocation2 + $0xd0] sm:$0xff] %v4966
        %4999 = vst [vmem:[#allocation2 + $0xd8] sm:$0xff] %v4967
        %5000 = vst [vmem:[#allocation2 + $0xe0] sm:$0xff] %v4968
        %5001 = vst [vmem:[#allocation2 + $0xe8] sm:$0xff] %v4969
        %5002 = vst [vmem:[#allocation2 + $0xf0] sm:$0xff] %v4970
        %5003 = vst [vmem:[#allocation2 + $0xf8] sm:$0xff] %v4971
        %v5004 = vld [vmem:[%s3791] sm:$0xe]
        %v5005 = vld [vmem:[%s3791 + $0x4] sm:$0xf]
        %v5006 = vld [vmem:[%s3791 + $0x8] sm:$0x1]
        %v5007 = vld [vmem:[%s3791 + $0xc] sm:$0xe]
        %v5008 = vld [vmem:[%s3791 + $0x10] sm:$0xf]
        %v5009 = vld [vmem:[%s3791 + $0x14] sm:$0x1]
        %v5010 = vld [vmem:[%s3791 + $0x18] sm:$0xe]
        %v5011 = vld [vmem:[%s3791 + $0x1c] sm:$0xf]
        %v5012 = vld [vmem:[%s3791 + $0x20] sm:$0x1]
        %v5013 = vld [vmem:[%s3791 + $0x24] sm:$0xe]
        %v5014 = vld [vmem:[%s3791 + $0x28] sm:$0xf]
        %v5015 = vld [vmem:[%s3791 + $0x2c] sm:$0x1]
        %v5016 = vld [vmem:[%s3791 + $0x30] sm:$0xe]
        %v5017 = vld [vmem:[%s3791 + $0x34] sm:$0xf]
        %v5018 = vld [vmem:[%s3791 + $0x38] sm:$0x1]
        %v5019 = vld [vmem:[%s3791 + $0x3c] sm:$0xe]
        %v5020 = vld [vmem:[%s3791 + $0x40] sm:$0xf]
        %v5021 = vld [vmem:[%s3791 + $0x44] sm:$0x1]
        %v5022 = vld [vmem:[%s3791 + $0x48] sm:$0xe]
        %v5023 = vld [vmem:[%s3791 + $0x4c] sm:$0xf]
        %v5024 = vld [vmem:[%s3791 + $0x50] sm:$0x1]
        %v5025 = vld [vmem:[%s3791 + $0x54] sm:$0xe]
        %v5026 = vld [vmem:[%s3791 + $0x58] sm:$0xf]
        %v5027 = vld [vmem:[%s3791 + $0x5c] sm:$0x1]
        %v5028 = vld [vmem:[%s3791 + $0x60] sm:$0xe]
        %v5029 = vld [vmem:[%s3791 + $0x64] sm:$0xf]
        %v5030 = vld [vmem:[%s3791 + $0x68] sm:$0x1]
        %v5031 = vld [vmem:[%s3791 + $0x6c] sm:$0xe]
        %v5032 = vld [vmem:[%s3791 + $0x70] sm:$0xf]
        %v5033 = vld [vmem:[%s3791 + $0x74] sm:$0x1]
        %v5034 = vld [vmem:[%s3791 + $0x78] sm:$0xe]
        %v5035 = vld [vmem:[%s3791 + $0x7c] sm:$0xf]
        %v5036 = vld [vmem:[%s3791 + $0x80] sm:$0x1]
        %v5037 = vld [vmem:[%s3791 + $0x84] sm:$0xe]
        %v5038 = vld [vmem:[%s3791 + $0x88] sm:$0xf]
        %v5039 = vld [vmem:[%s3791 + $0x8c] sm:$0x1]
        %v5040 = vld [vmem:[%s3791 + $0x90] sm:$0xe]
        %v5041 = vld [vmem:[%s3791 + $0x94] sm:$0xf]
        %v5042 = vld [vmem:[%s3791 + $0x98] sm:$0x1]
        %v5043 = vld [vmem:[%s3791 + $0x9c] sm:$0xe]
        %v5044 = vld [vmem:[%s3791 + $0xa0] sm:$0xf]
        %v5045 = vld [vmem:[%s3791 + $0xa4] sm:$0x1]
        %v5046 = vld [vmem:[%s3791 + $0xa8] sm:$0xe]
        %v5047 = vld [vmem:[%s3791 + $0xac] sm:$0xf]
        %v5048 = vld [vmem:[%s3791 + $0xb0] sm:$0x1]
        %v5049 = vld [vmem:[%s3791 + $0xb4] sm:$0xe]
        %v5050 = vld [vmem:[%s3791 + $0xb8] sm:$0xf]
        %v5051 = vld [vmem:[%s3791 + $0xbc] sm:$0x1]
        %v5100 = vrot.slane %v5004, 5
        %v5101 = vrot.slane %v5100, 4
        %v5102 = vrot.slane %v5005, 5
        %v5103 = vsel %vm1535, %v5101, %v5102
        %v5104 = vrot.slane %v5102, 4
        %v5105 = vrot.slane %v5006, 5
        %v5106 = vsel %vm1535, %v5104, %v5105
        %v5107 = vrot.slane %v5007, 5
        %v5108 = vrot.slane %v5107, 4
        %v5109 = vrot.slane %v5008, 5
        %v5110 = vsel %vm1535, %v5108, %v5109
        %v5111 = vrot.slane %v5109, 4
        %v5112 = vrot.slane %v5009, 5
        %v5113 = vsel %vm1535, %v5111, %v5112
        %v5114 = vrot.slane %v5010, 5
        %v5115 = vrot.slane %v5114, 4
        %v5116 = vrot.slane %v5011, 5
        %v5117 = vsel %vm1535, %v5115, %v5116
        %v5118 = vrot.slane %v5116, 4
        %v5119 = vrot.slane %v5012, 5
        %v5120 = vsel %vm1535, %v5118, %v5119
        %v5121 = vrot.slane %v5013, 5
        %v5122 = vrot.slane %v5121, 4
        %v5123 = vrot.slane %v5014, 5
        %v5124 = vsel %vm1535, %v5122, %v5123
        %v5125 = vrot.slane %v5123, 4
        %v5126 = vrot.slane %v5015, 5
        %v5127 = vsel %vm1535, %v5125, %v5126
        %v5128 = vrot.slane %v5016, 5
        %v5129 = vrot.slane %v5128, 4
        %v5130 = vrot.slane %v5017, 5
        %v5131 = vsel %vm1535, %v5129, %v5130
        %v5132 = vrot.slane %v5130, 4
        %v5133 = vrot.slane %v5018, 5
        %v5134 = vsel %vm1535, %v5132, %v5133
        %v5135 = vrot.slane %v5019, 5
        %v5136 = vrot.slane %v5135, 4
        %v5137 = vrot.slane %v5020, 5
        %v5138 = vsel %vm1535, %v5136, %v5137
        %v5139 = vrot.slane %v5137, 4
        %v5140 = vrot.slane %v5021, 5
        %v5141 = vsel %vm1535, %v5139, %v5140
        %v5142 = vrot.slane %v5022, 5
        %v5143 = vrot.slane %v5142, 4
        %v5144 = vrot.slane %v5023, 5
        %v5145 = vsel %vm1535, %v5143, %v5144
        %v5146 = vrot.slane %v5144, 4
        %v5147 = vrot.slane %v5024, 5
        %v5148 = vsel %vm1535, %v5146, %v5147
        %v5149 = vrot.slane %v5025, 5
        %v5150 = vrot.slane %v5149, 4
        %v5151 = vrot.slane %v5026, 5
        %v5152 = vsel %vm1535, %v5150, %v5151
        %v5153 = vrot.slane %v5151, 4
        %v5154 = vrot.slane %v5027, 5
        %v5155 = vsel %vm1535, %v5153, %v5154
        %v5156 = vrot.slane %v5028, 5
        %v5157 = vrot.slane %v5156, 4
        %v5158 = vrot.slane %v5029, 5
        %v5159 = vsel %vm1535, %v5157, %v5158
        %v5160 = vrot.slane %v5158, 4
        %v5161 = vrot.slane %v5030, 5
        %v5162 = vsel %vm1535, %v5160, %v5161
        %v5163 = vrot.slane %v5031, 5
        %v5164 = vrot.slane %v5163, 4
        %v5165 = vrot.slane %v5032, 5
        %v5166 = vsel %vm1535, %v5164, %v5165
        %v5167 = vrot.slane %v5165, 4
        %v5168 = vrot.slane %v5033, 5
        %v5169 = vsel %vm1535, %v5167, %v5168
        %v5170 = vrot.slane %v5034, 5
        %v5171 = vrot.slane %v5170, 4
        %v5172 = vrot.slane %v5035, 5
        %v5173 = vsel %vm1535, %v5171, %v5172
        %v5174 = vrot.slane %v5172, 4
        %v5175 = vrot.slane %v5036, 5
        %v5176 = vsel %vm1535, %v5174, %v5175
        %v5177 = vrot.slane %v5037, 5
        %v5178 = vrot.slane %v5177, 4
        %v5179 = vrot.slane %v5038, 5
        %v5180 = vsel %vm1535, %v5178, %v5179
        %v5181 = vrot.slane %v5179, 4
        %v5182 = vrot.slane %v5039, 5
        %v5183 = vsel %vm1535, %v5181, %v5182
        %v5184 = vrot.slane %v5040, 5
        %v5185 = vrot.slane %v5184, 4
        %v5186 = vrot.slane %v5041, 5
        %v5187 = vsel %vm1535, %v5185, %v5186
        %v5188 = vrot.slane %v5186, 4
        %v5189 = vrot.slane %v5042, 5
        %v5190 = vsel %vm1535, %v5188, %v5189
        %v5191 = vrot.slane %v5043, 5
        %v5192 = vrot.slane %v5191, 4
        %v5193 = vrot.slane %v5044, 5
        %v5194 = vsel %vm1535, %v5192, %v5193
        %v5195 = vrot.slane %v5193, 4
        %v5196 = vrot.slane %v5045, 5
        %v5197 = vsel %vm1535, %v5195, %v5196
        %v5198 = vrot.slane %v5046, 5
        %v5199 = vrot.slane %v5198, 4
        %v5200 = vrot.slane %v5047, 5
        %v5201 = vsel %vm1535, %v5199, %v5200
        %v5202 = vrot.slane %v5200, 4
        %v5203 = vrot.slane %v5048, 5
        %v5204 = vsel %vm1535, %v5202, %v5203
        %v5205 = vrot.slane %v5049, 5
        %v5206 = vrot.slane %v5205, 4
        %v5207 = vrot.slane %v5050, 5
        %v5208 = vsel %vm1535, %v5206, %v5207
        %v5209 = vrot.slane %v5207, 4
        %v5210 = vrot.slane %v5051, 5
        %v5211 = vsel %vm1535, %v5209, %v5210
        %v5212 = vld [vmem:[#allocation2] sm:$0xff]
        %v5213 = vld [vmem:[#allocation2 + $0x8] sm:$0xff]
        %v5214 = vld [vmem:[#allocation2 + $0x10] sm:$0xff]
        %v5215 = vld [vmem:[#allocation2 + $0x18] sm:$0xff]
        %v5216 = vld [vmem:[#allocation2 + $0x20] sm:$0xff]
        %v5217 = vld [vmem:[#allocation2 + $0x28] sm:$0xff]
        %v5218 = vld [vmem:[#allocation2 + $0x30] sm:$0xff]
        %v5219 = vld [vmem:[#allocation2 + $0x38] sm:$0xff]
        %v5220 = vld [vmem:[#allocation2 + $0x40] sm:$0xff]
        %v5221 = vld [vmem:[#allocation2 + $0x48] sm:$0xff]
        %v5222 = vld [vmem:[#allocation2 + $0x50] sm:$0xff]
        %v5223 = vld [vmem:[#allocation2 + $0x58] sm:$0xff]
        %v5224 = vld [vmem:[#allocation2 + $0x60] sm:$0xff]
        %v5225 = vld [vmem:[#allocation2 + $0x68] sm:$0xff]
        %v5226 = vld [vmem:[#allocation2 + $0x70] sm:$0xff]
        %v5227 = vld [vmem:[#allocation2 + $0x78] sm:$0xff]
        %v5228 = vld [vmem:[#allocation2 + $0x80] sm:$0xff]
        %v5229 = vld [vmem:[#allocation2 + $0x88] sm:$0xff]
        %v5230 = vld [vmem:[#allocation2 + $0x90] sm:$0xff]
        %v5231 = vld [vmem:[#allocation2 + $0x98] sm:$0xff]
        %v5232 = vld [vmem:[#allocation2 + $0xa0] sm:$0xff]
        %v5233 = vld [vmem:[#allocation2 + $0xa8] sm:$0xff]
        %v5234 = vld [vmem:[#allocation2 + $0xb0] sm:$0xff]
        %v5235 = vld [vmem:[#allocation2 + $0xb8] sm:$0xff]
        %v5236 = vld [vmem:[#allocation2 + $0xc0] sm:$0xff]
        %v5237 = vld [vmem:[#allocation2 + $0xc8] sm:$0xff]
        %v5238 = vld [vmem:[#allocation2 + $0xd0] sm:$0xff]
        %v5239 = vld [vmem:[#allocation2 + $0xd8] sm:$0xff]
        %v5240 = vld [vmem:[#allocation2 + $0xe0] sm:$0xff]
        %v5241 = vld [vmem:[#allocation2 + $0xe8] sm:$0xff]
        %v5242 = vld [vmem:[#allocation2 + $0xf0] sm:$0xff]
        %v5243 = vld [vmem:[#allocation2 + $0xf8] sm:$0xff]
        %s5244 = scalar_lea.vmem %s1, 16
        %v5245 = vld [vmem:[%s5244] sm:$0x3]
        %v5246 = vunpack.c.l.b16 %v5103
        %v5247 = vunpack.c.l.b16 %v5106
        %v5248 = vunpack.c.l.b16 %v5110
        %v5249 = vunpack.c.l.b16 %v5113
        %v5250 = vunpack.c.l.b16 %v5117
        %v5251 = vunpack.c.l.b16 %v5120
        %v5252 = vunpack.c.l.b16 %v5124
        %v5253 = vunpack.c.l.b16 %v5127
        %v5254 = vunpack.c.l.b16 %v5131
        %v5255 = vunpack.c.l.b16 %v5134
        %v5256 = vunpack.c.l.b16 %v5138
        %v5257 = vunpack.c.l.b16 %v5141
        %v5258 = vunpack.c.l.b16 %v5145
        %v5259 = vunpack.c.l.b16 %v5148
        %v5260 = vunpack.c.l.b16 %v5152
        %v5261 = vunpack.c.l.b16 %v5155
        %v5262 = vunpack.c.l.b16 %v5159
        %v5263 = vunpack.c.l.b16 %v5162
        %v5264 = vunpack.c.l.b16 %v5166
        %v5265 = vunpack.c.l.b16 %v5169
        %v5266 = vunpack.c.l.b16 %v5173
        %v5267 = vunpack.c.l.b16 %v5176
        %v5268 = vunpack.c.l.b16 %v5180
        %v5269 = vunpack.c.l.b16 %v5183
        %v5270 = vunpack.c.l.b16 %v5187
        %v5271 = vunpack.c.l.b16 %v5190
        %v5272 = vunpack.c.l.b16 %v5194
        %v5273 = vunpack.c.l.b16 %v5197
        %v5274 = vunpack.c.l.b16 %v5201
        %v5275 = vunpack.c.l.b16 %v5204
        %v5276 = vunpack.c.l.b16 %v5208
        %v5277 = vunpack.c.l.b16 %v5211
        %v5278 = vpack.c.b16 %v5247, %v5246
        %v5279 = vpack.c.b16 %v5249, %v5248
        %v5280 = vpack.c.b16 %v5251, %v5250
        %v5281 = vpack.c.b16 %v5253, %v5252
        %v5282 = vpack.c.b16 %v5255, %v5254
        %v5283 = vpack.c.b16 %v5257, %v5256
        %v5284 = vpack.c.b16 %v5259, %v5258
        %v5285 = vpack.c.b16 %v5261, %v5260
        %v5286 = vpack.c.b16 %v5263, %v5262
        %v5287 = vpack.c.b16 %v5265, %v5264
        %v5288 = vpack.c.b16 %v5267, %v5266
        %v5289 = vpack.c.b16 %v5269, %v5268
        %v5290 = vpack.c.b16 %v5271, %v5270
        %v5291 = vpack.c.b16 %v5273, %v5272
        %v5292 = vpack.c.b16 %v5275, %v5274
        %v5293 = vpack.c.b16 %v5277, %v5276
        %v5295 = vsel %vm366, %v5278, 0
        %v5298 = vsel %vm366, %v5279, 0
        %v5301 = vsel %vm366, %v5280, 0
        %v5304 = vsel %vm366, %v5281, 0
        %v5307 = vsel %vm366, %v5282, 0
        %v5310 = vsel %vm366, %v5283, 0
        %v5313 = vsel %vm366, %v5284, 0
        %v5316 = vsel %vm366, %v5285, 0
        %v5319 = vsel %vm366, %v5286, 0
        %v5322 = vsel %vm366, %v5287, 0
        %v5325 = vsel %vm366, %v5288, 0
        %v5328 = vsel %vm366, %v5289, 0
        %v5331 = vsel %vm366, %v5290, 0
        %v5334 = vsel %vm366, %v5291, 0
        %v5337 = vsel %vm366, %v5292, 0
        %v5340 = vsel %vm366, %v5293, 0
        %v5343 = vsel %vm415, %v5245, 0
        %5345 = vmatprep.subr.bf16.mxu0 0
        %5346 = vmatpush1.bf16.msra.mxu0 %v5343
        %5347 = vmatprep.subr.bf16.mxu0 0
        %5348 = vmatpush1.bf16.msra.mxu0 0
        %5349 = vmatprep.subr.bf16.mxu0 0
        %5350 = vmatpush1.bf16.msra.mxu0 0
        %5351 = vmatprep.subr.bf16.mxu0 0
        %5352 = vmatpush1.bf16.msra.mxu0 0
        %5353 = vmatprep.subr.bf16.mxu0 0
        %5354 = vmatpush1.bf16.msra.mxu0 0
        %5355 = vmatprep.subr.bf16.mxu0 0
        %5356 = vmatpush1.bf16.msra.mxu0 0
        %5357 = vmatprep.subr.bf16.mxu0 0
        %5358 = vmatpush1.bf16.msra.mxu0 0
        %5359 = vmatprep.subr.bf16.mxu0 0
        %5360 = vmatpush1.bf16.msra.mxu0 0
        %5361 = vmatprep.subr.bf16.mxu0 0
        %5362 = vmatpush1.bf16.msra.mxu0 0
        %5363 = vmatprep.subr.bf16.mxu0 0
        %5364 = vmatpush1.bf16.msra.mxu0 0
        %5365 = vmatprep.subr.bf16.mxu0 0
        %5366 = vmatpush1.bf16.msra.mxu0 0
        %5367 = vmatprep.subr.bf16.mxu0 0
        %5368 = vmatpush1.bf16.msra.mxu0 0
        %5369 = vmatprep.subr.bf16.mxu0 0
        %5370 = vmatpush1.bf16.msra.mxu0 0
        %5371 = vmatprep.subr.bf16.mxu0 0
        %5372 = vmatpush1.bf16.msra.mxu0 0
        %5373 = vmatprep.subr.bf16.mxu0 0
        %5374 = vmatpush1.bf16.msra.mxu0 0
        %5375 = vmatprep.subr.bf16.mxu0 0
        %5376 = vmatpush1.bf16.msra.mxu0 0
        %5377 = vmatprep.mubr.bf16.mxu0 0
        %5378 = vmatmul.mubr.bf16.gmra.mrb[0].mxu0 %v5295
        %v5379 = vpop.f32.mrb[0].mxu0
        %v5380 = vadd.f32 0.0, %v5379
        %v5381 = vpop.f32.mrb[0].mxu0
        %v5382 = vpop.f32.mrb[0].mxu0
        %v5383 = vadd.f32 0.0, %v5382
        %v5384 = vpop.f32.mrb[0].mxu0
        %5385 = vmatprep.mubr.bf16.mxu0 0
        %5386 = vmatmul.mubr.bf16.gmra.mrb[0].mxu0 %v5298
        %v5387 = vpop.f32.mrb[0].mxu0
        %v5388 = vadd.f32 0.0, %v5387
        %v5389 = vpop.f32.mrb[0].mxu0
        %v5390 = vpop.f32.mrb[0].mxu0
        %v5391 = vadd.f32 0.0, %v5390
        %v5392 = vpop.f32.mrb[0].mxu0
        %5393 = vmatprep.mubr.bf16.mxu0 0
        %5394 = vmatmul.mubr.bf16.gmra.mrb[0].mxu0 %v5301
        %v5395 = vpop.f32.mrb[0].mxu0
        %v5396 = vadd.f32 0.0, %v5395
        %v5397 = vpop.f32.mrb[0].mxu0
        %v5398 = vpop.f32.mrb[0].mxu0
        %v5399 = vadd.f32 0.0, %v5398
        %v5400 = vpop.f32.mrb[0].mxu0
        %5401 = vmatprep.mubr.bf16.mxu0 0
        %5402 = vmatmul.mubr.bf16.gmra.mrb[0].mxu0 %v5304
        %v5403 = vpop.f32.mrb[0].mxu0
        %v5404 = vadd.f32 0.0, %v5403
        %v5405 = vpop.f32.mrb[0].mxu0
        %v5406 = vpop.f32.mrb[0].mxu0
        %v5407 = vadd.f32 0.0, %v5406
        %v5408 = vpop.f32.mrb[0].mxu0
        %5409 = vmatprep.mubr.bf16.mxu0 0
        %5410 = vmatmul.mubr.bf16.gmra.mrb[0].mxu0 %v5307
        %v5411 = vpop.f32.mrb[0].mxu0
        %v5412 = vadd.f32 0.0, %v5411
        %v5413 = vpop.f32.mrb[0].mxu0
        %v5414 = vpop.f32.mrb[0].mxu0
        %v5415 = vadd.f32 0.0, %v5414
        %v5416 = vpop.f32.mrb[0].mxu0
        %5417 = vmatprep.mubr.bf16.mxu0 0
        %5418 = vmatmul.mubr.bf16.gmra.mrb[0].mxu0 %v5310
        %v5419 = vpop.f32.mrb[0].mxu0
        %v5420 = vadd.f32 0.0, %v5419
        %v5421 = vpop.f32.mrb[0].mxu0
        %v5422 = vpop.f32.mrb[0].mxu0
        %v5423 = vadd.f32 0.0, %v5422
        %v5424 = vpop.f32.mrb[0].mxu0
        %5425 = vmatprep.mubr.bf16.mxu0 0
        %5426 = vmatmul.mubr.bf16.gmra.mrb[0].mxu0 %v5313
        %v5427 = vpop.f32.mrb[0].mxu0
        %v5428 = vadd.f32 0.0, %v5427
        %v5429 = vpop.f32.mrb[0].mxu0
        %v5430 = vpop.f32.mrb[0].mxu0
        %v5431 = vadd.f32 0.0, %v5430
        %v5432 = vpop.f32.mrb[0].mxu0
        %5433 = vmatprep.mubr.bf16.mxu0 0
        %5434 = vmatmul.mubr.bf16.gmra.mrb[0].mxu0 %v5316
        %v5435 = vpop.f32.mrb[0].mxu0
        %v5436 = vadd.f32 0.0, %v5435
        %v5437 = vpop.f32.mrb[0].mxu0
        %v5438 = vpop.f32.mrb[0].mxu0
        %v5439 = vadd.f32 0.0, %v5438
        %v5440 = vpop.f32.mrb[0].mxu0
        %5441 = vmatprep.mubr.bf16.mxu0 0
        %5442 = vmatmul.mubr.bf16.gmra.mrb[0].mxu0 %v5319
        %v5443 = vpop.f32.mrb[0].mxu0
        %v5444 = vadd.f32 0.0, %v5443
        %v5445 = vpop.f32.mrb[0].mxu0
        %v5446 = vpop.f32.mrb[0].mxu0
        %v5447 = vadd.f32 0.0, %v5446
        %v5448 = vpop.f32.mrb[0].mxu0
        %5449 = vmatprep.mubr.bf16.mxu0 0
        %5450 = vmatmul.mubr.bf16.gmra.mrb[0].mxu0 %v5322
        %v5451 = vpop.f32.mrb[0].mxu0
        %v5452 = vadd.f32 0.0, %v5451
        %v5453 = vpop.f32.mrb[0].mxu0
        %v5454 = vpop.f32.mrb[0].mxu0
        %v5455 = vadd.f32 0.0, %v5454
        %v5456 = vpop.f32.mrb[0].mxu0
        %5457 = vmatprep.mubr.bf16.mxu0 0
        %5458 = vmatmul.mubr.bf16.gmra.mrb[0].mxu0 %v5325
        %v5459 = vpop.f32.mrb[0].mxu0
        %v5460 = vadd.f32 0.0, %v5459
        %v5461 = vpop.f32.mrb[0].mxu0
        %v5462 = vpop.f32.mrb[0].mxu0
        %v5463 = vadd.f32 0.0, %v5462
        %v5464 = vpop.f32.mrb[0].mxu0
        %5465 = vmatprep.mubr.bf16.mxu0 0
        %5466 = vmatmul.mubr.bf16.gmra.mrb[0].mxu0 %v5328
        %v5467 = vpop.f32.mrb[0].mxu0
        %v5468 = vadd.f32 0.0, %v5467
        %v5469 = vpop.f32.mrb[0].mxu0
        %v5470 = vpop.f32.mrb[0].mxu0
        %v5471 = vadd.f32 0.0, %v5470
        %v5472 = vpop.f32.mrb[0].mxu0
        %5473 = vmatprep.mubr.bf16.mxu0 0
        %5474 = vmatmul.mubr.bf16.gmra.mrb[0].mxu0 %v5331
        %v5475 = vpop.f32.mrb[0].mxu0
        %v5476 = vadd.f32 0.0, %v5475
        %v5477 = vpop.f32.mrb[0].mxu0
        %v5478 = vpop.f32.mrb[0].mxu0
        %v5479 = vadd.f32 0.0, %v5478
        %v5480 = vpop.f32.mrb[0].mxu0
        %5481 = vmatprep.mubr.bf16.mxu0 0
        %5482 = vmatmul.mubr.bf16.gmra.mrb[0].mxu0 %v5334
        %v5483 = vpop.f32.mrb[0].mxu0
        %v5484 = vadd.f32 0.0, %v5483
        %v5485 = vpop.f32.mrb[0].mxu0
        %v5486 = vpop.f32.mrb[0].mxu0
        %v5487 = vadd.f32 0.0, %v5486
        %v5488 = vpop.f32.mrb[0].mxu0
        %5489 = vmatprep.mubr.bf16.mxu0 0
        %5490 = vmatmul.mubr.bf16.gmra.mrb[0].mxu0 %v5337
        %v5491 = vpop.f32.mrb[0].mxu0
        %v5492 = vadd.f32 0.0, %v5491
        %v5493 = vpop.f32.mrb[0].mxu0
        %v5494 = vpop.f32.mrb[0].mxu0
        %v5495 = vadd.f32 0.0, %v5494
        %v5496 = vpop.f32.mrb[0].mxu0
        %5497 = vmatprep.mubr.bf16.mxu0 0
        %5498 = vmatmul.mubr.bf16.gmra.mrb[0].mxu0 %v5340
        %v5499 = vpop.f32.mrb[0].mxu0
        %v5500 = vadd.f32 0.0, %v5499
        %v5501 = vpop.f32.mrb[0].mxu0
        %v5502 = vpop.f32.mrb[0].mxu0
        %v5503 = vadd.f32 0.0, %v5502
        %v5504 = vpop.f32.mrb[0].mxu0
        %5505 = vdwg.mxu0
        %v5506 = vadd.f32 %v5212, %v5380
        %v5507 = vadd.f32 %v5213, %v5383
        %v5508 = vadd.f32 %v5214, %v5388
        %v5509 = vadd.f32 %v5215, %v5391
        %v5510 = vadd.f32 %v5216, %v5396
        %v5511 = vadd.f32 %v5217, %v5399
        %v5512 = vadd.f32 %v5218, %v5404
        %v5513 = vadd.f32 %v5219, %v5407
        %v5514 = vadd.f32 %v5220, %v5412
        %v5515 = vadd.f32 %v5221, %v5415
        %v5516 = vadd.f32 %v5222, %v5420
        %v5517 = vadd.f32 %v5223, %v5423
        %v5518 = vadd.f32 %v5224, %v5428
        %v5519 = vadd.f32 %v5225, %v5431
        %v5520 = vadd.f32 %v5226, %v5436
        %v5521 = vadd.f32 %v5227, %v5439
        %v5522 = vadd.f32 %v5228, %v5444
        %v5523 = vadd.f32 %v5229, %v5447
        %v5524 = vadd.f32 %v5230, %v5452
        %v5525 = vadd.f32 %v5231, %v5455
        %v5526 = vadd.f32 %v5232, %v5460
        %v5527 = vadd.f32 %v5233, %v5463
        %v5528 = vadd.f32 %v5234, %v5468
        %v5529 = vadd.f32 %v5235, %v5471
        %v5530 = vadd.f32 %v5236, %v5476
        %v5531 = vadd.f32 %v5237, %v5479
        %v5532 = vadd.f32 %v5238, %v5484
        %v5533 = vadd.f32 %v5239, %v5487
        %v5534 = vadd.f32 %v5240, %v5492
        %v5535 = vadd.f32 %v5241, %v5495
        %v5536 = vadd.f32 %v5242, %v5500
        %v5537 = vadd.f32 %v5243, %v5503
        %5538 = vst [vmem:[#allocation2] sm:$0xff] %v5506
        %5539 = vst [vmem:[#allocation2 + $0x8] sm:$0xff] %v5507
        %5540 = vst [vmem:[#allocation2 + $0x10] sm:$0xff] %v5508
        %5541 = vst [vmem:[#allocation2 + $0x18] sm:$0xff] %v5509
        %5542 = vst [vmem:[#allocation2 + $0x20] sm:$0xff] %v5510
        %5543 = vst [vmem:[#allocation2 + $0x28] sm:$0xff] %v5511
        %5544 = vst [vmem:[#allocation2 + $0x30] sm:$0xff] %v5512
        %5545 = vst [vmem:[#allocation2 + $0x38] sm:$0xff] %v5513
        %5546 = vst [vmem:[#allocation2 + $0x40] sm:$0xff] %v5514
        %5547 = vst [vmem:[#allocation2 + $0x48] sm:$0xff] %v5515
        %5548 = vst [vmem:[#allocation2 + $0x50] sm:$0xff] %v5516
        %5549 = vst [vmem:[#allocation2 + $0x58] sm:$0xff] %v5517
        %5550 = vst [vmem:[#allocation2 + $0x60] sm:$0xff] %v5518
        %5551 = vst [vmem:[#allocation2 + $0x68] sm:$0xff] %v5519
        %5552 = vst [vmem:[#allocation2 + $0x70] sm:$0xff] %v5520
        %5553 = vst [vmem:[#allocation2 + $0x78] sm:$0xff] %v5521
        %5554 = vst [vmem:[#allocation2 + $0x80] sm:$0xff] %v5522
        %5555 = vst [vmem:[#allocation2 + $0x88] sm:$0xff] %v5523
        %5556 = vst [vmem:[#allocation2 + $0x90] sm:$0xff] %v5524
        %5557 = vst [vmem:[#allocation2 + $0x98] sm:$0xff] %v5525
        %5558 = vst [vmem:[#allocation2 + $0xa0] sm:$0xff] %v5526
        %5559 = vst [vmem:[#allocation2 + $0xa8] sm:$0xff] %v5527
        %5560 = vst [vmem:[#allocation2 + $0xb0] sm:$0xff] %v5528
        %5561 = vst [vmem:[#allocation2 + $0xb8] sm:$0xff] %v5529
        %5562 = vst [vmem:[#allocation2 + $0xc0] sm:$0xff] %v5530
        %5563 = vst [vmem:[#allocation2 + $0xc8] sm:$0xff] %v5531
        %5564 = vst [vmem:[#allocation2 + $0xd0] sm:$0xff] %v5532
        %5565 = vst [vmem:[#allocation2 + $0xd8] sm:$0xff] %v5533
        %5566 = vst [vmem:[#allocation2 + $0xe0] sm:$0xff] %v5534
        %5567 = vst [vmem:[#allocation2 + $0xe8] sm:$0xff] %v5535
        %5568 = vst [vmem:[#allocation2 + $0xf0] sm:$0xff] %v5536
        %5569 = vst [vmem:[#allocation2 + $0xf8] sm:$0xff] %v5537
        %v5570 = vld [vmem:[#allocation2] sm:$0xff]
        %v5571 = vld [vmem:[#allocation2 + $0x8] sm:$0xff]
        %v5572 = vld [vmem:[#allocation2 + $0x10] sm:$0xff]
        %v5573 = vld [vmem:[#allocation2 + $0x18] sm:$0xff]
        %v5574 = vld [vmem:[#allocation2 + $0x20] sm:$0xff]
        %v5575 = vld [vmem:[#allocation2 + $0x28] sm:$0xff]
        %v5576 = vld [vmem:[#allocation2 + $0x30] sm:$0xff]
        %v5577 = vld [vmem:[#allocation2 + $0x38] sm:$0xff]
        %v5578 = vld [vmem:[#allocation2 + $0x40] sm:$0xff]
        %v5579 = vld [vmem:[#allocation2 + $0x48] sm:$0xff]
        %v5580 = vld [vmem:[#allocation2 + $0x50] sm:$0xff]
        %v5581 = vld [vmem:[#allocation2 + $0x58] sm:$0xff]
        %v5582 = vld [vmem:[#allocation2 + $0x60] sm:$0xff]
        %v5583 = vld [vmem:[#allocation2 + $0x68] sm:$0xff]
        %v5584 = vld [vmem:[#allocation2 + $0x70] sm:$0xff]
        %v5585 = vld [vmem:[#allocation2 + $0x78] sm:$0xff]
        %v5586 = vld [vmem:[#allocation2 + $0x80] sm:$0xff]
        %v5587 = vld [vmem:[#allocation2 + $0x88] sm:$0xff]
        %v5588 = vld [vmem:[#allocation2 + $0x90] sm:$0xff]
        %v5589 = vld [vmem:[#allocation2 + $0x98] sm:$0xff]
        %v5590 = vld [vmem:[#allocation2 + $0xa0] sm:$0xff]
        %v5591 = vld [vmem:[#allocation2 + $0xa8] sm:$0xff]
        %v5592 = vld [vmem:[#allocation2 + $0xb0] sm:$0xff]
        %v5593 = vld [vmem:[#allocation2 + $0xb8] sm:$0xff]
        %v5594 = vld [vmem:[#allocation2 + $0xc0] sm:$0xff]
        %v5595 = vld [vmem:[#allocation2 + $0xc8] sm:$0xff]
        %v5596 = vld [vmem:[#allocation2 + $0xd0] sm:$0xff]
        %v5597 = vld [vmem:[#allocation2 + $0xd8] sm:$0xff]
        %v5598 = vld [vmem:[#allocation2 + $0xe0] sm:$0xff]
        %v5599 = vld [vmem:[#allocation2 + $0xe8] sm:$0xff]
        %v5600 = vld [vmem:[#allocation2 + $0xf0] sm:$0xff]
        %v5601 = vld [vmem:[#allocation2 + $0xf8] sm:$0xff]
        %v5602 = vld [vmem:[%s2] sm:$0x1]
        %v5604 = vlaneseq
        %v5605 = vshrl.u32 %v5604, 7
        %v5606 = vsub.s32 0, %v5605
        %v5607 = vrot.slane %v5602, %v5606
        %v5609 = vadd.f32 %v5570, %v5607
        %v5610 = vadd.f32 %v5571, %v5607
        %v5611 = vadd.f32 %v5572, %v5607
        %v5612 = vadd.f32 %v5573, %v5607
        %v5613 = vadd.f32 %v5574, %v5607
        %v5614 = vadd.f32 %v5575, %v5607
        %v5615 = vadd.f32 %v5576, %v5607
        %v5616 = vadd.f32 %v5577, %v5607
        %v5617 = vadd.f32 %v5578, %v5607
        %v5618 = vadd.f32 %v5579, %v5607
        %v5619 = vadd.f32 %v5580, %v5607
        %v5620 = vadd.f32 %v5581, %v5607
        %v5621 = vadd.f32 %v5582, %v5607
        %v5622 = vadd.f32 %v5583, %v5607
        %v5623 = vadd.f32 %v5584, %v5607
        %v5624 = vadd.f32 %v5585, %v5607
        %v5625 = vadd.f32 %v5586, %v5607
        %v5626 = vadd.f32 %v5587, %v5607
        %v5627 = vadd.f32 %v5588, %v5607
        %v5628 = vadd.f32 %v5589, %v5607
        %v5629 = vadd.f32 %v5590, %v5607
        %v5630 = vadd.f32 %v5591, %v5607
        %v5631 = vadd.f32 %v5592, %v5607
        %v5632 = vadd.f32 %v5593, %v5607
        %v5633 = vadd.f32 %v5594, %v5607
        %v5634 = vadd.f32 %v5595, %v5607
        %v5635 = vadd.f32 %v5596, %v5607
        %v5636 = vadd.f32 %v5597, %v5607
        %v5637 = vadd.f32 %v5598, %v5607
        %v5638 = vadd.f32 %v5599, %v5607
        %v5639 = vadd.f32 %v5600, %v5607
        %v5640 = vadd.f32 %v5601, %v5607
        %v5641 = vmax.f32 %v5609, 0.0
        %v5642 = vmax.f32 %v5610, 0.0
        %v5643 = vmax.f32 %v5611, 0.0
        %v5644 = vmax.f32 %v5612, 0.0
        %v5645 = vmax.f32 %v5613, 0.0
        %v5646 = vmax.f32 %v5614, 0.0
        %v5647 = vmax.f32 %v5615, 0.0
        %v5648 = vmax.f32 %v5616, 0.0
        %v5649 = vmax.f32 %v5617, 0.0
        %v5650 = vmax.f32 %v5618, 0.0
        %v5651 = vmax.f32 %v5619, 0.0
        %v5652 = vmax.f32 %v5620, 0.0
        %v5653 = vmax.f32 %v5621, 0.0
        %v5654 = vmax.f32 %v5622, 0.0
        %v5655 = vmax.f32 %v5623, 0.0
        %v5656 = vmax.f32 %v5624, 0.0
        %v5657 = vmax.f32 %v5625, 0.0
        %v5658 = vmax.f32 %v5626, 0.0
        %v5659 = vmax.f32 %v5627, 0.0
        %v5660 = vmax.f32 %v5628, 0.0
        %v5661 = vmax.f32 %v5629, 0.0
        %v5662 = vmax.f32 %v5630, 0.0
        %v5663 = vmax.f32 %v5631, 0.0
        %v5664 = vmax.f32 %v5632, 0.0
        %v5665 = vmax.f32 %v5633, 0.0
        %v5666 = vmax.f32 %v5634, 0.0
        %v5667 = vmax.f32 %v5635, 0.0
        %v5668 = vmax.f32 %v5636, 0.0
        %v5669 = vmax.f32 %v5637, 0.0
        %v5670 = vmax.f32 %v5638, 0.0
        %v5671 = vmax.f32 %v5639, 0.0
        %v5672 = vmax.f32 %v5640, 0.0
        %5673 = vst [vmem:[%s177] sm:$0xff] %v5641
        %5674 = vst [vmem:[%s177 + $0x8] sm:$0xff] %v5642
        %5675 = vst [vmem:[%s177 + $0x10] sm:$0xff] %v5643
        %5676 = vst [vmem:[%s177 + $0x18] sm:$0xff] %v5644
        %5677 = vst [vmem:[%s177 + $0x20] sm:$0xff] %v5645
        %5678 = vst [vmem:[%s177 + $0x28] sm:$0xff] %v5646
        %5679 = vst [vmem:[%s177 + $0x30] sm:$0xff] %v5647
        %5680 = vst [vmem:[%s177 + $0x38] sm:$0xff] %v5648
        %5681 = vst [vmem:[%s177 + $0x40] sm:$0xff] %v5649
        %5682 = vst [vmem:[%s177 + $0x48] sm:$0xff] %v5650
        %5683 = vst [vmem:[%s177 + $0x50] sm:$0xff] %v5651
        %5684 = vst [vmem:[%s177 + $0x58] sm:$0xff] %v5652
        %5685 = vst [vmem:[%s177 + $0x60] sm:$0xff] %v5653
        %5686 = vst [vmem:[%s177 + $0x68] sm:$0xff] %v5654
        %5687 = vst [vmem:[%s177 + $0x70] sm:$0xff] %v5655
        %5688 = vst [vmem:[%s177 + $0x78] sm:$0xff] %v5656
        %5689 = vst [vmem:[%s177 + $0x80] sm:$0xff] %v5657
        %5690 = vst [vmem:[%s177 + $0x88] sm:$0xff] %v5658
        %5691 = vst [vmem:[%s177 + $0x90] sm:$0xff] %v5659
        %5692 = vst [vmem:[%s177 + $0x98] sm:$0xff] %v5660
        %5693 = vst [vmem:[%s177 + $0xa0] sm:$0xff] %v5661
        %5694 = vst [vmem:[%s177 + $0xa8] sm:$0xff] %v5662
        %5695 = vst [vmem:[%s177 + $0xb0] sm:$0xff] %v5663
        %5696 = vst [vmem:[%s177 + $0xb8] sm:$0xff] %v5664
        %5697 = vst [vmem:[%s177 + $0xc0] sm:$0xff] %v5665
        %5698 = vst [vmem:[%s177 + $0xc8] sm:$0xff] %v5666
        %5699 = vst [vmem:[%s177 + $0xd0] sm:$0xff] %v5667
        %5700 = vst [vmem:[%s177 + $0xd8] sm:$0xff] %v5668
        %5701 = vst [vmem:[%s177 + $0xe0] sm:$0xff] %v5669
        %5702 = vst [vmem:[%s177 + $0xe8] sm:$0xff] %v5670
        %5703 = vst [vmem:[%s177 + $0xf0] sm:$0xff] %v5671
        %5704 = vst [vmem:[%s177 + $0xf8] sm:$0xff] %v5672
        %s5705 = sand.u32 %s107, 1
        %s5706 = scalar_lea.sflag [#allocation4], %s5705
        %s5707 = sand.u32 %s107, 1
        %s5708 = smul.addr %s5707, 256
        %s5709 = scalar_lea.vmem [#allocation3], %s5708
        // Predicated region
        $region33: #{tpu_custom_call.1} parent=31 // pred_check
          %p5710 = pneg %p117
        $region34: #{tpu_custom_call.1} parent=31 // pred_check_branch
          %5712 = sbr.rel (%p5710) target = $region36
        $region35: #{tpu_custom_call.1} parent=31 // pred_region
          %s5713 = smul.u32 32, %s22
          %s5715 = ssub.s32 4096, 4096
          %5716 = vsyncadd %s5706, %s5715
          %s5717 = smul.addr %s21, 32
          %s5718 = sadd.s32 %s5713, %s5717
          %s5719 = smul.addr %s5718, 128
          %s5720 = scalar_lea.hbm %s3, %s5719
          %s5721 = sshll.u32 %s5709, 4
          %s5722 = int_to_ptr.vmem [resolvable:$true] %s5721
          %5727 = dma.vmem_to_hbm [thread:$0]  %s5722, 4096, %s5720, %s5706, 128, 128, 8
        $region36: #{tpu_custom_call.1} parent=31 // pred_fallthru
          _
      $region32: #{tpu_custom_call.1} parent=5 // pred_fallthru
        _
      %p5728 = scmp.le.s32.totalorder 2, %s12
      // Predicated region
      $region37: #{tpu_custom_call.1} parent=5 // pred_check
        %p5729 = pneg %p5728
      $region38: #{tpu_custom_call.1} parent=5 // pred_check_branch
        %5731 = sbr.rel (%p5729) target = $region40
      $region39: #{tpu_custom_call.1} parent=5 // pred_region
        %s5732 = ssub.s32 %s12, 2
        // Predicated region
        $region41: #{tpu_custom_call.1} parent=39 // pred_check
          %p5733 = pneg %p123
        $region42: #{tpu_custom_call.1} parent=39 // pred_check_branch
          %5735 = sbr.rel (%p5733) target = $region44
        $region43: #{tpu_custom_call.1} parent=39 // pred_region
          %s5736 = sand.u32 %s108, 1
          %s5737 = scalar_lea.sflag [#allocation4], %s5736
          %s5738 = sand.u32 %s108, 1
          %s5739 = smul.addr %s5738, 256
          %s5740 = scalar_lea.vmem [#allocation3], %s5739
          %5741 = dma.done %s5737, 4096
        $region44: #{tpu_custom_call.1} parent=39 // pred_fallthru
          _
      $region40: #{tpu_custom_call.1} parent=5 // pred_fallthru
        _
    $region6: #{tpu_custom_call.1} parent=1 // loop_footer
      %s16 = sadd.s32 1, %s12
    $region7: #{tpu_custom_call.1} parent=1 // loop_footer_branch
      %11 = sbr.rel target = $region3
    $region8: #{tpu_custom_call.1} parent=1 // loop_exit
      _
    %5742 = vsyncpa [#allocation4], 1
    %s5743 = scalar_lea.sflag [#allocation4], 1
    %5744 = vsyncpa %s5743, 1

</llo_original>
